<compile_context>
chip_gen: v6e
topology: v6e:2x2x1
jax: 0.10.0
libtpu: 0.0.40
codegen_flags: <defaults>
</compile_context>

<pallas_src>
import functools

import jax
import jax.numpy as jnp
from jax.experimental import pallas as pl
from jax.experimental.pallas import tpu as pltpu


def _make_kernel(c_in, c_out, lp, n_blk):
    """Fused conv1+ReLU -> conv2+ReLU -> maxpool(2), all in vregs."""

    def kernel(w1_ref, b1_ref, w2_ref, b2_ref, x_ref, o_ref):
        # Boundary masks implementing zero "same" padding for k=3, pad=1.
        lane = jax.lax.broadcasted_iota(jnp.int32, (n_blk, lp), 1)
        not_first = lane > 0          # zero lane 0 after a +1 roll
        not_last = lane < (lp - 1)    # zero lane lp-1 after a -1 roll

        def shifted(e, o):
            # o[j-1] with zero left-pad; e[j+1] with zero right-pad (XLU rolls).
            om1 = jnp.where(not_first, pltpu.roll(o, shift=1, axis=1), 0.0)
            ep1 = jnp.where(not_last, pltpu.roll(e, shift=lp - 1, axis=1), 0.0)
            return om1, ep1

        def conv_taps(acc_e, acc_o, slabs, wk0, wk1, wk2):
            e, o, om1, ep1 = slabs
            # even outputs: y[2j]   = w0*x[2j-1] + w1*x[2j]   + w2*x[2j+1]
            # odd  outputs: y[2j+1] = w0*x[2j]   + w1*x[2j+1] + w2*x[2j+2]
            acc_e = acc_e + wk0 * om1 + wk1 * e + wk2 * o
            acc_o = acc_o + wk0 * e + wk1 * o + wk2 * ep1
            return acc_e, acc_o

        # ------------------------ load input slabs --------------------------
        slabs1 = []
        for ci in range(c_in):
            base = ci * 2 * lp
            e = x_ref[:, base:base + lp]              # x[.., 2j]
            o = x_ref[:, base + lp:base + 2 * lp]     # x[.., 2j+1]
            om1, ep1 = shifted(e, o)
            slabs1.append((e, o, om1, ep1))

        # ------------------------ conv1 + ReLU (vregs) ----------------------
        y1 = []
        for co in range(c_out):
            acc_e = jnp.full((n_blk, lp), b1_ref[co], jnp.float32)
            acc_o = jnp.full((n_blk, lp), b1_ref[co], jnp.float32)
            for ci in range(c_in):
                base = (co * c_in + ci) * 3
                acc_e, acc_o = conv_taps(acc_e, acc_o, slabs1[ci],
                                         w1_ref[base], w1_ref[base + 1],
                                         w1_ref[base + 2])
            y1.append((jnp.maximum(acc_e, 0.0), jnp.maximum(acc_o, 0.0)))

        # Build conv2 input slabs from the live ReLU results (no VMEM trip).
        slabs2 = [(e, o, *shifted(e, o)) for (e, o) in y1]

        # ----------------- conv2 + ReLU + MaxPool1d(2) ----------------------
        for co in range(c_out):
            acc_e = jnp.full((n_blk, lp), b2_ref[co], jnp.float32)
            acc_o = jnp.full((n_blk, lp), b2_ref[co], jnp.float32)
            for ci in range(c_out):
                base = (co * c_out + ci) * 3
                acc_e, acc_o = conv_taps(acc_e, acc_o, slabs2[ci],
                                         w2_ref[base], w2_ref[base + 1],
                                         w2_ref[base + 2])
            y_e = jnp.maximum(acc_e, 0.0)
            y_o = jnp.maximum(acc_o, 0.0)
            # MaxPool1d(kernel=2, stride=2): pairs are exactly (even, odd).
            o_ref[:, co * lp:(co + 1) * lp] = jnp.maximum(y_e, y_o)

    return kernel


# ----------------------------- pure-JAX reference ----------------------------
def _conv1d_same3(x, w, b):
    L = x.shape[-1]
    xp = jnp.pad(x, ((0, 0), (0, 0), (1, 1)))
    y = (jnp.einsum('oc,bcl->bol', w[:, :, 0], xp[:, :, 0:L]) +
         jnp.einsum('oc,bcl->bol', w[:, :, 1], xp[:, :, 1:L + 1]) +
         jnp.einsum('oc,bcl->bol', w[:, :, 2], xp[:, :, 2:L + 2]))
    return y + b[None, :, None]


def _reference(x, w1, b1, w2, b2):
    y = jax.nn.relu(_conv1d_same3(x, w1, b1))
    y = jax.nn.relu(_conv1d_same3(y, w2, b2))
    B, C, L = y.shape
    return y.reshape(B, C, L // 2, 2).max(axis=-1)   # max_pool1d(kernel=2)


# --------------------------------- wrapper -----------------------------------
@functools.partial(jax.jit, static_argnames=("n_blk", "flatten"))
def cnn1d_double_maxpool(x, w1, b1, w2, b2, *, n_blk=8, flatten=False):
    """Forward of CNN1DDoubleMaxpool with cnn_kernel_size=3 ('same' pad=1),
    maxpool_kernel_size=2, batch_norm=False, dropout acting as identity (eval).

    x: (B, C_in, L) f32; w1: (C_out, C_in, 3); w2: (C_out, C_out, 3).
    Returns (B, C_out, L//2)  (or (B, C_out*L//2) if flatten).
    """
    B, c_in, L = x.shape
    c_out, _, k = w1.shape

    # TODO(synk): BatchNorm1d branch (batch_norm=True) and training-mode
    # nn.Dropout are not implemented; module defaults (batch_norm=False,
    # dropout == identity in eval) apply.
    if k != 3 or L % 256 != 0 or c_in > 8 or c_out > 8:
        # Shapes outside the lane-dense fast path: plain XLA fallback.
        out = _reference(x, w1, b1, w2, b2)
        return out.reshape(B, -1) if flatten else out

    lp = L // 2

    # Pad batch to a multiple of the per-block batch (cheap; fused under jit).
    Bp = ((B + n_blk - 1) // n_blk) * n_blk
    xb = x if Bp == B else jnp.pad(x, ((0, Bp - B), (0, 0), (0, 0)))

    # De-interleave even/odd spatial positions into lane-dense slabs.  Marked
    # fusible into the pallas_call operand (allow_input_fusion) so it is not a
    # separate HBM round-trip / dispatch.
    x_d = xb.reshape(Bp, c_in, lp, 2).transpose(0, 1, 3, 2).reshape(
        Bp, c_in * 2 * lp)

    kernel = _make_kernel(c_in, c_out, lp, n_blk)
    out2d = pl.pallas_call(
        kernel,
        out_shape=jax.ShapeDtypeStruct((Bp, c_out * lp), jnp.float32),
        grid=(Bp // n_blk,),
        in_specs=[
            pl.BlockSpec(memory_space=pltpu.MemorySpace.SMEM),  # w1 flat (96 f32)
            pl.BlockSpec(memory_space=pltpu.MemorySpace.SMEM),  # b1
            pl.BlockSpec(memory_space=pltpu.MemorySpace.SMEM),  # w2 flat (192 f32)
            pl.BlockSpec(memory_space=pltpu.MemorySpace.SMEM),  # b2
            pl.BlockSpec((n_blk, c_in * 2 * lp), lambda n: (n, 0)),
        ],
        out_specs=pl.BlockSpec((n_blk, c_out * lp), lambda n: (n, 0)),
        compiler_params=pltpu.CompilerParams(
            # One block per TensorCore on v7x; cheap serial loop on v5e/v6e.
            dimension_semantics=("parallel",),
            vmem_limit_bytes=2 * 1024 * 1024,   # true footprint < 0.5 MiB
            allow_input_fusion=[False, False, False, False, True]),
    )(w1.reshape(-1), b1, w2.reshape(-1), b2, x_d)

    out = out2d[:B].reshape(B, c_out, lp)
    if flatten:
        out = out.reshape(B, c_out * lp)
    return out


if __name__ == "__main__":
    batch, input_channel, l_input, output_channel = 16, 4, 256, 8

    key = jax.random.PRNGKey(0)
    kx, kw1, kb1, kw2, kb2 = jax.random.split(key, 5)
    x = jax.random.normal(kx, (batch, input_channel, l_input), dtype=jnp.float32)
    w1 = jax.random.normal(kw1, (output_channel, input_channel, 3),
                           dtype=jnp.float32) * 0.2
    b1 = jax.random.normal(kb1, (output_channel,), dtype=jnp.float32) * 0.1
    w2 = jax.random.normal(kw2, (output_channel, output_channel, 3),
                           dtype=jnp.float32) * 0.2
    b2 = jax.random.normal(kb2, (output_channel,), dtype=jnp.float32) * 0.1

    out = jax.block_until_ready(cnn1d_double_maxpool(x, w1, b1, w2, b2))
    ref = jax.block_until_ready(_reference(x, w1, b1, w2, b2))

    assert out.shape == (batch, output_channel, l_input // 2), out.shape
    assert jnp.allclose(out, ref, rtol=1e-4, atol=1e-4), float(
        jnp.max(jnp.abs(out - ref)))

    print("KERNEL_OK")
</pallas_src>

<mosaic_0001>
module attributes {stable_mosaic.version = 11 : i64} {
  func.func @kernel(%arg0: i32, %arg1: memref<96xf32, #tpu.memory_space<smem>>, %arg2: memref<8xf32, #tpu.memory_space<smem>>, %arg3: memref<192xf32, #tpu.memory_space<smem>>, %arg4: memref<8xf32, #tpu.memory_space<smem>>, %arg5: memref<8x1024xf32, #tpu.memory_space<vmem>>, %arg6: memref<8x1024xf32, #tpu.memory_space<vmem>>) attributes {dimension_semantics = [#tpu.dimension_semantics<parallel>], iteration_bounds = array<i64: 2>, scalar_prefetch = 0 : i64, scratch_operands = 0 : i64, tpu.core_type = #tpu.core_type<tc>, window_params = [{transform_indices = @transform_0, window_bounds = array<i64: 96>}, {transform_indices = @transform_1, window_bounds = array<i64: 8>}, {transform_indices = @transform_2, window_bounds = array<i64: 192>}, {transform_indices = @transform_3, window_bounds = array<i64: 8>}, {transform_indices = @transform_4, window_bounds = array<i64: 8, 1024>}, {transform_indices = @transform_5, window_bounds = array<i64: 8, 1024>}]} {
    %0 = tpu.iota {dimensions = array<i32: 1>} : vector<8x128xi32>
    %c0_i32 = arith.constant 0 : i32
    %1 = vector.broadcast %c0_i32 : i32 to vector<8x128xi32>
    %2 = arith.cmpi sgt, %0, %1 : vector<8x128xi32>
    %c127_i32 = arith.constant 127 : i32
    %3 = vector.broadcast %c127_i32 : i32 to vector<8x128xi32>
    %4 = arith.cmpi slt, %0, %3 : vector<8x128xi32>
    %c0 = arith.constant 0 : index
    %c0_0 = arith.constant 0 : index
    %5 = vector.load %arg5[%c0, %c0_0] : memref<8x1024xf32, #tpu.memory_space<vmem>>, vector<8x128xf32>
    %c0_1 = arith.constant 0 : index
    %c128 = arith.constant 128 : index
    %6 = vector.load %arg5[%c0_1, %c128] : memref<8x1024xf32, #tpu.memory_space<vmem>>, vector<8x128xf32>
    %c1_i32 = arith.constant 1 : i32
    %7 = tpu.dynamic_rotate %6 by %c1_i32 dim 1 : vector<8x128xf32>, i32 -> vector<8x128xf32>
    %cst = arith.constant 0.000000e+00 : f32
    %8 = vector.broadcast %cst : f32 to vector<8x128xf32>
    %9 = arith.select %2, %7, %8 : vector<8x128xi1>, vector<8x128xf32>
    %c127_i32_2 = arith.constant 127 : i32
    %10 = tpu.dynamic_rotate %5 by %c127_i32_2 dim 1 : vector<8x128xf32>, i32 -> vector<8x128xf32>
    %cst_3 = arith.constant 0.000000e+00 : f32
    %11 = vector.broadcast %cst_3 : f32 to vector<8x128xf32>
    %12 = arith.select %4, %10, %11 : vector<8x128xi1>, vector<8x128xf32>
    %c0_4 = arith.constant 0 : index
    %c256 = arith.constant 256 : index
    %13 = vector.load %arg5[%c0_4, %c256] : memref<8x1024xf32, #tpu.memory_space<vmem>>, vector<8x128xf32>
    %c0_5 = arith.constant 0 : index
    %c384 = arith.constant 384 : index
    %14 = vector.load %arg5[%c0_5, %c384] : memref<8x1024xf32, #tpu.memory_space<vmem>>, vector<8x128xf32>
    %c1_i32_6 = arith.constant 1 : i32
    %15 = tpu.dynamic_rotate %14 by %c1_i32_6 dim 1 : vector<8x128xf32>, i32 -> vector<8x128xf32>
    %cst_7 = arith.constant 0.000000e+00 : f32
    %16 = vector.broadcast %cst_7 : f32 to vector<8x128xf32>
    %17 = arith.select %2, %15, %16 : vector<8x128xi1>, vector<8x128xf32>
    %c127_i32_8 = arith.constant 127 : i32
    %18 = tpu.dynamic_rotate %13 by %c127_i32_8 dim 1 : vector<8x128xf32>, i32 -> vector<8x128xf32>
    %cst_9 = arith.constant 0.000000e+00 : f32
    %19 = vector.broadcast %cst_9 : f32 to vector<8x128xf32>
    %20 = arith.select %4, %18, %19 : vector<8x128xi1>, vector<8x128xf32>
    %c0_10 = arith.constant 0 : index
    %c512 = arith.constant 512 : index
    %21 = vector.load %arg5[%c0_10, %c512] : memref<8x1024xf32, #tpu.memory_space<vmem>>, vector<8x128xf32>
    %c0_11 = arith.constant 0 : index
    %c640 = arith.constant 640 : index
    %22 = vector.load %arg5[%c0_11, %c640] : memref<8x1024xf32, #tpu.memory_space<vmem>>, vector<8x128xf32>
    %c1_i32_12 = arith.constant 1 : i32
    %23 = tpu.dynamic_rotate %22 by %c1_i32_12 dim 1 : vector<8x128xf32>, i32 -> vector<8x128xf32>
    %cst_13 = arith.constant 0.000000e+00 : f32
    %24 = vector.broadcast %cst_13 : f32 to vector<8x128xf32>
    %25 = arith.select %2, %23, %24 : vector<8x128xi1>, vector<8x128xf32>
    %c127_i32_14 = arith.constant 127 : i32
    %26 = tpu.dynamic_rotate %21 by %c127_i32_14 dim 1 : vector<8x128xf32>, i32 -> vector<8x128xf32>
    %cst_15 = arith.constant 0.000000e+00 : f32
    %27 = vector.broadcast %cst_15 : f32 to vector<8x128xf32>
    %28 = arith.select %4, %26, %27 : vector<8x128xi1>, vector<8x128xf32>
    %c0_16 = arith.constant 0 : index
    %c768 = arith.constant 768 : index
    %29 = vector.load %arg5[%c0_16, %c768] : memref<8x1024xf32, #tpu.memory_space<vmem>>, vector<8x128xf32>
    %c0_17 = arith.constant 0 : index
    %c896 = arith.constant 896 : index
    %30 = vector.load %arg5[%c0_17, %c896] : memref<8x1024xf32, #tpu.memory_space<vmem>>, vector<8x128xf32>
    %c1_i32_18 = arith.constant 1 : i32
    %31 = tpu.dynamic_rotate %30 by %c1_i32_18 dim 1 : vector<8x128xf32>, i32 -> vector<8x128xf32>
    %cst_19 = arith.constant 0.000000e+00 : f32
    %32 = vector.broadcast %cst_19 : f32 to vector<8x128xf32>
    %33 = arith.select %2, %31, %32 : vector<8x128xi1>, vector<8x128xf32>
    %c127_i32_20 = arith.constant 127 : i32
    %34 = tpu.dynamic_rotate %29 by %c127_i32_20 dim 1 : vector<8x128xf32>, i32 -> vector<8x128xf32>
    %cst_21 = arith.constant 0.000000e+00 : f32
    %35 = vector.broadcast %cst_21 : f32 to vector<8x128xf32>
    %36 = arith.select %4, %34, %35 : vector<8x128xi1>, vector<8x128xf32>
    %c0_22 = arith.constant 0 : index
    %37 = memref.load %arg2[%c0_22] : memref<8xf32, #tpu.memory_space<smem>>
    %38 = vector.broadcast %37 : f32 to vector<8x128xf32>
    %c0_23 = arith.constant 0 : index
    %39 = memref.load %arg2[%c0_23] : memref<8xf32, #tpu.memory_space<smem>>
    %40 = vector.broadcast %39 : f32 to vector<8x128xf32>
    %c0_24 = arith.constant 0 : index
    %41 = memref.load %arg1[%c0_24] : memref<96xf32, #tpu.memory_space<smem>>
    %c1 = arith.constant 1 : index
    %42 = memref.load %arg1[%c1] : memref<96xf32, #tpu.memory_space<smem>>
    %c2 = arith.constant 2 : index
    %43 = memref.load %arg1[%c2] : memref<96xf32, #tpu.memory_space<smem>>
    %44 = vector.broadcast %41 : f32 to vector<8x128xf32>
    %45 = arith.mulf %44, %9 : vector<8x128xf32>
    %46 = arith.addf %38, %45 : vector<8x128xf32>
    %47 = vector.broadcast %42 : f32 to vector<8x128xf32>
    %48 = arith.mulf %47, %5 : vector<8x128xf32>
    %49 = arith.addf %46, %48 : vector<8x128xf32>
    %50 = vector.broadcast %43 : f32 to vector<8x128xf32>
    %51 = arith.mulf %50, %6 : vector<8x128xf32>
    %52 = arith.addf %49, %51 : vector<8x128xf32>
    %53 = vector.broadcast %41 : f32 to vector<8x128xf32>
    %54 = arith.mulf %53, %5 : vector<8x128xf32>
    %55 = arith.addf %40, %54 : vector<8x128xf32>
    %56 = vector.broadcast %42 : f32 to vector<8x128xf32>
    %57 = arith.mulf %56, %6 : vector<8x128xf32>
    %58 = arith.addf %55, %57 : vector<8x128xf32>
    %59 = vector.broadcast %43 : f32 to vector<8x128xf32>
    %60 = arith.mulf %59, %12 : vector<8x128xf32>
    %61 = arith.addf %58, %60 : vector<8x128xf32>
    %c3 = arith.constant 3 : index
    %62 = memref.load %arg1[%c3] : memref<96xf32, #tpu.memory_space<smem>>
    %c4 = arith.constant 4 : index
    %63 = memref.load %arg1[%c4] : memref<96xf32, #tpu.memory_space<smem>>
    %c5 = arith.constant 5 : index
    %64 = memref.load %arg1[%c5] : memref<96xf32, #tpu.memory_space<smem>>
    %65 = vector.broadcast %62 : f32 to vector<8x128xf32>
    %66 = arith.mulf %65, %17 : vector<8x128xf32>
    %67 = arith.addf %52, %66 : vector<8x128xf32>
    %68 = vector.broadcast %63 : f32 to vector<8x128xf32>
    %69 = arith.mulf %68, %13 : vector<8x128xf32>
    %70 = arith.addf %67, %69 : vector<8x128xf32>
    %71 = vector.broadcast %64 : f32 to vector<8x128xf32>
    %72 = arith.mulf %71, %14 : vector<8x128xf32>
    %73 = arith.addf %70, %72 : vector<8x128xf32>
    %74 = vector.broadcast %62 : f32 to vector<8x128xf32>
    %75 = arith.mulf %74, %13 : vector<8x128xf32>
    %76 = arith.addf %61, %75 : vector<8x128xf32>
    %77 = vector.broadcast %63 : f32 to vector<8x128xf32>
    %78 = arith.mulf %77, %14 : vector<8x128xf32>
    %79 = arith.addf %76, %78 : vector<8x128xf32>
    %80 = vector.broadcast %64 : f32 to vector<8x128xf32>
    %81 = arith.mulf %80, %20 : vector<8x128xf32>
    %82 = arith.addf %79, %81 : vector<8x128xf32>
    %c6 = arith.constant 6 : index
    %83 = memref.load %arg1[%c6] : memref<96xf32, #tpu.memory_space<smem>>
    %c7 = arith.constant 7 : index
    %84 = memref.load %arg1[%c7] : memref<96xf32, #tpu.memory_space<smem>>
    %c8 = arith.constant 8 : index
    %85 = memref.load %arg1[%c8] : memref<96xf32, #tpu.memory_space<smem>>
    %86 = vector.broadcast %83 : f32 to vector<8x128xf32>
    %87 = arith.mulf %86, %25 : vector<8x128xf32>
    %88 = arith.addf %73, %87 : vector<8x128xf32>
    %89 = vector.broadcast %84 : f32 to vector<8x128xf32>
    %90 = arith.mulf %89, %21 : vector<8x128xf32>
    %91 = arith.addf %88, %90 : vector<8x128xf32>
    %92 = vector.broadcast %85 : f32 to vector<8x128xf32>
    %93 = arith.mulf %92, %22 : vector<8x128xf32>
    %94 = arith.addf %91, %93 : vector<8x128xf32>
    %95 = vector.broadcast %83 : f32 to vector<8x128xf32>
    %96 = arith.mulf %95, %21 : vector<8x128xf32>
    %97 = arith.addf %82, %96 : vector<8x128xf32>
    %98 = vector.broadcast %84 : f32 to vector<8x128xf32>
    %99 = arith.mulf %98, %22 : vector<8x128xf32>
    %100 = arith.addf %97, %99 : vector<8x128xf32>
    %101 = vector.broadcast %85 : f32 to vector<8x128xf32>
    %102 = arith.mulf %101, %28 : vector<8x128xf32>
    %103 = arith.addf %100, %102 : vector<8x128xf32>
    %c9 = arith.constant 9 : index
    %104 = memref.load %arg1[%c9] : memref<96xf32, #tpu.memory_space<smem>>
    %c10 = arith.constant 10 : index
    %105 = memref.load %arg1[%c10] : memref<96xf32, #tpu.memory_space<smem>>
    %c11 = arith.constant 11 : index
    %106 = memref.load %arg1[%c11] : memref<96xf32, #tpu.memory_space<smem>>
    %107 = vector.broadcast %104 : f32 to vector<8x128xf32>
    %108 = arith.mulf %107, %33 : vector<8x128xf32>
    %109 = arith.addf %94, %108 : vector<8x128xf32>
    %110 = vector.broadcast %105 : f32 to vector<8x128xf32>
    %111 = arith.mulf %110, %29 : vector<8x128xf32>
    %112 = arith.addf %109, %111 : vector<8x128xf32>
    %113 = vector.broadcast %106 : f32 to vector<8x128xf32>
    %114 = arith.mulf %113, %30 : vector<8x128xf32>
    %115 = arith.addf %112, %114 : vector<8x128xf32>
    %116 = vector.broadcast %104 : f32 to vector<8x128xf32>
    %117 = arith.mulf %116, %29 : vector<8x128xf32>
    %118 = arith.addf %103, %117 : vector<8x128xf32>
    %119 = vector.broadcast %105 : f32 to vector<8x128xf32>
    %120 = arith.mulf %119, %30 : vector<8x128xf32>
    %121 = arith.addf %118, %120 : vector<8x128xf32>
    %122 = vector.broadcast %106 : f32 to vector<8x128xf32>
    %123 = arith.mulf %122, %36 : vector<8x128xf32>
    %124 = arith.addf %121, %123 : vector<8x128xf32>
    %cst_25 = arith.constant 0.000000e+00 : f32
    %125 = vector.broadcast %cst_25 : f32 to vector<8x128xf32>
    %126 = arith.maximumf %115, %125 : vector<8x128xf32>
    %cst_26 = arith.constant 0.000000e+00 : f32
    %127 = vector.broadcast %cst_26 : f32 to vector<8x128xf32>
    %128 = arith.maximumf %124, %127 : vector<8x128xf32>
    %c1_27 = arith.constant 1 : index
    %129 = memref.load %arg2[%c1_27] : memref<8xf32, #tpu.memory_space<smem>>
    %130 = vector.broadcast %129 : f32 to vector<8x128xf32>
    %c1_28 = arith.constant 1 : index
    %131 = memref.load %arg2[%c1_28] : memref<8xf32, #tpu.memory_space<smem>>
    %132 = vector.broadcast %131 : f32 to vector<8x128xf32>
    %c12 = arith.constant 12 : index
    %133 = memref.load %arg1[%c12] : memref<96xf32, #tpu.memory_space<smem>>
    %c13 = arith.constant 13 : index
    %134 = memref.load %arg1[%c13] : memref<96xf32, #tpu.memory_space<smem>>
    %c14 = arith.constant 14 : index
    %135 = memref.load %arg1[%c14] : memref<96xf32, #tpu.memory_space<smem>>
    %136 = vector.broadcast %133 : f32 to vector<8x128xf32>
    %137 = arith.mulf %136, %9 : vector<8x128xf32>
    %138 = arith.addf %130, %137 : vector<8x128xf32>
    %139 = vector.broadcast %134 : f32 to vector<8x128xf32>
    %140 = arith.mulf %139, %5 : vector<8x128xf32>
    %141 = arith.addf %138, %140 : vector<8x128xf32>
    %142 = vector.broadcast %135 : f32 to vector<8x128xf32>
    %143 = arith.mulf %142, %6 : vector<8x128xf32>
    %144 = arith.addf %141, %143 : vector<8x128xf32>
    %145 = vector.broadcast %133 : f32 to vector<8x128xf32>
    %146 = arith.mulf %145, %5 : vector<8x128xf32>
    %147 = arith.addf %132, %146 : vector<8x128xf32>
    %148 = vector.broadcast %134 : f32 to vector<8x128xf32>
    %149 = arith.mulf %148, %6 : vector<8x128xf32>
    %150 = arith.addf %147, %149 : vector<8x128xf32>
    %151 = vector.broadcast %135 : f32 to vector<8x128xf32>
    %152 = arith.mulf %151, %12 : vector<8x128xf32>
    %153 = arith.addf %150, %152 : vector<8x128xf32>
    %c15 = arith.constant 15 : index
    %154 = memref.load %arg1[%c15] : memref<96xf32, #tpu.memory_space<smem>>
    %c16 = arith.constant 16 : index
    %155 = memref.load %arg1[%c16] : memref<96xf32, #tpu.memory_space<smem>>
    %c17 = arith.constant 17 : index
    %156 = memref.load %arg1[%c17] : memref<96xf32, #tpu.memory_space<smem>>
    %157 = vector.broadcast %154 : f32 to vector<8x128xf32>
    %158 = arith.mulf %157, %17 : vector<8x128xf32>
    %159 = arith.addf %144, %158 : vector<8x128xf32>
    %160 = vector.broadcast %155 : f32 to vector<8x128xf32>
    %161 = arith.mulf %160, %13 : vector<8x128xf32>
    %162 = arith.addf %159, %161 : vector<8x128xf32>
    %163 = vector.broadcast %156 : f32 to vector<8x128xf32>
    %164 = arith.mulf %163, %14 : vector<8x128xf32>
    %165 = arith.addf %162, %164 : vector<8x128xf32>
    %166 = vector.broadcast %154 : f32 to vector<8x128xf32>
    %167 = arith.mulf %166, %13 : vector<8x128xf32>
    %168 = arith.addf %153, %167 : vector<8x128xf32>
    %169 = vector.broadcast %155 : f32 to vector<8x128xf32>
    %170 = arith.mulf %169, %14 : vector<8x128xf32>
    %171 = arith.addf %168, %170 : vector<8x128xf32>
    %172 = vector.broadcast %156 : f32 to vector<8x128xf32>
    %173 = arith.mulf %172, %20 : vector<8x128xf32>
    %174 = arith.addf %171, %173 : vector<8x128xf32>
    %c18 = arith.constant 18 : index
    %175 = memref.load %arg1[%c18] : memref<96xf32, #tpu.memory_space<smem>>
    %c19 = arith.constant 19 : index
    %176 = memref.load %arg1[%c19] : memref<96xf32, #tpu.memory_space<smem>>
    %c20 = arith.constant 20 : index
    %177 = memref.load %arg1[%c20] : memref<96xf32, #tpu.memory_space<smem>>
    %178 = vector.broadcast %175 : f32 to vector<8x128xf32>
    %179 = arith.mulf %178, %25 : vector<8x128xf32>
    %180 = arith.addf %165, %179 : vector<8x128xf32>
    %181 = vector.broadcast %176 : f32 to vector<8x128xf32>
    %182 = arith.mulf %181, %21 : vector<8x128xf32>
    %183 = arith.addf %180, %182 : vector<8x128xf32>
    %184 = vector.broadcast %177 : f32 to vector<8x128xf32>
    %185 = arith.mulf %184, %22 : vector<8x128xf32>
    %186 = arith.addf %183, %185 : vector<8x128xf32>
    %187 = vector.broadcast %175 : f32 to vector<8x128xf32>
    %188 = arith.mulf %187, %21 : vector<8x128xf32>
    %189 = arith.addf %174, %188 : vector<8x128xf32>
    %190 = vector.broadcast %176 : f32 to vector<8x128xf32>
    %191 = arith.mulf %190, %22 : vector<8x128xf32>
    %192 = arith.addf %189, %191 : vector<8x128xf32>
    %193 = vector.broadcast %177 : f32 to vector<8x128xf32>
    %194 = arith.mulf %193, %28 : vector<8x128xf32>
    %195 = arith.addf %192, %194 : vector<8x128xf32>
    %c21 = arith.constant 21 : index
    %196 = memref.load %arg1[%c21] : memref<96xf32, #tpu.memory_space<smem>>
    %c22 = arith.constant 22 : index
    %197 = memref.load %arg1[%c22] : memref<96xf32, #tpu.memory_space<smem>>
    %c23 = arith.constant 23 : index
    %198 = memref.load %arg1[%c23] : memref<96xf32, #tpu.memory_space<smem>>
    %199 = vector.broadcast %196 : f32 to vector<8x128xf32>
    %200 = arith.mulf %199, %33 : vector<8x128xf32>
    %201 = arith.addf %186, %200 : vector<8x128xf32>
    %202 = vector.broadcast %197 : f32 to vector<8x128xf32>
    %203 = arith.mulf %202, %29 : vector<8x128xf32>
    %204 = arith.addf %201, %203 : vector<8x128xf32>
    %205 = vector.broadcast %198 : f32 to vector<8x128xf32>
    %206 = arith.mulf %205, %30 : vector<8x128xf32>
    %207 = arith.addf %204, %206 : vector<8x128xf32>
    %208 = vector.broadcast %196 : f32 to vector<8x128xf32>
    %209 = arith.mulf %208, %29 : vector<8x128xf32>
    %210 = arith.addf %195, %209 : vector<8x128xf32>
    %211 = vector.broadcast %197 : f32 to vector<8x128xf32>
    %212 = arith.mulf %211, %30 : vector<8x128xf32>
    %213 = arith.addf %210, %212 : vector<8x128xf32>
    %214 = vector.broadcast %198 : f32 to vector<8x128xf32>
    %215 = arith.mulf %214, %36 : vector<8x128xf32>
    %216 = arith.addf %213, %215 : vector<8x128xf32>
    %cst_29 = arith.constant 0.000000e+00 : f32
    %217 = vector.broadcast %cst_29 : f32 to vector<8x128xf32>
    %218 = arith.maximumf %207, %217 : vector<8x128xf32>
    %cst_30 = arith.constant 0.000000e+00 : f32
    %219 = vector.broadcast %cst_30 : f32 to vector<8x128xf32>
    %220 = arith.maximumf %216, %219 : vector<8x128xf32>
    %c2_31 = arith.constant 2 : index
    %221 = memref.load %arg2[%c2_31] : memref<8xf32, #tpu.memory_space<smem>>
    %222 = vector.broadcast %221 : f32 to vector<8x128xf32>
    %c2_32 = arith.constant 2 : index
    %223 = memref.load %arg2[%c2_32] : memref<8xf32, #tpu.memory_space<smem>>
    %224 = vector.broadcast %223 : f32 to vector<8x128xf32>
    %c24 = arith.constant 24 : index
    %225 = memref.load %arg1[%c24] : memref<96xf32, #tpu.memory_space<smem>>
    %c25 = arith.constant 25 : index
    %226 = memref.load %arg1[%c25] : memref<96xf32, #tpu.memory_space<smem>>
    %c26 = arith.constant 26 : index
    %227 = memref.load %arg1[%c26] : memref<96xf32, #tpu.memory_space<smem>>
    %228 = vector.broadcast %225 : f32 to vector<8x128xf32>
    %229 = arith.mulf %228, %9 : vector<8x128xf32>
    %230 = arith.addf %222, %229 : vector<8x128xf32>
    %231 = vector.broadcast %226 : f32 to vector<8x128xf32>
    %232 = arith.mulf %231, %5 : vector<8x128xf32>
    %233 = arith.addf %230, %232 : vector<8x128xf32>
    %234 = vector.broadcast %227 : f32 to vector<8x128xf32>
    %235 = arith.mulf %234, %6 : vector<8x128xf32>
    %236 = arith.addf %233, %235 : vector<8x128xf32>
    %237 = vector.broadcast %225 : f32 to vector<8x128xf32>
    %238 = arith.mulf %237, %5 : vector<8x128xf32>
    %239 = arith.addf %224, %238 : vector<8x128xf32>
    %240 = vector.broadcast %226 : f32 to vector<8x128xf32>
    %241 = arith.mulf %240, %6 : vector<8x128xf32>
    %242 = arith.addf %239, %241 : vector<8x128xf32>
    %243 = vector.broadcast %227 : f32 to vector<8x128xf32>
    %244 = arith.mulf %243, %12 : vector<8x128xf32>
    %245 = arith.addf %242, %244 : vector<8x128xf32>
    %c27 = arith.constant 27 : index
    %246 = memref.load %arg1[%c27] : memref<96xf32, #tpu.memory_space<smem>>
    %c28 = arith.constant 28 : index
    %247 = memref.load %arg1[%c28] : memref<96xf32, #tpu.memory_space<smem>>
    %c29 = arith.constant 29 : index
    %248 = memref.load %arg1[%c29] : memref<96xf32, #tpu.memory_space<smem>>
    %249 = vector.broadcast %246 : f32 to vector<8x128xf32>
    %250 = arith.mulf %249, %17 : vector<8x128xf32>
    %251 = arith.addf %236, %250 : vector<8x128xf32>
    %252 = vector.broadcast %247 : f32 to vector<8x128xf32>
    %253 = arith.mulf %252, %13 : vector<8x128xf32>
    %254 = arith.addf %251, %253 : vector<8x128xf32>
    %255 = vector.broadcast %248 : f32 to vector<8x128xf32>
    %256 = arith.mulf %255, %14 : vector<8x128xf32>
    %257 = arith.addf %254, %256 : vector<8x128xf32>
    %258 = vector.broadcast %246 : f32 to vector<8x128xf32>
    %259 = arith.mulf %258, %13 : vector<8x128xf32>
    %260 = arith.addf %245, %259 : vector<8x128xf32>
    %261 = vector.broadcast %247 : f32 to vector<8x128xf32>
    %262 = arith.mulf %261, %14 : vector<8x128xf32>
    %263 = arith.addf %260, %262 : vector<8x128xf32>
    %264 = vector.broadcast %248 : f32 to vector<8x128xf32>
    %265 = arith.mulf %264, %20 : vector<8x128xf32>
    %266 = arith.addf %263, %265 : vector<8x128xf32>
    %c30 = arith.constant 30 : index
    %267 = memref.load %arg1[%c30] : memref<96xf32, #tpu.memory_space<smem>>
    %c31 = arith.constant 31 : index
    %268 = memref.load %arg1[%c31] : memref<96xf32, #tpu.memory_space<smem>>
    %c32 = arith.constant 32 : index
    %269 = memref.load %arg1[%c32] : memref<96xf32, #tpu.memory_space<smem>>
    %270 = vector.broadcast %267 : f32 to vector<8x128xf32>
    %271 = arith.mulf %270, %25 : vector<8x128xf32>
    %272 = arith.addf %257, %271 : vector<8x128xf32>
    %273 = vector.broadcast %268 : f32 to vector<8x128xf32>
    %274 = arith.mulf %273, %21 : vector<8x128xf32>
    %275 = arith.addf %272, %274 : vector<8x128xf32>
    %276 = vector.broadcast %269 : f32 to vector<8x128xf32>
    %277 = arith.mulf %276, %22 : vector<8x128xf32>
    %278 = arith.addf %275, %277 : vector<8x128xf32>
    %279 = vector.broadcast %267 : f32 to vector<8x128xf32>
    %280 = arith.mulf %279, %21 : vector<8x128xf32>
    %281 = arith.addf %266, %280 : vector<8x128xf32>
    %282 = vector.broadcast %268 : f32 to vector<8x128xf32>
    %283 = arith.mulf %282, %22 : vector<8x128xf32>
    %284 = arith.addf %281, %283 : vector<8x128xf32>
    %285 = vector.broadcast %269 : f32 to vector<8x128xf32>
    %286 = arith.mulf %285, %28 : vector<8x128xf32>
    %287 = arith.addf %284, %286 : vector<8x128xf32>
    %c33 = arith.constant 33 : index
    %288 = memref.load %arg1[%c33] : memref<96xf32, #tpu.memory_space<smem>>
    %c34 = arith.constant 34 : index
    %289 = memref.load %arg1[%c34] : memref<96xf32, #tpu.memory_space<smem>>
    %c35 = arith.constant 35 : index
    %290 = memref.load %arg1[%c35] : memref<96xf32, #tpu.memory_space<smem>>
    %291 = vector.broadcast %288 : f32 to vector<8x128xf32>
    %292 = arith.mulf %291, %33 : vector<8x128xf32>
    %293 = arith.addf %278, %292 : vector<8x128xf32>
    %294 = vector.broadcast %289 : f32 to vector<8x128xf32>
    %295 = arith.mulf %294, %29 : vector<8x128xf32>
    %296 = arith.addf %293, %295 : vector<8x128xf32>
    %297 = vector.broadcast %290 : f32 to vector<8x128xf32>
    %298 = arith.mulf %297, %30 : vector<8x128xf32>
    %299 = arith.addf %296, %298 : vector<8x128xf32>
    %300 = vector.broadcast %288 : f32 to vector<8x128xf32>
    %301 = arith.mulf %300, %29 : vector<8x128xf32>
    %302 = arith.addf %287, %301 : vector<8x128xf32>
    %303 = vector.broadcast %289 : f32 to vector<8x128xf32>
    %304 = arith.mulf %303, %30 : vector<8x128xf32>
    %305 = arith.addf %302, %304 : vector<8x128xf32>
    %306 = vector.broadcast %290 : f32 to vector<8x128xf32>
    %307 = arith.mulf %306, %36 : vector<8x128xf32>
    %308 = arith.addf %305, %307 : vector<8x128xf32>
    %cst_33 = arith.constant 0.000000e+00 : f32
    %309 = vector.broadcast %cst_33 : f32 to vector<8x128xf32>
    %310 = arith.maximumf %299, %309 : vector<8x128xf32>
    %cst_34 = arith.constant 0.000000e+00 : f32
    %311 = vector.broadcast %cst_34 : f32 to vector<8x128xf32>
    %312 = arith.maximumf %308, %311 : vector<8x128xf32>
    %c3_35 = arith.constant 3 : index
    %313 = memref.load %arg2[%c3_35] : memref<8xf32, #tpu.memory_space<smem>>
    %314 = vector.broadcast %313 : f32 to vector<8x128xf32>
    %c3_36 = arith.constant 3 : index
    %315 = memref.load %arg2[%c3_36] : memref<8xf32, #tpu.memory_space<smem>>
    %316 = vector.broadcast %315 : f32 to vector<8x128xf32>
    %c36 = arith.constant 36 : index
    %317 = memref.load %arg1[%c36] : memref<96xf32, #tpu.memory_space<smem>>
    %c37 = arith.constant 37 : index
    %318 = memref.load %arg1[%c37] : memref<96xf32, #tpu.memory_space<smem>>
    %c38 = arith.constant 38 : index
    %319 = memref.load %arg1[%c38] : memref<96xf32, #tpu.memory_space<smem>>
    %320 = vector.broadcast %317 : f32 to vector<8x128xf32>
    %321 = arith.mulf %320, %9 : vector<8x128xf32>
    %322 = arith.addf %314, %321 : vector<8x128xf32>
    %323 = vector.broadcast %318 : f32 to vector<8x128xf32>
    %324 = arith.mulf %323, %5 : vector<8x128xf32>
    %325 = arith.addf %322, %324 : vector<8x128xf32>
    %326 = vector.broadcast %319 : f32 to vector<8x128xf32>
    %327 = arith.mulf %326, %6 : vector<8x128xf32>
    %328 = arith.addf %325, %327 : vector<8x128xf32>
    %329 = vector.broadcast %317 : f32 to vector<8x128xf32>
    %330 = arith.mulf %329, %5 : vector<8x128xf32>
    %331 = arith.addf %316, %330 : vector<8x128xf32>
    %332 = vector.broadcast %318 : f32 to vector<8x128xf32>
    %333 = arith.mulf %332, %6 : vector<8x128xf32>
    %334 = arith.addf %331, %333 : vector<8x128xf32>
    %335 = vector.broadcast %319 : f32 to vector<8x128xf32>
    %336 = arith.mulf %335, %12 : vector<8x128xf32>
    %337 = arith.addf %334, %336 : vector<8x128xf32>
    %c39 = arith.constant 39 : index
    %338 = memref.load %arg1[%c39] : memref<96xf32, #tpu.memory_space<smem>>
    %c40 = arith.constant 40 : index
    %339 = memref.load %arg1[%c40] : memref<96xf32, #tpu.memory_space<smem>>
    %c41 = arith.constant 41 : index
    %340 = memref.load %arg1[%c41] : memref<96xf32, #tpu.memory_space<smem>>
    %341 = vector.broadcast %338 : f32 to vector<8x128xf32>
    %342 = arith.mulf %341, %17 : vector<8x128xf32>
    %343 = arith.addf %328, %342 : vector<8x128xf32>
    %344 = vector.broadcast %339 : f32 to vector<8x128xf32>
    %345 = arith.mulf %344, %13 : vector<8x128xf32>
    %346 = arith.addf %343, %345 : vector<8x128xf32>
    %347 = vector.broadcast %340 : f32 to vector<8x128xf32>
    %348 = arith.mulf %347, %14 : vector<8x128xf32>
    %349 = arith.addf %346, %348 : vector<8x128xf32>
    %350 = vector.broadcast %338 : f32 to vector<8x128xf32>
    %351 = arith.mulf %350, %13 : vector<8x128xf32>
    %352 = arith.addf %337, %351 : vector<8x128xf32>
    %353 = vector.broadcast %339 : f32 to vector<8x128xf32>
    %354 = arith.mulf %353, %14 : vector<8x128xf32>
    %355 = arith.addf %352, %354 : vector<8x128xf32>
    %356 = vector.broadcast %340 : f32 to vector<8x128xf32>
    %357 = arith.mulf %356, %20 : vector<8x128xf32>
    %358 = arith.addf %355, %357 : vector<8x128xf32>
    %c42 = arith.constant 42 : index
    %359 = memref.load %arg1[%c42] : memref<96xf32, #tpu.memory_space<smem>>
    %c43 = arith.constant 43 : index
    %360 = memref.load %arg1[%c43] : memref<96xf32, #tpu.memory_space<smem>>
    %c44 = arith.constant 44 : index
    %361 = memref.load %arg1[%c44] : memref<96xf32, #tpu.memory_space<smem>>
    %362 = vector.broadcast %359 : f32 to vector<8x128xf32>
    %363 = arith.mulf %362, %25 : vector<8x128xf32>
    %364 = arith.addf %349, %363 : vector<8x128xf32>
    %365 = vector.broadcast %360 : f32 to vector<8x128xf32>
    %366 = arith.mulf %365, %21 : vector<8x128xf32>
    %367 = arith.addf %364, %366 : vector<8x128xf32>
    %368 = vector.broadcast %361 : f32 to vector<8x128xf32>
    %369 = arith.mulf %368, %22 : vector<8x128xf32>
    %370 = arith.addf %367, %369 : vector<8x128xf32>
    %371 = vector.broadcast %359 : f32 to vector<8x128xf32>
    %372 = arith.mulf %371, %21 : vector<8x128xf32>
    %373 = arith.addf %358, %372 : vector<8x128xf32>
    %374 = vector.broadcast %360 : f32 to vector<8x128xf32>
    %375 = arith.mulf %374, %22 : vector<8x128xf32>
    %376 = arith.addf %373, %375 : vector<8x128xf32>
    %377 = vector.broadcast %361 : f32 to vector<8x128xf32>
    %378 = arith.mulf %377, %28 : vector<8x128xf32>
    %379 = arith.addf %376, %378 : vector<8x128xf32>
    %c45 = arith.constant 45 : index
    %380 = memref.load %arg1[%c45] : memref<96xf32, #tpu.memory_space<smem>>
    %c46 = arith.constant 46 : index
    %381 = memref.load %arg1[%c46] : memref<96xf32, #tpu.memory_space<smem>>
    %c47 = arith.constant 47 : index
    %382 = memref.load %arg1[%c47] : memref<96xf32, #tpu.memory_space<smem>>
    %383 = vector.broadcast %380 : f32 to vector<8x128xf32>
    %384 = arith.mulf %383, %33 : vector<8x128xf32>
    %385 = arith.addf %370, %384 : vector<8x128xf32>
    %386 = vector.broadcast %381 : f32 to vector<8x128xf32>
    %387 = arith.mulf %386, %29 : vector<8x128xf32>
    %388 = arith.addf %385, %387 : vector<8x128xf32>
    %389 = vector.broadcast %382 : f32 to vector<8x128xf32>
    %390 = arith.mulf %389, %30 : vector<8x128xf32>
    %391 = arith.addf %388, %390 : vector<8x128xf32>
    %392 = vector.broadcast %380 : f32 to vector<8x128xf32>
    %393 = arith.mulf %392, %29 : vector<8x128xf32>
    %394 = arith.addf %379, %393 : vector<8x128xf32>
    %395 = vector.broadcast %381 : f32 to vector<8x128xf32>
    %396 = arith.mulf %395, %30 : vector<8x128xf32>
    %397 = arith.addf %394, %396 : vector<8x128xf32>
    %398 = vector.broadcast %382 : f32 to vector<8x128xf32>
    %399 = arith.mulf %398, %36 : vector<8x128xf32>
    %400 = arith.addf %397, %399 : vector<8x128xf32>
    %cst_37 = arith.constant 0.000000e+00 : f32
    %401 = vector.broadcast %cst_37 : f32 to vector<8x128xf32>
    %402 = arith.maximumf %391, %401 : vector<8x128xf32>
    %cst_38 = arith.constant 0.000000e+00 : f32
    %403 = vector.broadcast %cst_38 : f32 to vector<8x128xf32>
    %404 = arith.maximumf %400, %403 : vector<8x128xf32>
    %c4_39 = arith.constant 4 : index
    %405 = memref.load %arg2[%c4_39] : memref<8xf32, #tpu.memory_space<smem>>
    %406 = vector.broadcast %405 : f32 to vector<8x128xf32>
    %c4_40 = arith.constant 4 : index
    %407 = memref.load %arg2[%c4_40] : memref<8xf32, #tpu.memory_space<smem>>
    %408 = vector.broadcast %407 : f32 to vector<8x128xf32>
    %c48 = arith.constant 48 : index
    %409 = memref.load %arg1[%c48] : memref<96xf32, #tpu.memory_space<smem>>
    %c49 = arith.constant 49 : index
    %410 = memref.load %arg1[%c49] : memref<96xf32, #tpu.memory_space<smem>>
    %c50 = arith.constant 50 : index
    %411 = memref.load %arg1[%c50] : memref<96xf32, #tpu.memory_space<smem>>
    %412 = vector.broadcast %409 : f32 to vector<8x128xf32>
    %413 = arith.mulf %412, %9 : vector<8x128xf32>
    %414 = arith.addf %406, %413 : vector<8x128xf32>
    %415 = vector.broadcast %410 : f32 to vector<8x128xf32>
    %416 = arith.mulf %415, %5 : vector<8x128xf32>
    %417 = arith.addf %414, %416 : vector<8x128xf32>
    %418 = vector.broadcast %411 : f32 to vector<8x128xf32>
    %419 = arith.mulf %418, %6 : vector<8x128xf32>
    %420 = arith.addf %417, %419 : vector<8x128xf32>
    %421 = vector.broadcast %409 : f32 to vector<8x128xf32>
    %422 = arith.mulf %421, %5 : vector<8x128xf32>
    %423 = arith.addf %408, %422 : vector<8x128xf32>
    %424 = vector.broadcast %410 : f32 to vector<8x128xf32>
    %425 = arith.mulf %424, %6 : vector<8x128xf32>
    %426 = arith.addf %423, %425 : vector<8x128xf32>
    %427 = vector.broadcast %411 : f32 to vector<8x128xf32>
    %428 = arith.mulf %427, %12 : vector<8x128xf32>
    %429 = arith.addf %426, %428 : vector<8x128xf32>
    %c51 = arith.constant 51 : index
    %430 = memref.load %arg1[%c51] : memref<96xf32, #tpu.memory_space<smem>>
    %c52 = arith.constant 52 : index
    %431 = memref.load %arg1[%c52] : memref<96xf32, #tpu.memory_space<smem>>
    %c53 = arith.constant 53 : index
    %432 = memref.load %arg1[%c53] : memref<96xf32, #tpu.memory_space<smem>>
    %433 = vector.broadcast %430 : f32 to vector<8x128xf32>
    %434 = arith.mulf %433, %17 : vector<8x128xf32>
    %435 = arith.addf %420, %434 : vector<8x128xf32>
    %436 = vector.broadcast %431 : f32 to vector<8x128xf32>
    %437 = arith.mulf %436, %13 : vector<8x128xf32>
    %438 = arith.addf %435, %437 : vector<8x128xf32>
    %439 = vector.broadcast %432 : f32 to vector<8x128xf32>
    %440 = arith.mulf %439, %14 : vector<8x128xf32>
    %441 = arith.addf %438, %440 : vector<8x128xf32>
    %442 = vector.broadcast %430 : f32 to vector<8x128xf32>
    %443 = arith.mulf %442, %13 : vector<8x128xf32>
    %444 = arith.addf %429, %443 : vector<8x128xf32>
    %445 = vector.broadcast %431 : f32 to vector<8x128xf32>
    %446 = arith.mulf %445, %14 : vector<8x128xf32>
    %447 = arith.addf %444, %446 : vector<8x128xf32>
    %448 = vector.broadcast %432 : f32 to vector<8x128xf32>
    %449 = arith.mulf %448, %20 : vector<8x128xf32>
    %450 = arith.addf %447, %449 : vector<8x128xf32>
    %c54 = arith.constant 54 : index
    %451 = memref.load %arg1[%c54] : memref<96xf32, #tpu.memory_space<smem>>
    %c55 = arith.constant 55 : index
    %452 = memref.load %arg1[%c55] : memref<96xf32, #tpu.memory_space<smem>>
    %c56 = arith.constant 56 : index
    %453 = memref.load %arg1[%c56] : memref<96xf32, #tpu.memory_space<smem>>
    %454 = vector.broadcast %451 : f32 to vector<8x128xf32>
    %455 = arith.mulf %454, %25 : vector<8x128xf32>
    %456 = arith.addf %441, %455 : vector<8x128xf32>
    %457 = vector.broadcast %452 : f32 to vector<8x128xf32>
    %458 = arith.mulf %457, %21 : vector<8x128xf32>
    %459 = arith.addf %456, %458 : vector<8x128xf32>
    %460 = vector.broadcast %453 : f32 to vector<8x128xf32>
    %461 = arith.mulf %460, %22 : vector<8x128xf32>
    %462 = arith.addf %459, %461 : vector<8x128xf32>
    %463 = vector.broadcast %451 : f32 to vector<8x128xf32>
    %464 = arith.mulf %463, %21 : vector<8x128xf32>
    %465 = arith.addf %450, %464 : vector<8x128xf32>
    %466 = vector.broadcast %452 : f32 to vector<8x128xf32>
    %467 = arith.mulf %466, %22 : vector<8x128xf32>
    %468 = arith.addf %465, %467 : vector<8x128xf32>
    %469 = vector.broadcast %453 : f32 to vector<8x128xf32>
    %470 = arith.mulf %469, %28 : vector<8x128xf32>
    %471 = arith.addf %468, %470 : vector<8x128xf32>
    %c57 = arith.constant 57 : index
    %472 = memref.load %arg1[%c57] : memref<96xf32, #tpu.memory_space<smem>>
    %c58 = arith.constant 58 : index
    %473 = memref.load %arg1[%c58] : memref<96xf32, #tpu.memory_space<smem>>
    %c59 = arith.constant 59 : index
    %474 = memref.load %arg1[%c59] : memref<96xf32, #tpu.memory_space<smem>>
    %475 = vector.broadcast %472 : f32 to vector<8x128xf32>
    %476 = arith.mulf %475, %33 : vector<8x128xf32>
    %477 = arith.addf %462, %476 : vector<8x128xf32>
    %478 = vector.broadcast %473 : f32 to vector<8x128xf32>
    %479 = arith.mulf %478, %29 : vector<8x128xf32>
    %480 = arith.addf %477, %479 : vector<8x128xf32>
    %481 = vector.broadcast %474 : f32 to vector<8x128xf32>
    %482 = arith.mulf %481, %30 : vector<8x128xf32>
    %483 = arith.addf %480, %482 : vector<8x128xf32>
    %484 = vector.broadcast %472 : f32 to vector<8x128xf32>
    %485 = arith.mulf %484, %29 : vector<8x128xf32>
    %486 = arith.addf %471, %485 : vector<8x128xf32>
    %487 = vector.broadcast %473 : f32 to vector<8x128xf32>
    %488 = arith.mulf %487, %30 : vector<8x128xf32>
    %489 = arith.addf %486, %488 : vector<8x128xf32>
    %490 = vector.broadcast %474 : f32 to vector<8x128xf32>
    %491 = arith.mulf %490, %36 : vector<8x128xf32>
    %492 = arith.addf %489, %491 : vector<8x128xf32>
    %cst_41 = arith.constant 0.000000e+00 : f32
    %493 = vector.broadcast %cst_41 : f32 to vector<8x128xf32>
    %494 = arith.maximumf %483, %493 : vector<8x128xf32>
    %cst_42 = arith.constant 0.000000e+00 : f32
    %495 = vector.broadcast %cst_42 : f32 to vector<8x128xf32>
    %496 = arith.maximumf %492, %495 : vector<8x128xf32>
    %c5_43 = arith.constant 5 : index
    %497 = memref.load %arg2[%c5_43] : memref<8xf32, #tpu.memory_space<smem>>
    %498 = vector.broadcast %497 : f32 to vector<8x128xf32>
    %c5_44 = arith.constant 5 : index
    %499 = memref.load %arg2[%c5_44] : memref<8xf32, #tpu.memory_space<smem>>
    %500 = vector.broadcast %499 : f32 to vector<8x128xf32>
    %c60 = arith.constant 60 : index
    %501 = memref.load %arg1[%c60] : memref<96xf32, #tpu.memory_space<smem>>
    %c61 = arith.constant 61 : index
    %502 = memref.load %arg1[%c61] : memref<96xf32, #tpu.memory_space<smem>>
    %c62 = arith.constant 62 : index
    %503 = memref.load %arg1[%c62] : memref<96xf32, #tpu.memory_space<smem>>
    %504 = vector.broadcast %501 : f32 to vector<8x128xf32>
    %505 = arith.mulf %504, %9 : vector<8x128xf32>
    %506 = arith.addf %498, %505 : vector<8x128xf32>
    %507 = vector.broadcast %502 : f32 to vector<8x128xf32>
    %508 = arith.mulf %507, %5 : vector<8x128xf32>
    %509 = arith.addf %506, %508 : vector<8x128xf32>
    %510 = vector.broadcast %503 : f32 to vector<8x128xf32>
    %511 = arith.mulf %510, %6 : vector<8x128xf32>
    %512 = arith.addf %509, %511 : vector<8x128xf32>
    %513 = vector.broadcast %501 : f32 to vector<8x128xf32>
    %514 = arith.mulf %513, %5 : vector<8x128xf32>
    %515 = arith.addf %500, %514 : vector<8x128xf32>
    %516 = vector.broadcast %502 : f32 to vector<8x128xf32>
    %517 = arith.mulf %516, %6 : vector<8x128xf32>
    %518 = arith.addf %515, %517 : vector<8x128xf32>
    %519 = vector.broadcast %503 : f32 to vector<8x128xf32>
    %520 = arith.mulf %519, %12 : vector<8x128xf32>
    %521 = arith.addf %518, %520 : vector<8x128xf32>
    %c63 = arith.constant 63 : index
    %522 = memref.load %arg1[%c63] : memref<96xf32, #tpu.memory_space<smem>>
    %c64 = arith.constant 64 : index
    %523 = memref.load %arg1[%c64] : memref<96xf32, #tpu.memory_space<smem>>
    %c65 = arith.constant 65 : index
    %524 = memref.load %arg1[%c65] : memref<96xf32, #tpu.memory_space<smem>>
    %525 = vector.broadcast %522 : f32 to vector<8x128xf32>
    %526 = arith.mulf %525, %17 : vector<8x128xf32>
    %527 = arith.addf %512, %526 : vector<8x128xf32>
    %528 = vector.broadcast %523 : f32 to vector<8x128xf32>
    %529 = arith.mulf %528, %13 : vector<8x128xf32>
    %530 = arith.addf %527, %529 : vector<8x128xf32>
    %531 = vector.broadcast %524 : f32 to vector<8x128xf32>
    %532 = arith.mulf %531, %14 : vector<8x128xf32>
    %533 = arith.addf %530, %532 : vector<8x128xf32>
    %534 = vector.broadcast %522 : f32 to vector<8x128xf32>
    %535 = arith.mulf %534, %13 : vector<8x128xf32>
    %536 = arith.addf %521, %535 : vector<8x128xf32>
    %537 = vector.broadcast %523 : f32 to vector<8x128xf32>
    %538 = arith.mulf %537, %14 : vector<8x128xf32>
    %539 = arith.addf %536, %538 : vector<8x128xf32>
    %540 = vector.broadcast %524 : f32 to vector<8x128xf32>
    %541 = arith.mulf %540, %20 : vector<8x128xf32>
    %542 = arith.addf %539, %541 : vector<8x128xf32>
    %c66 = arith.constant 66 : index
    %543 = memref.load %arg1[%c66] : memref<96xf32, #tpu.memory_space<smem>>
    %c67 = arith.constant 67 : index
    %544 = memref.load %arg1[%c67] : memref<96xf32, #tpu.memory_space<smem>>
    %c68 = arith.constant 68 : index
    %545 = memref.load %arg1[%c68] : memref<96xf32, #tpu.memory_space<smem>>
    %546 = vector.broadcast %543 : f32 to vector<8x128xf32>
    %547 = arith.mulf %546, %25 : vector<8x128xf32>
    %548 = arith.addf %533, %547 : vector<8x128xf32>
    %549 = vector.broadcast %544 : f32 to vector<8x128xf32>
    %550 = arith.mulf %549, %21 : vector<8x128xf32>
    %551 = arith.addf %548, %550 : vector<8x128xf32>
    %552 = vector.broadcast %545 : f32 to vector<8x128xf32>
    %553 = arith.mulf %552, %22 : vector<8x128xf32>
    %554 = arith.addf %551, %553 : vector<8x128xf32>
    %555 = vector.broadcast %543 : f32 to vector<8x128xf32>
    %556 = arith.mulf %555, %21 : vector<8x128xf32>
    %557 = arith.addf %542, %556 : vector<8x128xf32>
    %558 = vector.broadcast %544 : f32 to vector<8x128xf32>
    %559 = arith.mulf %558, %22 : vector<8x128xf32>
    %560 = arith.addf %557, %559 : vector<8x128xf32>
    %561 = vector.broadcast %545 : f32 to vector<8x128xf32>
    %562 = arith.mulf %561, %28 : vector<8x128xf32>
    %563 = arith.addf %560, %562 : vector<8x128xf32>
    %c69 = arith.constant 69 : index
    %564 = memref.load %arg1[%c69] : memref<96xf32, #tpu.memory_space<smem>>
    %c70 = arith.constant 70 : index
    %565 = memref.load %arg1[%c70] : memref<96xf32, #tpu.memory_space<smem>>
    %c71 = arith.constant 71 : index
    %566 = memref.load %arg1[%c71] : memref<96xf32, #tpu.memory_space<smem>>
    %567 = vector.broadcast %564 : f32 to vector<8x128xf32>
    %568 = arith.mulf %567, %33 : vector<8x128xf32>
    %569 = arith.addf %554, %568 : vector<8x128xf32>
    %570 = vector.broadcast %565 : f32 to vector<8x128xf32>
    %571 = arith.mulf %570, %29 : vector<8x128xf32>
    %572 = arith.addf %569, %571 : vector<8x128xf32>
    %573 = vector.broadcast %566 : f32 to vector<8x128xf32>
    %574 = arith.mulf %573, %30 : vector<8x128xf32>
    %575 = arith.addf %572, %574 : vector<8x128xf32>
    %576 = vector.broadcast %564 : f32 to vector<8x128xf32>
    %577 = arith.mulf %576, %29 : vector<8x128xf32>
    %578 = arith.addf %563, %577 : vector<8x128xf32>
    %579 = vector.broadcast %565 : f32 to vector<8x128xf32>
    %580 = arith.mulf %579, %30 : vector<8x128xf32>
    %581 = arith.addf %578, %580 : vector<8x128xf32>
    %582 = vector.broadcast %566 : f32 to vector<8x128xf32>
    %583 = arith.mulf %582, %36 : vector<8x128xf32>
    %584 = arith.addf %581, %583 : vector<8x128xf32>
    %cst_45 = arith.constant 0.000000e+00 : f32
    %585 = vector.broadcast %cst_45 : f32 to vector<8x128xf32>
    %586 = arith.maximumf %575, %585 : vector<8x128xf32>
    %cst_46 = arith.constant 0.000000e+00 : f32
    %587 = vector.broadcast %cst_46 : f32 to vector<8x128xf32>
    %588 = arith.maximumf %584, %587 : vector<8x128xf32>
    %c6_47 = arith.constant 6 : index
    %589 = memref.load %arg2[%c6_47] : memref<8xf32, #tpu.memory_space<smem>>
    %590 = vector.broadcast %589 : f32 to vector<8x128xf32>
    %c6_48 = arith.constant 6 : index
    %591 = memref.load %arg2[%c6_48] : memref<8xf32, #tpu.memory_space<smem>>
    %592 = vector.broadcast %591 : f32 to vector<8x128xf32>
    %c72 = arith.constant 72 : index
    %593 = memref.load %arg1[%c72] : memref<96xf32, #tpu.memory_space<smem>>
    %c73 = arith.constant 73 : index
    %594 = memref.load %arg1[%c73] : memref<96xf32, #tpu.memory_space<smem>>
    %c74 = arith.constant 74 : index
    %595 = memref.load %arg1[%c74] : memref<96xf32, #tpu.memory_space<smem>>
    %596 = vector.broadcast %593 : f32 to vector<8x128xf32>
    %597 = arith.mulf %596, %9 : vector<8x128xf32>
    %598 = arith.addf %590, %597 : vector<8x128xf32>
    %599 = vector.broadcast %594 : f32 to vector<8x128xf32>
    %600 = arith.mulf %599, %5 : vector<8x128xf32>
    %601 = arith.addf %598, %600 : vector<8x128xf32>
    %602 = vector.broadcast %595 : f32 to vector<8x128xf32>
    %603 = arith.mulf %602, %6 : vector<8x128xf32>
    %604 = arith.addf %601, %603 : vector<8x128xf32>
    %605 = vector.broadcast %593 : f32 to vector<8x128xf32>
    %606 = arith.mulf %605, %5 : vector<8x128xf32>
    %607 = arith.addf %592, %606 : vector<8x128xf32>
    %608 = vector.broadcast %594 : f32 to vector<8x128xf32>
    %609 = arith.mulf %608, %6 : vector<8x128xf32>
    %610 = arith.addf %607, %609 : vector<8x128xf32>
    %611 = vector.broadcast %595 : f32 to vector<8x128xf32>
    %612 = arith.mulf %611, %12 : vector<8x128xf32>
    %613 = arith.addf %610, %612 : vector<8x128xf32>
    %c75 = arith.constant 75 : index
    %614 = memref.load %arg1[%c75] : memref<96xf32, #tpu.memory_space<smem>>
    %c76 = arith.constant 76 : index
    %615 = memref.load %arg1[%c76] : memref<96xf32, #tpu.memory_space<smem>>
    %c77 = arith.constant 77 : index
    %616 = memref.load %arg1[%c77] : memref<96xf32, #tpu.memory_space<smem>>
    %617 = vector.broadcast %614 : f32 to vector<8x128xf32>
    %618 = arith.mulf %617, %17 : vector<8x128xf32>
    %619 = arith.addf %604, %618 : vector<8x128xf32>
    %620 = vector.broadcast %615 : f32 to vector<8x128xf32>
    %621 = arith.mulf %620, %13 : vector<8x128xf32>
    %622 = arith.addf %619, %621 : vector<8x128xf32>
    %623 = vector.broadcast %616 : f32 to vector<8x128xf32>
    %624 = arith.mulf %623, %14 : vector<8x128xf32>
    %625 = arith.addf %622, %624 : vector<8x128xf32>
    %626 = vector.broadcast %614 : f32 to vector<8x128xf32>
    %627 = arith.mulf %626, %13 : vector<8x128xf32>
    %628 = arith.addf %613, %627 : vector<8x128xf32>
    %629 = vector.broadcast %615 : f32 to vector<8x128xf32>
    %630 = arith.mulf %629, %14 : vector<8x128xf32>
    %631 = arith.addf %628, %630 : vector<8x128xf32>
    %632 = vector.broadcast %616 : f32 to vector<8x128xf32>
    %633 = arith.mulf %632, %20 : vector<8x128xf32>
    %634 = arith.addf %631, %633 : vector<8x128xf32>
    %c78 = arith.constant 78 : index
    %635 = memref.load %arg1[%c78] : memref<96xf32, #tpu.memory_space<smem>>
    %c79 = arith.constant 79 : index
    %636 = memref.load %arg1[%c79] : memref<96xf32, #tpu.memory_space<smem>>
    %c80 = arith.constant 80 : index
    %637 = memref.load %arg1[%c80] : memref<96xf32, #tpu.memory_space<smem>>
    %638 = vector.broadcast %635 : f32 to vector<8x128xf32>
    %639 = arith.mulf %638, %25 : vector<8x128xf32>
    %640 = arith.addf %625, %639 : vector<8x128xf32>
    %641 = vector.broadcast %636 : f32 to vector<8x128xf32>
    %642 = arith.mulf %641, %21 : vector<8x128xf32>
    %643 = arith.addf %640, %642 : vector<8x128xf32>
    %644 = vector.broadcast %637 : f32 to vector<8x128xf32>
    %645 = arith.mulf %644, %22 : vector<8x128xf32>
    %646 = arith.addf %643, %645 : vector<8x128xf32>
    %647 = vector.broadcast %635 : f32 to vector<8x128xf32>
    %648 = arith.mulf %647, %21 : vector<8x128xf32>
    %649 = arith.addf %634, %648 : vector<8x128xf32>
    %650 = vector.broadcast %636 : f32 to vector<8x128xf32>
    %651 = arith.mulf %650, %22 : vector<8x128xf32>
    %652 = arith.addf %649, %651 : vector<8x128xf32>
    %653 = vector.broadcast %637 : f32 to vector<8x128xf32>
    %654 = arith.mulf %653, %28 : vector<8x128xf32>
    %655 = arith.addf %652, %654 : vector<8x128xf32>
    %c81 = arith.constant 81 : index
    %656 = memref.load %arg1[%c81] : memref<96xf32, #tpu.memory_space<smem>>
    %c82 = arith.constant 82 : index
    %657 = memref.load %arg1[%c82] : memref<96xf32, #tpu.memory_space<smem>>
    %c83 = arith.constant 83 : index
    %658 = memref.load %arg1[%c83] : memref<96xf32, #tpu.memory_space<smem>>
    %659 = vector.broadcast %656 : f32 to vector<8x128xf32>
    %660 = arith.mulf %659, %33 : vector<8x128xf32>
    %661 = arith.addf %646, %660 : vector<8x128xf32>
    %662 = vector.broadcast %657 : f32 to vector<8x128xf32>
    %663 = arith.mulf %662, %29 : vector<8x128xf32>
    %664 = arith.addf %661, %663 : vector<8x128xf32>
    %665 = vector.broadcast %658 : f32 to vector<8x128xf32>
    %666 = arith.mulf %665, %30 : vector<8x128xf32>
    %667 = arith.addf %664, %666 : vector<8x128xf32>
    %668 = vector.broadcast %656 : f32 to vector<8x128xf32>
    %669 = arith.mulf %668, %29 : vector<8x128xf32>
    %670 = arith.addf %655, %669 : vector<8x128xf32>
    %671 = vector.broadcast %657 : f32 to vector<8x128xf32>
    %672 = arith.mulf %671, %30 : vector<8x128xf32>
    %673 = arith.addf %670, %672 : vector<8x128xf32>
    %674 = vector.broadcast %658 : f32 to vector<8x128xf32>
    %675 = arith.mulf %674, %36 : vector<8x128xf32>
    %676 = arith.addf %673, %675 : vector<8x128xf32>
    %cst_49 = arith.constant 0.000000e+00 : f32
    %677 = vector.broadcast %cst_49 : f32 to vector<8x128xf32>
    %678 = arith.maximumf %667, %677 : vector<8x128xf32>
    %cst_50 = arith.constant 0.000000e+00 : f32
    %679 = vector.broadcast %cst_50 : f32 to vector<8x128xf32>
    %680 = arith.maximumf %676, %679 : vector<8x128xf32>
    %c7_51 = arith.constant 7 : index
    %681 = memref.load %arg2[%c7_51] : memref<8xf32, #tpu.memory_space<smem>>
    %682 = vector.broadcast %681 : f32 to vector<8x128xf32>
    %c7_52 = arith.constant 7 : index
    %683 = memref.load %arg2[%c7_52] : memref<8xf32, #tpu.memory_space<smem>>
    %684 = vector.broadcast %683 : f32 to vector<8x128xf32>
    %c84 = arith.constant 84 : index
    %685 = memref.load %arg1[%c84] : memref<96xf32, #tpu.memory_space<smem>>
    %c85 = arith.constant 85 : index
    %686 = memref.load %arg1[%c85] : memref<96xf32, #tpu.memory_space<smem>>
    %c86 = arith.constant 86 : index
    %687 = memref.load %arg1[%c86] : memref<96xf32, #tpu.memory_space<smem>>
    %688 = vector.broadcast %685 : f32 to vector<8x128xf32>
    %689 = arith.mulf %688, %9 : vector<8x128xf32>
    %690 = arith.addf %682, %689 : vector<8x128xf32>
    %691 = vector.broadcast %686 : f32 to vector<8x128xf32>
    %692 = arith.mulf %691, %5 : vector<8x128xf32>
    %693 = arith.addf %690, %692 : vector<8x128xf32>
    %694 = vector.broadcast %687 : f32 to vector<8x128xf32>
    %695 = arith.mulf %694, %6 : vector<8x128xf32>
    %696 = arith.addf %693, %695 : vector<8x128xf32>
    %697 = vector.broadcast %685 : f32 to vector<8x128xf32>
    %698 = arith.mulf %697, %5 : vector<8x128xf32>
    %699 = arith.addf %684, %698 : vector<8x128xf32>
    %700 = vector.broadcast %686 : f32 to vector<8x128xf32>
    %701 = arith.mulf %700, %6 : vector<8x128xf32>
    %702 = arith.addf %699, %701 : vector<8x128xf32>
    %703 = vector.broadcast %687 : f32 to vector<8x128xf32>
    %704 = arith.mulf %703, %12 : vector<8x128xf32>
    %705 = arith.addf %702, %704 : vector<8x128xf32>
    %c87 = arith.constant 87 : index
    %706 = memref.load %arg1[%c87] : memref<96xf32, #tpu.memory_space<smem>>
    %c88 = arith.constant 88 : index
    %707 = memref.load %arg1[%c88] : memref<96xf32, #tpu.memory_space<smem>>
    %c89 = arith.constant 89 : index
    %708 = memref.load %arg1[%c89] : memref<96xf32, #tpu.memory_space<smem>>
    %709 = vector.broadcast %706 : f32 to vector<8x128xf32>
    %710 = arith.mulf %709, %17 : vector<8x128xf32>
    %711 = arith.addf %696, %710 : vector<8x128xf32>
    %712 = vector.broadcast %707 : f32 to vector<8x128xf32>
    %713 = arith.mulf %712, %13 : vector<8x128xf32>
    %714 = arith.addf %711, %713 : vector<8x128xf32>
    %715 = vector.broadcast %708 : f32 to vector<8x128xf32>
    %716 = arith.mulf %715, %14 : vector<8x128xf32>
    %717 = arith.addf %714, %716 : vector<8x128xf32>
    %718 = vector.broadcast %706 : f32 to vector<8x128xf32>
    %719 = arith.mulf %718, %13 : vector<8x128xf32>
    %720 = arith.addf %705, %719 : vector<8x128xf32>
    %721 = vector.broadcast %707 : f32 to vector<8x128xf32>
    %722 = arith.mulf %721, %14 : vector<8x128xf32>
    %723 = arith.addf %720, %722 : vector<8x128xf32>
    %724 = vector.broadcast %708 : f32 to vector<8x128xf32>
    %725 = arith.mulf %724, %20 : vector<8x128xf32>
    %726 = arith.addf %723, %725 : vector<8x128xf32>
    %c90 = arith.constant 90 : index
    %727 = memref.load %arg1[%c90] : memref<96xf32, #tpu.memory_space<smem>>
    %c91 = arith.constant 91 : index
    %728 = memref.load %arg1[%c91] : memref<96xf32, #tpu.memory_space<smem>>
    %c92 = arith.constant 92 : index
    %729 = memref.load %arg1[%c92] : memref<96xf32, #tpu.memory_space<smem>>
    %730 = vector.broadcast %727 : f32 to vector<8x128xf32>
    %731 = arith.mulf %730, %25 : vector<8x128xf32>
    %732 = arith.addf %717, %731 : vector<8x128xf32>
    %733 = vector.broadcast %728 : f32 to vector<8x128xf32>
    %734 = arith.mulf %733, %21 : vector<8x128xf32>
    %735 = arith.addf %732, %734 : vector<8x128xf32>
    %736 = vector.broadcast %729 : f32 to vector<8x128xf32>
    %737 = arith.mulf %736, %22 : vector<8x128xf32>
    %738 = arith.addf %735, %737 : vector<8x128xf32>
    %739 = vector.broadcast %727 : f32 to vector<8x128xf32>
    %740 = arith.mulf %739, %21 : vector<8x128xf32>
    %741 = arith.addf %726, %740 : vector<8x128xf32>
    %742 = vector.broadcast %728 : f32 to vector<8x128xf32>
    %743 = arith.mulf %742, %22 : vector<8x128xf32>
    %744 = arith.addf %741, %743 : vector<8x128xf32>
    %745 = vector.broadcast %729 : f32 to vector<8x128xf32>
    %746 = arith.mulf %745, %28 : vector<8x128xf32>
    %747 = arith.addf %744, %746 : vector<8x128xf32>
    %c93 = arith.constant 93 : index
    %748 = memref.load %arg1[%c93] : memref<96xf32, #tpu.memory_space<smem>>
    %c94 = arith.constant 94 : index
    %749 = memref.load %arg1[%c94] : memref<96xf32, #tpu.memory_space<smem>>
    %c95 = arith.constant 95 : index
    %750 = memref.load %arg1[%c95] : memref<96xf32, #tpu.memory_space<smem>>
    %751 = vector.broadcast %748 : f32 to vector<8x128xf32>
    %752 = arith.mulf %751, %33 : vector<8x128xf32>
    %753 = arith.addf %738, %752 : vector<8x128xf32>
    %754 = vector.broadcast %749 : f32 to vector<8x128xf32>
    %755 = arith.mulf %754, %29 : vector<8x128xf32>
    %756 = arith.addf %753, %755 : vector<8x128xf32>
    %757 = vector.broadcast %750 : f32 to vector<8x128xf32>
    %758 = arith.mulf %757, %30 : vector<8x128xf32>
    %759 = arith.addf %756, %758 : vector<8x128xf32>
    %760 = vector.broadcast %748 : f32 to vector<8x128xf32>
    %761 = arith.mulf %760, %29 : vector<8x128xf32>
    %762 = arith.addf %747, %761 : vector<8x128xf32>
    %763 = vector.broadcast %749 : f32 to vector<8x128xf32>
    %764 = arith.mulf %763, %30 : vector<8x128xf32>
    %765 = arith.addf %762, %764 : vector<8x128xf32>
    %766 = vector.broadcast %750 : f32 to vector<8x128xf32>
    %767 = arith.mulf %766, %36 : vector<8x128xf32>
    %768 = arith.addf %765, %767 : vector<8x128xf32>
    %cst_53 = arith.constant 0.000000e+00 : f32
    %769 = vector.broadcast %cst_53 : f32 to vector<8x128xf32>
    %770 = arith.maximumf %759, %769 : vector<8x128xf32>
    %cst_54 = arith.constant 0.000000e+00 : f32
    %771 = vector.broadcast %cst_54 : f32 to vector<8x128xf32>
    %772 = arith.maximumf %768, %771 : vector<8x128xf32>
    %c1_i32_55 = arith.constant 1 : i32
    %773 = tpu.dynamic_rotate %128 by %c1_i32_55 dim 1 : vector<8x128xf32>, i32 -> vector<8x128xf32>
    %cst_56 = arith.constant 0.000000e+00 : f32
    %774 = vector.broadcast %cst_56 : f32 to vector<8x128xf32>
    %775 = arith.select %2, %773, %774 : vector<8x128xi1>, vector<8x128xf32>
    %c127_i32_57 = arith.constant 127 : i32
    %776 = tpu.dynamic_rotate %126 by %c127_i32_57 dim 1 : vector<8x128xf32>, i32 -> vector<8x128xf32>
    %cst_58 = arith.constant 0.000000e+00 : f32
    %777 = vector.broadcast %cst_58 : f32 to vector<8x128xf32>
    %778 = arith.select %4, %776, %777 : vector<8x128xi1>, vector<8x128xf32>
    %c1_i32_59 = arith.constant 1 : i32
    %779 = tpu.dynamic_rotate %220 by %c1_i32_59 dim 1 : vector<8x128xf32>, i32 -> vector<8x128xf32>
    %cst_60 = arith.constant 0.000000e+00 : f32
    %780 = vector.broadcast %cst_60 : f32 to vector<8x128xf32>
    %781 = arith.select %2, %779, %780 : vector<8x128xi1>, vector<8x128xf32>
    %c127_i32_61 = arith.constant 127 : i32
    %782 = tpu.dynamic_rotate %218 by %c127_i32_61 dim 1 : vector<8x128xf32>, i32 -> vector<8x128xf32>
    %cst_62 = arith.constant 0.000000e+00 : f32
    %783 = vector.broadcast %cst_62 : f32 to vector<8x128xf32>
    %784 = arith.select %4, %782, %783 : vector<8x128xi1>, vector<8x128xf32>
    %c1_i32_63 = arith.constant 1 : i32
    %785 = tpu.dynamic_rotate %312 by %c1_i32_63 dim 1 : vector<8x128xf32>, i32 -> vector<8x128xf32>
    %cst_64 = arith.constant 0.000000e+00 : f32
    %786 = vector.broadcast %cst_64 : f32 to vector<8x128xf32>
    %787 = arith.select %2, %785, %786 : vector<8x128xi1>, vector<8x128xf32>
    %c127_i32_65 = arith.constant 127 : i32
    %788 = tpu.dynamic_rotate %310 by %c127_i32_65 dim 1 : vector<8x128xf32>, i32 -> vector<8x128xf32>
    %cst_66 = arith.constant 0.000000e+00 : f32
    %789 = vector.broadcast %cst_66 : f32 to vector<8x128xf32>
    %790 = arith.select %4, %788, %789 : vector<8x128xi1>, vector<8x128xf32>
    %c1_i32_67 = arith.constant 1 : i32
    %791 = tpu.dynamic_rotate %404 by %c1_i32_67 dim 1 : vector<8x128xf32>, i32 -> vector<8x128xf32>
    %cst_68 = arith.constant 0.000000e+00 : f32
    %792 = vector.broadcast %cst_68 : f32 to vector<8x128xf32>
    %793 = arith.select %2, %791, %792 : vector<8x128xi1>, vector<8x128xf32>
    %c127_i32_69 = arith.constant 127 : i32
    %794 = tpu.dynamic_rotate %402 by %c127_i32_69 dim 1 : vector<8x128xf32>, i32 -> vector<8x128xf32>
    %cst_70 = arith.constant 0.000000e+00 : f32
    %795 = vector.broadcast %cst_70 : f32 to vector<8x128xf32>
    %796 = arith.select %4, %794, %795 : vector<8x128xi1>, vector<8x128xf32>
    %c1_i32_71 = arith.constant 1 : i32
    %797 = tpu.dynamic_rotate %496 by %c1_i32_71 dim 1 : vector<8x128xf32>, i32 -> vector<8x128xf32>
    %cst_72 = arith.constant 0.000000e+00 : f32
    %798 = vector.broadcast %cst_72 : f32 to vector<8x128xf32>
    %799 = arith.select %2, %797, %798 : vector<8x128xi1>, vector<8x128xf32>
    %c127_i32_73 = arith.constant 127 : i32
    %800 = tpu.dynamic_rotate %494 by %c127_i32_73 dim 1 : vector<8x128xf32>, i32 -> vector<8x128xf32>
    %cst_74 = arith.constant 0.000000e+00 : f32
    %801 = vector.broadcast %cst_74 : f32 to vector<8x128xf32>
    %802 = arith.select %4, %800, %801 : vector<8x128xi1>, vector<8x128xf32>
    %c1_i32_75 = arith.constant 1 : i32
    %803 = tpu.dynamic_rotate %588 by %c1_i32_75 dim 1 : vector<8x128xf32>, i32 -> vector<8x128xf32>
    %cst_76 = arith.constant 0.000000e+00 : f32
    %804 = vector.broadcast %cst_76 : f32 to vector<8x128xf32>
    %805 = arith.select %2, %803, %804 : vector<8x128xi1>, vector<8x128xf32>
    %c127_i32_77 = arith.constant 127 : i32
    %806 = tpu.dynamic_rotate %586 by %c127_i32_77 dim 1 : vector<8x128xf32>, i32 -> vector<8x128xf32>
    %cst_78 = arith.constant 0.000000e+00 : f32
    %807 = vector.broadcast %cst_78 : f32 to vector<8x128xf32>
    %808 = arith.select %4, %806, %807 : vector<8x128xi1>, vector<8x128xf32>
    %c1_i32_79 = arith.constant 1 : i32
    %809 = tpu.dynamic_rotate %680 by %c1_i32_79 dim 1 : vector<8x128xf32>, i32 -> vector<8x128xf32>
    %cst_80 = arith.constant 0.000000e+00 : f32
    %810 = vector.broadcast %cst_80 : f32 to vector<8x128xf32>
    %811 = arith.select %2, %809, %810 : vector<8x128xi1>, vector<8x128xf32>
    %c127_i32_81 = arith.constant 127 : i32
    %812 = tpu.dynamic_rotate %678 by %c127_i32_81 dim 1 : vector<8x128xf32>, i32 -> vector<8x128xf32>
    %cst_82 = arith.constant 0.000000e+00 : f32
    %813 = vector.broadcast %cst_82 : f32 to vector<8x128xf32>
    %814 = arith.select %4, %812, %813 : vector<8x128xi1>, vector<8x128xf32>
    %c1_i32_83 = arith.constant 1 : i32
    %815 = tpu.dynamic_rotate %772 by %c1_i32_83 dim 1 : vector<8x128xf32>, i32 -> vector<8x128xf32>
    %cst_84 = arith.constant 0.000000e+00 : f32
    %816 = vector.broadcast %cst_84 : f32 to vector<8x128xf32>
    %817 = arith.select %2, %815, %816 : vector<8x128xi1>, vector<8x128xf32>
    %c127_i32_85 = arith.constant 127 : i32
    %818 = tpu.dynamic_rotate %770 by %c127_i32_85 dim 1 : vector<8x128xf32>, i32 -> vector<8x128xf32>
    %cst_86 = arith.constant 0.000000e+00 : f32
    %819 = vector.broadcast %cst_86 : f32 to vector<8x128xf32>
    %820 = arith.select %4, %818, %819 : vector<8x128xi1>, vector<8x128xf32>
    %c0_87 = arith.constant 0 : index
    %821 = memref.load %arg4[%c0_87] : memref<8xf32, #tpu.memory_space<smem>>
    %822 = vector.broadcast %821 : f32 to vector<8x128xf32>
    %c0_88 = arith.constant 0 : index
    %823 = memref.load %arg4[%c0_88] : memref<8xf32, #tpu.memory_space<smem>>
    %824 = vector.broadcast %823 : f32 to vector<8x128xf32>
    %c0_89 = arith.constant 0 : index
    %825 = memref.load %arg3[%c0_89] : memref<192xf32, #tpu.memory_space<smem>>
    %c1_90 = arith.constant 1 : index
    %826 = memref.load %arg3[%c1_90] : memref<192xf32, #tpu.memory_space<smem>>
    %c2_91 = arith.constant 2 : index
    %827 = memref.load %arg3[%c2_91] : memref<192xf32, #tpu.memory_space<smem>>
    %828 = vector.broadcast %825 : f32 to vector<8x128xf32>
    %829 = arith.mulf %828, %775 : vector<8x128xf32>
    %830 = arith.addf %822, %829 : vector<8x128xf32>
    %831 = vector.broadcast %826 : f32 to vector<8x128xf32>
    %832 = arith.mulf %831, %126 : vector<8x128xf32>
    %833 = arith.addf %830, %832 : vector<8x128xf32>
    %834 = vector.broadcast %827 : f32 to vector<8x128xf32>
    %835 = arith.mulf %834, %128 : vector<8x128xf32>
    %836 = arith.addf %833, %835 : vector<8x128xf32>
    %837 = vector.broadcast %825 : f32 to vector<8x128xf32>
    %838 = arith.mulf %837, %126 : vector<8x128xf32>
    %839 = arith.addf %824, %838 : vector<8x128xf32>
    %840 = vector.broadcast %826 : f32 to vector<8x128xf32>
    %841 = arith.mulf %840, %128 : vector<8x128xf32>
    %842 = arith.addf %839, %841 : vector<8x128xf32>
    %843 = vector.broadcast %827 : f32 to vector<8x128xf32>
    %844 = arith.mulf %843, %778 : vector<8x128xf32>
    %845 = arith.addf %842, %844 : vector<8x128xf32>
    %c3_92 = arith.constant 3 : index
    %846 = memref.load %arg3[%c3_92] : memref<192xf32, #tpu.memory_space<smem>>
    %c4_93 = arith.constant 4 : index
    %847 = memref.load %arg3[%c4_93] : memref<192xf32, #tpu.memory_space<smem>>
    %c5_94 = arith.constant 5 : index
    %848 = memref.load %arg3[%c5_94] : memref<192xf32, #tpu.memory_space<smem>>
    %849 = vector.broadcast %846 : f32 to vector<8x128xf32>
    %850 = arith.mulf %849, %781 : vector<8x128xf32>
    %851 = arith.addf %836, %850 : vector<8x128xf32>
    %852 = vector.broadcast %847 : f32 to vector<8x128xf32>
    %853 = arith.mulf %852, %218 : vector<8x128xf32>
    %854 = arith.addf %851, %853 : vector<8x128xf32>
    %855 = vector.broadcast %848 : f32 to vector<8x128xf32>
    %856 = arith.mulf %855, %220 : vector<8x128xf32>
    %857 = arith.addf %854, %856 : vector<8x128xf32>
    %858 = vector.broadcast %846 : f32 to vector<8x128xf32>
    %859 = arith.mulf %858, %218 : vector<8x128xf32>
    %860 = arith.addf %845, %859 : vector<8x128xf32>
    %861 = vector.broadcast %847 : f32 to vector<8x128xf32>
    %862 = arith.mulf %861, %220 : vector<8x128xf32>
    %863 = arith.addf %860, %862 : vector<8x128xf32>
    %864 = vector.broadcast %848 : f32 to vector<8x128xf32>
    %865 = arith.mulf %864, %784 : vector<8x128xf32>
    %866 = arith.addf %863, %865 : vector<8x128xf32>
    %c6_95 = arith.constant 6 : index
    %867 = memref.load %arg3[%c6_95] : memref<192xf32, #tpu.memory_space<smem>>
    %c7_96 = arith.constant 7 : index
    %868 = memref.load %arg3[%c7_96] : memref<192xf32, #tpu.memory_space<smem>>
    %c8_97 = arith.constant 8 : index
    %869 = memref.load %arg3[%c8_97] : memref<192xf32, #tpu.memory_space<smem>>
    %870 = vector.broadcast %867 : f32 to vector<8x128xf32>
    %871 = arith.mulf %870, %787 : vector<8x128xf32>
    %872 = arith.addf %857, %871 : vector<8x128xf32>
    %873 = vector.broadcast %868 : f32 to vector<8x128xf32>
    %874 = arith.mulf %873, %310 : vector<8x128xf32>
    %875 = arith.addf %872, %874 : vector<8x128xf32>
    %876 = vector.broadcast %869 : f32 to vector<8x128xf32>
    %877 = arith.mulf %876, %312 : vector<8x128xf32>
    %878 = arith.addf %875, %877 : vector<8x128xf32>
    %879 = vector.broadcast %867 : f32 to vector<8x128xf32>
    %880 = arith.mulf %879, %310 : vector<8x128xf32>
    %881 = arith.addf %866, %880 : vector<8x128xf32>
    %882 = vector.broadcast %868 : f32 to vector<8x128xf32>
    %883 = arith.mulf %882, %312 : vector<8x128xf32>
    %884 = arith.addf %881, %883 : vector<8x128xf32>
    %885 = vector.broadcast %869 : f32 to vector<8x128xf32>
    %886 = arith.mulf %885, %790 : vector<8x128xf32>
    %887 = arith.addf %884, %886 : vector<8x128xf32>
    %c9_98 = arith.constant 9 : index
    %888 = memref.load %arg3[%c9_98] : memref<192xf32, #tpu.memory_space<smem>>
    %c10_99 = arith.constant 10 : index
    %889 = memref.load %arg3[%c10_99] : memref<192xf32, #tpu.memory_space<smem>>
    %c11_100 = arith.constant 11 : index
    %890 = memref.load %arg3[%c11_100] : memref<192xf32, #tpu.memory_space<smem>>
    %891 = vector.broadcast %888 : f32 to vector<8x128xf32>
    %892 = arith.mulf %891, %793 : vector<8x128xf32>
    %893 = arith.addf %878, %892 : vector<8x128xf32>
    %894 = vector.broadcast %889 : f32 to vector<8x128xf32>
    %895 = arith.mulf %894, %402 : vector<8x128xf32>
    %896 = arith.addf %893, %895 : vector<8x128xf32>
    %897 = vector.broadcast %890 : f32 to vector<8x128xf32>
    %898 = arith.mulf %897, %404 : vector<8x128xf32>
    %899 = arith.addf %896, %898 : vector<8x128xf32>
    %900 = vector.broadcast %888 : f32 to vector<8x128xf32>
    %901 = arith.mulf %900, %402 : vector<8x128xf32>
    %902 = arith.addf %887, %901 : vector<8x128xf32>
    %903 = vector.broadcast %889 : f32 to vector<8x128xf32>
    %904 = arith.mulf %903, %404 : vector<8x128xf32>
    %905 = arith.addf %902, %904 : vector<8x128xf32>
    %906 = vector.broadcast %890 : f32 to vector<8x128xf32>
    %907 = arith.mulf %906, %796 : vector<8x128xf32>
    %908 = arith.addf %905, %907 : vector<8x128xf32>
    %c12_101 = arith.constant 12 : index
    %909 = memref.load %arg3[%c12_101] : memref<192xf32, #tpu.memory_space<smem>>
    %c13_102 = arith.constant 13 : index
    %910 = memref.load %arg3[%c13_102] : memref<192xf32, #tpu.memory_space<smem>>
    %c14_103 = arith.constant 14 : index
    %911 = memref.load %arg3[%c14_103] : memref<192xf32, #tpu.memory_space<smem>>
    %912 = vector.broadcast %909 : f32 to vector<8x128xf32>
    %913 = arith.mulf %912, %799 : vector<8x128xf32>
    %914 = arith.addf %899, %913 : vector<8x128xf32>
    %915 = vector.broadcast %910 : f32 to vector<8x128xf32>
    %916 = arith.mulf %915, %494 : vector<8x128xf32>
    %917 = arith.addf %914, %916 : vector<8x128xf32>
    %918 = vector.broadcast %911 : f32 to vector<8x128xf32>
    %919 = arith.mulf %918, %496 : vector<8x128xf32>
    %920 = arith.addf %917, %919 : vector<8x128xf32>
    %921 = vector.broadcast %909 : f32 to vector<8x128xf32>
    %922 = arith.mulf %921, %494 : vector<8x128xf32>
    %923 = arith.addf %908, %922 : vector<8x128xf32>
    %924 = vector.broadcast %910 : f32 to vector<8x128xf32>
    %925 = arith.mulf %924, %496 : vector<8x128xf32>
    %926 = arith.addf %923, %925 : vector<8x128xf32>
    %927 = vector.broadcast %911 : f32 to vector<8x128xf32>
    %928 = arith.mulf %927, %802 : vector<8x128xf32>
    %929 = arith.addf %926, %928 : vector<8x128xf32>
    %c15_104 = arith.constant 15 : index
    %930 = memref.load %arg3[%c15_104] : memref<192xf32, #tpu.memory_space<smem>>
    %c16_105 = arith.constant 16 : index
    %931 = memref.load %arg3[%c16_105] : memref<192xf32, #tpu.memory_space<smem>>
    %c17_106 = arith.constant 17 : index
    %932 = memref.load %arg3[%c17_106] : memref<192xf32, #tpu.memory_space<smem>>
    %933 = vector.broadcast %930 : f32 to vector<8x128xf32>
    %934 = arith.mulf %933, %805 : vector<8x128xf32>
    %935 = arith.addf %920, %934 : vector<8x128xf32>
    %936 = vector.broadcast %931 : f32 to vector<8x128xf32>
    %937 = arith.mulf %936, %586 : vector<8x128xf32>
    %938 = arith.addf %935, %937 : vector<8x128xf32>
    %939 = vector.broadcast %932 : f32 to vector<8x128xf32>
    %940 = arith.mulf %939, %588 : vector<8x128xf32>
    %941 = arith.addf %938, %940 : vector<8x128xf32>
    %942 = vector.broadcast %930 : f32 to vector<8x128xf32>
    %943 = arith.mulf %942, %586 : vector<8x128xf32>
    %944 = arith.addf %929, %943 : vector<8x128xf32>
    %945 = vector.broadcast %931 : f32 to vector<8x128xf32>
    %946 = arith.mulf %945, %588 : vector<8x128xf32>
    %947 = arith.addf %944, %946 : vector<8x128xf32>
    %948 = vector.broadcast %932 : f32 to vector<8x128xf32>
    %949 = arith.mulf %948, %808 : vector<8x128xf32>
    %950 = arith.addf %947, %949 : vector<8x128xf32>
    %c18_107 = arith.constant 18 : index
    %951 = memref.load %arg3[%c18_107] : memref<192xf32, #tpu.memory_space<smem>>
    %c19_108 = arith.constant 19 : index
    %952 = memref.load %arg3[%c19_108] : memref<192xf32, #tpu.memory_space<smem>>
    %c20_109 = arith.constant 20 : index
    %953 = memref.load %arg3[%c20_109] : memref<192xf32, #tpu.memory_space<smem>>
    %954 = vector.broadcast %951 : f32 to vector<8x128xf32>
    %955 = arith.mulf %954, %811 : vector<8x128xf32>
    %956 = arith.addf %941, %955 : vector<8x128xf32>
    %957 = vector.broadcast %952 : f32 to vector<8x128xf32>
    %958 = arith.mulf %957, %678 : vector<8x128xf32>
    %959 = arith.addf %956, %958 : vector<8x128xf32>
    %960 = vector.broadcast %953 : f32 to vector<8x128xf32>
    %961 = arith.mulf %960, %680 : vector<8x128xf32>
    %962 = arith.addf %959, %961 : vector<8x128xf32>
    %963 = vector.broadcast %951 : f32 to vector<8x128xf32>
    %964 = arith.mulf %963, %678 : vector<8x128xf32>
    %965 = arith.addf %950, %964 : vector<8x128xf32>
    %966 = vector.broadcast %952 : f32 to vector<8x128xf32>
    %967 = arith.mulf %966, %680 : vector<8x128xf32>
    %968 = arith.addf %965, %967 : vector<8x128xf32>
    %969 = vector.broadcast %953 : f32 to vector<8x128xf32>
    %970 = arith.mulf %969, %814 : vector<8x128xf32>
    %971 = arith.addf %968, %970 : vector<8x128xf32>
    %c21_110 = arith.constant 21 : index
    %972 = memref.load %arg3[%c21_110] : memref<192xf32, #tpu.memory_space<smem>>
    %c22_111 = arith.constant 22 : index
    %973 = memref.load %arg3[%c22_111] : memref<192xf32, #tpu.memory_space<smem>>
    %c23_112 = arith.constant 23 : index
    %974 = memref.load %arg3[%c23_112] : memref<192xf32, #tpu.memory_space<smem>>
    %975 = vector.broadcast %972 : f32 to vector<8x128xf32>
    %976 = arith.mulf %975, %817 : vector<8x128xf32>
    %977 = arith.addf %962, %976 : vector<8x128xf32>
    %978 = vector.broadcast %973 : f32 to vector<8x128xf32>
    %979 = arith.mulf %978, %770 : vector<8x128xf32>
    %980 = arith.addf %977, %979 : vector<8x128xf32>
    %981 = vector.broadcast %974 : f32 to vector<8x128xf32>
    %982 = arith.mulf %981, %772 : vector<8x128xf32>
    %983 = arith.addf %980, %982 : vector<8x128xf32>
    %984 = vector.broadcast %972 : f32 to vector<8x128xf32>
    %985 = arith.mulf %984, %770 : vector<8x128xf32>
    %986 = arith.addf %971, %985 : vector<8x128xf32>
    %987 = vector.broadcast %973 : f32 to vector<8x128xf32>
    %988 = arith.mulf %987, %772 : vector<8x128xf32>
    %989 = arith.addf %986, %988 : vector<8x128xf32>
    %990 = vector.broadcast %974 : f32 to vector<8x128xf32>
    %991 = arith.mulf %990, %820 : vector<8x128xf32>
    %992 = arith.addf %989, %991 : vector<8x128xf32>
    %cst_113 = arith.constant 0.000000e+00 : f32
    %993 = vector.broadcast %cst_113 : f32 to vector<8x128xf32>
    %994 = arith.maximumf %983, %993 : vector<8x128xf32>
    %cst_114 = arith.constant 0.000000e+00 : f32
    %995 = vector.broadcast %cst_114 : f32 to vector<8x128xf32>
    %996 = arith.maximumf %992, %995 : vector<8x128xf32>
    %997 = arith.maximumf %994, %996 : vector<8x128xf32>
    %c0_115 = arith.constant 0 : index
    %c0_116 = arith.constant 0 : index
    %998 = vector.load %arg6[%c0_115, %c0_116] : memref<8x1024xf32, #tpu.memory_space<vmem>>, vector<8x128xf32>
    tpu.vector_store %arg6[%c0_115, %c0_116], %997 {strides = array<i32>} : memref<8x1024xf32, #tpu.memory_space<vmem>>, vector<8x128xf32>,
    %c1_117 = arith.constant 1 : index
    %999 = memref.load %arg4[%c1_117] : memref<8xf32, #tpu.memory_space<smem>>
    %1000 = vector.broadcast %999 : f32 to vector<8x128xf32>
    %c1_118 = arith.constant 1 : index
    %1001 = memref.load %arg4[%c1_118] : memref<8xf32, #tpu.memory_space<smem>>
    %1002 = vector.broadcast %1001 : f32 to vector<8x128xf32>
    %c24_119 = arith.constant 24 : index
    %1003 = memref.load %arg3[%c24_119] : memref<192xf32, #tpu.memory_space<smem>>
    %c25_120 = arith.constant 25 : index
    %1004 = memref.load %arg3[%c25_120] : memref<192xf32, #tpu.memory_space<smem>>
    %c26_121 = arith.constant 26 : index
    %1005 = memref.load %arg3[%c26_121] : memref<192xf32, #tpu.memory_space<smem>>
    %1006 = vector.broadcast %1003 : f32 to vector<8x128xf32>
    %1007 = arith.mulf %1006, %775 : vector<8x128xf32>
    %1008 = arith.addf %1000, %1007 : vector<8x128xf32>
    %1009 = vector.broadcast %1004 : f32 to vector<8x128xf32>
    %1010 = arith.mulf %1009, %126 : vector<8x128xf32>
    %1011 = arith.addf %1008, %1010 : vector<8x128xf32>
    %1012 = vector.broadcast %1005 : f32 to vector<8x128xf32>
    %1013 = arith.mulf %1012, %128 : vector<8x128xf32>
    %1014 = arith.addf %1011, %1013 : vector<8x128xf32>
    %1015 = vector.broadcast %1003 : f32 to vector<8x128xf32>
    %1016 = arith.mulf %1015, %126 : vector<8x128xf32>
    %1017 = arith.addf %1002, %1016 : vector<8x128xf32>
    %1018 = vector.broadcast %1004 : f32 to vector<8x128xf32>
    %1019 = arith.mulf %1018, %128 : vector<8x128xf32>
    %1020 = arith.addf %1017, %1019 : vector<8x128xf32>
    %1021 = vector.broadcast %1005 : f32 to vector<8x128xf32>
    %1022 = arith.mulf %1021, %778 : vector<8x128xf32>
    %1023 = arith.addf %1020, %1022 : vector<8x128xf32>
    %c27_122 = arith.constant 27 : index
    %1024 = memref.load %arg3[%c27_122] : memref<192xf32, #tpu.memory_space<smem>>
    %c28_123 = arith.constant 28 : index
    %1025 = memref.load %arg3[%c28_123] : memref<192xf32, #tpu.memory_space<smem>>
    %c29_124 = arith.constant 29 : index
    %1026 = memref.load %arg3[%c29_124] : memref<192xf32, #tpu.memory_space<smem>>
    %1027 = vector.broadcast %1024 : f32 to vector<8x128xf32>
    %1028 = arith.mulf %1027, %781 : vector<8x128xf32>
    %1029 = arith.addf %1014, %1028 : vector<8x128xf32>
    %1030 = vector.broadcast %1025 : f32 to vector<8x128xf32>
    %1031 = arith.mulf %1030, %218 : vector<8x128xf32>
    %1032 = arith.addf %1029, %1031 : vector<8x128xf32>
    %1033 = vector.broadcast %1026 : f32 to vector<8x128xf32>
    %1034 = arith.mulf %1033, %220 : vector<8x128xf32>
    %1035 = arith.addf %1032, %1034 : vector<8x128xf32>
    %1036 = vector.broadcast %1024 : f32 to vector<8x128xf32>
    %1037 = arith.mulf %1036, %218 : vector<8x128xf32>
    %1038 = arith.addf %1023, %1037 : vector<8x128xf32>
    %1039 = vector.broadcast %1025 : f32 to vector<8x128xf32>
    %1040 = arith.mulf %1039, %220 : vector<8x128xf32>
    %1041 = arith.addf %1038, %1040 : vector<8x128xf32>
    %1042 = vector.broadcast %1026 : f32 to vector<8x128xf32>
    %1043 = arith.mulf %1042, %784 : vector<8x128xf32>
    %1044 = arith.addf %1041, %1043 : vector<8x128xf32>
    %c30_125 = arith.constant 30 : index
    %1045 = memref.load %arg3[%c30_125] : memref<192xf32, #tpu.memory_space<smem>>
    %c31_126 = arith.constant 31 : index
    %1046 = memref.load %arg3[%c31_126] : memref<192xf32, #tpu.memory_space<smem>>
    %c32_127 = arith.constant 32 : index
    %1047 = memref.load %arg3[%c32_127] : memref<192xf32, #tpu.memory_space<smem>>
    %1048 = vector.broadcast %1045 : f32 to vector<8x128xf32>
    %1049 = arith.mulf %1048, %787 : vector<8x128xf32>
    %1050 = arith.addf %1035, %1049 : vector<8x128xf32>
    %1051 = vector.broadcast %1046 : f32 to vector<8x128xf32>
    %1052 = arith.mulf %1051, %310 : vector<8x128xf32>
    %1053 = arith.addf %1050, %1052 : vector<8x128xf32>
    %1054 = vector.broadcast %1047 : f32 to vector<8x128xf32>
    %1055 = arith.mulf %1054, %312 : vector<8x128xf32>
    %1056 = arith.addf %1053, %1055 : vector<8x128xf32>
    %1057 = vector.broadcast %1045 : f32 to vector<8x128xf32>
    %1058 = arith.mulf %1057, %310 : vector<8x128xf32>
    %1059 = arith.addf %1044, %1058 : vector<8x128xf32>
    %1060 = vector.broadcast %1046 : f32 to vector<8x128xf32>
    %1061 = arith.mulf %1060, %312 : vector<8x128xf32>
    %1062 = arith.addf %1059, %1061 : vector<8x128xf32>
    %1063 = vector.broadcast %1047 : f32 to vector<8x128xf32>
    %1064 = arith.mulf %1063, %790 : vector<8x128xf32>
    %1065 = arith.addf %1062, %1064 : vector<8x128xf32>
    %c33_128 = arith.constant 33 : index
    %1066 = memref.load %arg3[%c33_128] : memref<192xf32, #tpu.memory_space<smem>>
    %c34_129 = arith.constant 34 : index
    %1067 = memref.load %arg3[%c34_129] : memref<192xf32, #tpu.memory_space<smem>>
    %c35_130 = arith.constant 35 : index
    %1068 = memref.load %arg3[%c35_130] : memref<192xf32, #tpu.memory_space<smem>>
    %1069 = vector.broadcast %1066 : f32 to vector<8x128xf32>
    %1070 = arith.mulf %1069, %793 : vector<8x128xf32>
    %1071 = arith.addf %1056, %1070 : vector<8x128xf32>
    %1072 = vector.broadcast %1067 : f32 to vector<8x128xf32>
    %1073 = arith.mulf %1072, %402 : vector<8x128xf32>
    %1074 = arith.addf %1071, %1073 : vector<8x128xf32>
    %1075 = vector.broadcast %1068 : f32 to vector<8x128xf32>
    %1076 = arith.mulf %1075, %404 : vector<8x128xf32>
    %1077 = arith.addf %1074, %1076 : vector<8x128xf32>
    %1078 = vector.broadcast %1066 : f32 to vector<8x128xf32>
    %1079 = arith.mulf %1078, %402 : vector<8x128xf32>
    %1080 = arith.addf %1065, %1079 : vector<8x128xf32>
    %1081 = vector.broadcast %1067 : f32 to vector<8x128xf32>
    %1082 = arith.mulf %1081, %404 : vector<8x128xf32>
    %1083 = arith.addf %1080, %1082 : vector<8x128xf32>
    %1084 = vector.broadcast %1068 : f32 to vector<8x128xf32>
    %1085 = arith.mulf %1084, %796 : vector<8x128xf32>
    %1086 = arith.addf %1083, %1085 : vector<8x128xf32>
    %c36_131 = arith.constant 36 : index
    %1087 = memref.load %arg3[%c36_131] : memref<192xf32, #tpu.memory_space<smem>>
    %c37_132 = arith.constant 37 : index
    %1088 = memref.load %arg3[%c37_132] : memref<192xf32, #tpu.memory_space<smem>>
    %c38_133 = arith.constant 38 : index
    %1089 = memref.load %arg3[%c38_133] : memref<192xf32, #tpu.memory_space<smem>>
    %1090 = vector.broadcast %1087 : f32 to vector<8x128xf32>
    %1091 = arith.mulf %1090, %799 : vector<8x128xf32>
    %1092 = arith.addf %1077, %1091 : vector<8x128xf32>
    %1093 = vector.broadcast %1088 : f32 to vector<8x128xf32>
    %1094 = arith.mulf %1093, %494 : vector<8x128xf32>
    %1095 = arith.addf %1092, %1094 : vector<8x128xf32>
    %1096 = vector.broadcast %1089 : f32 to vector<8x128xf32>
    %1097 = arith.mulf %1096, %496 : vector<8x128xf32>
    %1098 = arith.addf %1095, %1097 : vector<8x128xf32>
    %1099 = vector.broadcast %1087 : f32 to vector<8x128xf32>
    %1100 = arith.mulf %1099, %494 : vector<8x128xf32>
    %1101 = arith.addf %1086, %1100 : vector<8x128xf32>
    %1102 = vector.broadcast %1088 : f32 to vector<8x128xf32>
    %1103 = arith.mulf %1102, %496 : vector<8x128xf32>
    %1104 = arith.addf %1101, %1103 : vector<8x128xf32>
    %1105 = vector.broadcast %1089 : f32 to vector<8x128xf32>
    %1106 = arith.mulf %1105, %802 : vector<8x128xf32>
    %1107 = arith.addf %1104, %1106 : vector<8x128xf32>
    %c39_134 = arith.constant 39 : index
    %1108 = memref.load %arg3[%c39_134] : memref<192xf32, #tpu.memory_space<smem>>
    %c40_135 = arith.constant 40 : index
    %1109 = memref.load %arg3[%c40_135] : memref<192xf32, #tpu.memory_space<smem>>
    %c41_136 = arith.constant 41 : index
    %1110 = memref.load %arg3[%c41_136] : memref<192xf32, #tpu.memory_space<smem>>
    %1111 = vector.broadcast %1108 : f32 to vector<8x128xf32>
    %1112 = arith.mulf %1111, %805 : vector<8x128xf32>
    %1113 = arith.addf %1098, %1112 : vector<8x128xf32>
    %1114 = vector.broadcast %1109 : f32 to vector<8x128xf32>
    %1115 = arith.mulf %1114, %586 : vector<8x128xf32>
    %1116 = arith.addf %1113, %1115 : vector<8x128xf32>
    %1117 = vector.broadcast %1110 : f32 to vector<8x128xf32>
    %1118 = arith.mulf %1117, %588 : vector<8x128xf32>
    %1119 = arith.addf %1116, %1118 : vector<8x128xf32>
    %1120 = vector.broadcast %1108 : f32 to vector<8x128xf32>
    %1121 = arith.mulf %1120, %586 : vector<8x128xf32>
    %1122 = arith.addf %1107, %1121 : vector<8x128xf32>
    %1123 = vector.broadcast %1109 : f32 to vector<8x128xf32>
    %1124 = arith.mulf %1123, %588 : vector<8x128xf32>
    %1125 = arith.addf %1122, %1124 : vector<8x128xf32>
    %1126 = vector.broadcast %1110 : f32 to vector<8x128xf32>
    %1127 = arith.mulf %1126, %808 : vector<8x128xf32>
    %1128 = arith.addf %1125, %1127 : vector<8x128xf32>
    %c42_137 = arith.constant 42 : index
    %1129 = memref.load %arg3[%c42_137] : memref<192xf32, #tpu.memory_space<smem>>
    %c43_138 = arith.constant 43 : index
    %1130 = memref.load %arg3[%c43_138] : memref<192xf32, #tpu.memory_space<smem>>
    %c44_139 = arith.constant 44 : index
    %1131 = memref.load %arg3[%c44_139] : memref<192xf32, #tpu.memory_space<smem>>
    %1132 = vector.broadcast %1129 : f32 to vector<8x128xf32>
    %1133 = arith.mulf %1132, %811 : vector<8x128xf32>
    %1134 = arith.addf %1119, %1133 : vector<8x128xf32>
    %1135 = vector.broadcast %1130 : f32 to vector<8x128xf32>
    %1136 = arith.mulf %1135, %678 : vector<8x128xf32>
    %1137 = arith.addf %1134, %1136 : vector<8x128xf32>
    %1138 = vector.broadcast %1131 : f32 to vector<8x128xf32>
    %1139 = arith.mulf %1138, %680 : vector<8x128xf32>
    %1140 = arith.addf %1137, %1139 : vector<8x128xf32>
    %1141 = vector.broadcast %1129 : f32 to vector<8x128xf32>
    %1142 = arith.mulf %1141, %678 : vector<8x128xf32>
    %1143 = arith.addf %1128, %1142 : vector<8x128xf32>
    %1144 = vector.broadcast %1130 : f32 to vector<8x128xf32>
    %1145 = arith.mulf %1144, %680 : vector<8x128xf32>
    %1146 = arith.addf %1143, %1145 : vector<8x128xf32>
    %1147 = vector.broadcast %1131 : f32 to vector<8x128xf32>
    %1148 = arith.mulf %1147, %814 : vector<8x128xf32>
    %1149 = arith.addf %1146, %1148 : vector<8x128xf32>
    %c45_140 = arith.constant 45 : index
    %1150 = memref.load %arg3[%c45_140] : memref<192xf32, #tpu.memory_space<smem>>
    %c46_141 = arith.constant 46 : index
    %1151 = memref.load %arg3[%c46_141] : memref<192xf32, #tpu.memory_space<smem>>
    %c47_142 = arith.constant 47 : index
    %1152 = memref.load %arg3[%c47_142] : memref<192xf32, #tpu.memory_space<smem>>
    %1153 = vector.broadcast %1150 : f32 to vector<8x128xf32>
    %1154 = arith.mulf %1153, %817 : vector<8x128xf32>
    %1155 = arith.addf %1140, %1154 : vector<8x128xf32>
    %1156 = vector.broadcast %1151 : f32 to vector<8x128xf32>
    %1157 = arith.mulf %1156, %770 : vector<8x128xf32>
    %1158 = arith.addf %1155, %1157 : vector<8x128xf32>
    %1159 = vector.broadcast %1152 : f32 to vector<8x128xf32>
    %1160 = arith.mulf %1159, %772 : vector<8x128xf32>
    %1161 = arith.addf %1158, %1160 : vector<8x128xf32>
    %1162 = vector.broadcast %1150 : f32 to vector<8x128xf32>
    %1163 = arith.mulf %1162, %770 : vector<8x128xf32>
    %1164 = arith.addf %1149, %1163 : vector<8x128xf32>
    %1165 = vector.broadcast %1151 : f32 to vector<8x128xf32>
    %1166 = arith.mulf %1165, %772 : vector<8x128xf32>
    %1167 = arith.addf %1164, %1166 : vector<8x128xf32>
    %1168 = vector.broadcast %1152 : f32 to vector<8x128xf32>
    %1169 = arith.mulf %1168, %820 : vector<8x128xf32>
    %1170 = arith.addf %1167, %1169 : vector<8x128xf32>
    %cst_143 = arith.constant 0.000000e+00 : f32
    %1171 = vector.broadcast %cst_143 : f32 to vector<8x128xf32>
    %1172 = arith.maximumf %1161, %1171 : vector<8x128xf32>
    %cst_144 = arith.constant 0.000000e+00 : f32
    %1173 = vector.broadcast %cst_144 : f32 to vector<8x128xf32>
    %1174 = arith.maximumf %1170, %1173 : vector<8x128xf32>
    %1175 = arith.maximumf %1172, %1174 : vector<8x128xf32>
    %c0_145 = arith.constant 0 : index
    %c128_146 = arith.constant 128 : index
    %1176 = vector.load %arg6[%c0_145, %c128_146] : memref<8x1024xf32, #tpu.memory_space<vmem>>, vector<8x128xf32>
    tpu.vector_store %arg6[%c0_145, %c128_146], %1175 {strides = array<i32>} : memref<8x1024xf32, #tpu.memory_space<vmem>>, vector<8x128xf32>,
    %c2_147 = arith.constant 2 : index
    %1177 = memref.load %arg4[%c2_147] : memref<8xf32, #tpu.memory_space<smem>>
    %1178 = vector.broadcast %1177 : f32 to vector<8x128xf32>
    %c2_148 = arith.constant 2 : index
    %1179 = memref.load %arg4[%c2_148] : memref<8xf32, #tpu.memory_space<smem>>
    %1180 = vector.broadcast %1179 : f32 to vector<8x128xf32>
    %c48_149 = arith.constant 48 : index
    %1181 = memref.load %arg3[%c48_149] : memref<192xf32, #tpu.memory_space<smem>>
    %c49_150 = arith.constant 49 : index
    %1182 = memref.load %arg3[%c49_150] : memref<192xf32, #tpu.memory_space<smem>>
    %c50_151 = arith.constant 50 : index
    %1183 = memref.load %arg3[%c50_151] : memref<192xf32, #tpu.memory_space<smem>>
    %1184 = vector.broadcast %1181 : f32 to vector<8x128xf32>
    %1185 = arith.mulf %1184, %775 : vector<8x128xf32>
    %1186 = arith.addf %1178, %1185 : vector<8x128xf32>
    %1187 = vector.broadcast %1182 : f32 to vector<8x128xf32>
    %1188 = arith.mulf %1187, %126 : vector<8x128xf32>
    %1189 = arith.addf %1186, %1188 : vector<8x128xf32>
    %1190 = vector.broadcast %1183 : f32 to vector<8x128xf32>
    %1191 = arith.mulf %1190, %128 : vector<8x128xf32>
    %1192 = arith.addf %1189, %1191 : vector<8x128xf32>
    %1193 = vector.broadcast %1181 : f32 to vector<8x128xf32>
    %1194 = arith.mulf %1193, %126 : vector<8x128xf32>
    %1195 = arith.addf %1180, %1194 : vector<8x128xf32>
    %1196 = vector.broadcast %1182 : f32 to vector<8x128xf32>
    %1197 = arith.mulf %1196, %128 : vector<8x128xf32>
    %1198 = arith.addf %1195, %1197 : vector<8x128xf32>
    %1199 = vector.broadcast %1183 : f32 to vector<8x128xf32>
    %1200 = arith.mulf %1199, %778 : vector<8x128xf32>
    %1201 = arith.addf %1198, %1200 : vector<8x128xf32>
    %c51_152 = arith.constant 51 : index
    %1202 = memref.load %arg3[%c51_152] : memref<192xf32, #tpu.memory_space<smem>>
    %c52_153 = arith.constant 52 : index
    %1203 = memref.load %arg3[%c52_153] : memref<192xf32, #tpu.memory_space<smem>>
    %c53_154 = arith.constant 53 : index
    %1204 = memref.load %arg3[%c53_154] : memref<192xf32, #tpu.memory_space<smem>>
    %1205 = vector.broadcast %1202 : f32 to vector<8x128xf32>
    %1206 = arith.mulf %1205, %781 : vector<8x128xf32>
    %1207 = arith.addf %1192, %1206 : vector<8x128xf32>
    %1208 = vector.broadcast %1203 : f32 to vector<8x128xf32>
    %1209 = arith.mulf %1208, %218 : vector<8x128xf32>
    %1210 = arith.addf %1207, %1209 : vector<8x128xf32>
    %1211 = vector.broadcast %1204 : f32 to vector<8x128xf32>
    %1212 = arith.mulf %1211, %220 : vector<8x128xf32>
    %1213 = arith.addf %1210, %1212 : vector<8x128xf32>
    %1214 = vector.broadcast %1202 : f32 to vector<8x128xf32>
    %1215 = arith.mulf %1214, %218 : vector<8x128xf32>
    %1216 = arith.addf %1201, %1215 : vector<8x128xf32>
    %1217 = vector.broadcast %1203 : f32 to vector<8x128xf32>
    %1218 = arith.mulf %1217, %220 : vector<8x128xf32>
    %1219 = arith.addf %1216, %1218 : vector<8x128xf32>
    %1220 = vector.broadcast %1204 : f32 to vector<8x128xf32>
    %1221 = arith.mulf %1220, %784 : vector<8x128xf32>
    %1222 = arith.addf %1219, %1221 : vector<8x128xf32>
    %c54_155 = arith.constant 54 : index
    %1223 = memref.load %arg3[%c54_155] : memref<192xf32, #tpu.memory_space<smem>>
    %c55_156 = arith.constant 55 : index
    %1224 = memref.load %arg3[%c55_156] : memref<192xf32, #tpu.memory_space<smem>>
    %c56_157 = arith.constant 56 : index
    %1225 = memref.load %arg3[%c56_157] : memref<192xf32, #tpu.memory_space<smem>>
    %1226 = vector.broadcast %1223 : f32 to vector<8x128xf32>
    %1227 = arith.mulf %1226, %787 : vector<8x128xf32>
    %1228 = arith.addf %1213, %1227 : vector<8x128xf32>
    %1229 = vector.broadcast %1224 : f32 to vector<8x128xf32>
    %1230 = arith.mulf %1229, %310 : vector<8x128xf32>
    %1231 = arith.addf %1228, %1230 : vector<8x128xf32>
    %1232 = vector.broadcast %1225 : f32 to vector<8x128xf32>
    %1233 = arith.mulf %1232, %312 : vector<8x128xf32>
    %1234 = arith.addf %1231, %1233 : vector<8x128xf32>
    %1235 = vector.broadcast %1223 : f32 to vector<8x128xf32>
    %1236 = arith.mulf %1235, %310 : vector<8x128xf32>
    %1237 = arith.addf %1222, %1236 : vector<8x128xf32>
    %1238 = vector.broadcast %1224 : f32 to vector<8x128xf32>
    %1239 = arith.mulf %1238, %312 : vector<8x128xf32>
    %1240 = arith.addf %1237, %1239 : vector<8x128xf32>
    %1241 = vector.broadcast %1225 : f32 to vector<8x128xf32>
    %1242 = arith.mulf %1241, %790 : vector<8x128xf32>
    %1243 = arith.addf %1240, %1242 : vector<8x128xf32>
    %c57_158 = arith.constant 57 : index
    %1244 = memref.load %arg3[%c57_158] : memref<192xf32, #tpu.memory_space<smem>>
    %c58_159 = arith.constant 58 : index
    %1245 = memref.load %arg3[%c58_159] : memref<192xf32, #tpu.memory_space<smem>>
    %c59_160 = arith.constant 59 : index
    %1246 = memref.load %arg3[%c59_160] : memref<192xf32, #tpu.memory_space<smem>>
    %1247 = vector.broadcast %1244 : f32 to vector<8x128xf32>
    %1248 = arith.mulf %1247, %793 : vector<8x128xf32>
    %1249 = arith.addf %1234, %1248 : vector<8x128xf32>
    %1250 = vector.broadcast %1245 : f32 to vector<8x128xf32>
    %1251 = arith.mulf %1250, %402 : vector<8x128xf32>
    %1252 = arith.addf %1249, %1251 : vector<8x128xf32>
    %1253 = vector.broadcast %1246 : f32 to vector<8x128xf32>
    %1254 = arith.mulf %1253, %404 : vector<8x128xf32>
    %1255 = arith.addf %1252, %1254 : vector<8x128xf32>
    %1256 = vector.broadcast %1244 : f32 to vector<8x128xf32>
    %1257 = arith.mulf %1256, %402 : vector<8x128xf32>
    %1258 = arith.addf %1243, %1257 : vector<8x128xf32>
    %1259 = vector.broadcast %1245 : f32 to vector<8x128xf32>
    %1260 = arith.mulf %1259, %404 : vector<8x128xf32>
    %1261 = arith.addf %1258, %1260 : vector<8x128xf32>
    %1262 = vector.broadcast %1246 : f32 to vector<8x128xf32>
    %1263 = arith.mulf %1262, %796 : vector<8x128xf32>
    %1264 = arith.addf %1261, %1263 : vector<8x128xf32>
    %c60_161 = arith.constant 60 : index
    %1265 = memref.load %arg3[%c60_161] : memref<192xf32, #tpu.memory_space<smem>>
    %c61_162 = arith.constant 61 : index
    %1266 = memref.load %arg3[%c61_162] : memref<192xf32, #tpu.memory_space<smem>>
    %c62_163 = arith.constant 62 : index
    %1267 = memref.load %arg3[%c62_163] : memref<192xf32, #tpu.memory_space<smem>>
    %1268 = vector.broadcast %1265 : f32 to vector<8x128xf32>
    %1269 = arith.mulf %1268, %799 : vector<8x128xf32>
    %1270 = arith.addf %1255, %1269 : vector<8x128xf32>
    %1271 = vector.broadcast %1266 : f32 to vector<8x128xf32>
    %1272 = arith.mulf %1271, %494 : vector<8x128xf32>
    %1273 = arith.addf %1270, %1272 : vector<8x128xf32>
    %1274 = vector.broadcast %1267 : f32 to vector<8x128xf32>
    %1275 = arith.mulf %1274, %496 : vector<8x128xf32>
    %1276 = arith.addf %1273, %1275 : vector<8x128xf32>
    %1277 = vector.broadcast %1265 : f32 to vector<8x128xf32>
    %1278 = arith.mulf %1277, %494 : vector<8x128xf32>
    %1279 = arith.addf %1264, %1278 : vector<8x128xf32>
    %1280 = vector.broadcast %1266 : f32 to vector<8x128xf32>
    %1281 = arith.mulf %1280, %496 : vector<8x128xf32>
    %1282 = arith.addf %1279, %1281 : vector<8x128xf32>
    %1283 = vector.broadcast %1267 : f32 to vector<8x128xf32>
    %1284 = arith.mulf %1283, %802 : vector<8x128xf32>
    %1285 = arith.addf %1282, %1284 : vector<8x128xf32>
    %c63_164 = arith.constant 63 : index
    %1286 = memref.load %arg3[%c63_164] : memref<192xf32, #tpu.memory_space<smem>>
    %c64_165 = arith.constant 64 : index
    %1287 = memref.load %arg3[%c64_165] : memref<192xf32, #tpu.memory_space<smem>>
    %c65_166 = arith.constant 65 : index
    %1288 = memref.load %arg3[%c65_166] : memref<192xf32, #tpu.memory_space<smem>>
    %1289 = vector.broadcast %1286 : f32 to vector<8x128xf32>
    %1290 = arith.mulf %1289, %805 : vector<8x128xf32>
    %1291 = arith.addf %1276, %1290 : vector<8x128xf32>
    %1292 = vector.broadcast %1287 : f32 to vector<8x128xf32>
    %1293 = arith.mulf %1292, %586 : vector<8x128xf32>
    %1294 = arith.addf %1291, %1293 : vector<8x128xf32>
    %1295 = vector.broadcast %1288 : f32 to vector<8x128xf32>
    %1296 = arith.mulf %1295, %588 : vector<8x128xf32>
    %1297 = arith.addf %1294, %1296 : vector<8x128xf32>
    %1298 = vector.broadcast %1286 : f32 to vector<8x128xf32>
    %1299 = arith.mulf %1298, %586 : vector<8x128xf32>
    %1300 = arith.addf %1285, %1299 : vector<8x128xf32>
    %1301 = vector.broadcast %1287 : f32 to vector<8x128xf32>
    %1302 = arith.mulf %1301, %588 : vector<8x128xf32>
    %1303 = arith.addf %1300, %1302 : vector<8x128xf32>
    %1304 = vector.broadcast %1288 : f32 to vector<8x128xf32>
    %1305 = arith.mulf %1304, %808 : vector<8x128xf32>
    %1306 = arith.addf %1303, %1305 : vector<8x128xf32>
    %c66_167 = arith.constant 66 : index
    %1307 = memref.load %arg3[%c66_167] : memref<192xf32, #tpu.memory_space<smem>>
    %c67_168 = arith.constant 67 : index
    %1308 = memref.load %arg3[%c67_168] : memref<192xf32, #tpu.memory_space<smem>>
    %c68_169 = arith.constant 68 : index
    %1309 = memref.load %arg3[%c68_169] : memref<192xf32, #tpu.memory_space<smem>>
    %1310 = vector.broadcast %1307 : f32 to vector<8x128xf32>
    %1311 = arith.mulf %1310, %811 : vector<8x128xf32>
    %1312 = arith.addf %1297, %1311 : vector<8x128xf32>
    %1313 = vector.broadcast %1308 : f32 to vector<8x128xf32>
    %1314 = arith.mulf %1313, %678 : vector<8x128xf32>
    %1315 = arith.addf %1312, %1314 : vector<8x128xf32>
    %1316 = vector.broadcast %1309 : f32 to vector<8x128xf32>
    %1317 = arith.mulf %1316, %680 : vector<8x128xf32>
    %1318 = arith.addf %1315, %1317 : vector<8x128xf32>
    %1319 = vector.broadcast %1307 : f32 to vector<8x128xf32>
    %1320 = arith.mulf %1319, %678 : vector<8x128xf32>
    %1321 = arith.addf %1306, %1320 : vector<8x128xf32>
    %1322 = vector.broadcast %1308 : f32 to vector<8x128xf32>
    %1323 = arith.mulf %1322, %680 : vector<8x128xf32>
    %1324 = arith.addf %1321, %1323 : vector<8x128xf32>
    %1325 = vector.broadcast %1309 : f32 to vector<8x128xf32>
    %1326 = arith.mulf %1325, %814 : vector<8x128xf32>
    %1327 = arith.addf %1324, %1326 : vector<8x128xf32>
    %c69_170 = arith.constant 69 : index
    %1328 = memref.load %arg3[%c69_170] : memref<192xf32, #tpu.memory_space<smem>>
    %c70_171 = arith.constant 70 : index
    %1329 = memref.load %arg3[%c70_171] : memref<192xf32, #tpu.memory_space<smem>>
    %c71_172 = arith.constant 71 : index
    %1330 = memref.load %arg3[%c71_172] : memref<192xf32, #tpu.memory_space<smem>>
    %1331 = vector.broadcast %1328 : f32 to vector<8x128xf32>
    %1332 = arith.mulf %1331, %817 : vector<8x128xf32>
    %1333 = arith.addf %1318, %1332 : vector<8x128xf32>
    %1334 = vector.broadcast %1329 : f32 to vector<8x128xf32>
    %1335 = arith.mulf %1334, %770 : vector<8x128xf32>
    %1336 = arith.addf %1333, %1335 : vector<8x128xf32>
    %1337 = vector.broadcast %1330 : f32 to vector<8x128xf32>
    %1338 = arith.mulf %1337, %772 : vector<8x128xf32>
    %1339 = arith.addf %1336, %1338 : vector<8x128xf32>
    %1340 = vector.broadcast %1328 : f32 to vector<8x128xf32>
    %1341 = arith.mulf %1340, %770 : vector<8x128xf32>
    %1342 = arith.addf %1327, %1341 : vector<8x128xf32>
    %1343 = vector.broadcast %1329 : f32 to vector<8x128xf32>
    %1344 = arith.mulf %1343, %772 : vector<8x128xf32>
    %1345 = arith.addf %1342, %1344 : vector<8x128xf32>
    %1346 = vector.broadcast %1330 : f32 to vector<8x128xf32>
    %1347 = arith.mulf %1346, %820 : vector<8x128xf32>
    %1348 = arith.addf %1345, %1347 : vector<8x128xf32>
    %cst_173 = arith.constant 0.000000e+00 : f32
    %1349 = vector.broadcast %cst_173 : f32 to vector<8x128xf32>
    %1350 = arith.maximumf %1339, %1349 : vector<8x128xf32>
    %cst_174 = arith.constant 0.000000e+00 : f32
    %1351 = vector.broadcast %cst_174 : f32 to vector<8x128xf32>
    %1352 = arith.maximumf %1348, %1351 : vector<8x128xf32>
    %1353 = arith.maximumf %1350, %1352 : vector<8x128xf32>
    %c0_175 = arith.constant 0 : index
    %c256_176 = arith.constant 256 : index
    %1354 = vector.load %arg6[%c0_175, %c256_176] : memref<8x1024xf32, #tpu.memory_space<vmem>>, vector<8x128xf32>
    tpu.vector_store %arg6[%c0_175, %c256_176], %1353 {strides = array<i32>} : memref<8x1024xf32, #tpu.memory_space<vmem>>, vector<8x128xf32>,
    %c3_177 = arith.constant 3 : index
    %1355 = memref.load %arg4[%c3_177] : memref<8xf32, #tpu.memory_space<smem>>
    %1356 = vector.broadcast %1355 : f32 to vector<8x128xf32>
    %c3_178 = arith.constant 3 : index
    %1357 = memref.load %arg4[%c3_178] : memref<8xf32, #tpu.memory_space<smem>>
    %1358 = vector.broadcast %1357 : f32 to vector<8x128xf32>
    %c72_179 = arith.constant 72 : index
    %1359 = memref.load %arg3[%c72_179] : memref<192xf32, #tpu.memory_space<smem>>
    %c73_180 = arith.constant 73 : index
    %1360 = memref.load %arg3[%c73_180] : memref<192xf32, #tpu.memory_space<smem>>
    %c74_181 = arith.constant 74 : index
    %1361 = memref.load %arg3[%c74_181] : memref<192xf32, #tpu.memory_space<smem>>
    %1362 = vector.broadcast %1359 : f32 to vector<8x128xf32>
    %1363 = arith.mulf %1362, %775 : vector<8x128xf32>
    %1364 = arith.addf %1356, %1363 : vector<8x128xf32>
    %1365 = vector.broadcast %1360 : f32 to vector<8x128xf32>
    %1366 = arith.mulf %1365, %126 : vector<8x128xf32>
    %1367 = arith.addf %1364, %1366 : vector<8x128xf32>
    %1368 = vector.broadcast %1361 : f32 to vector<8x128xf32>
    %1369 = arith.mulf %1368, %128 : vector<8x128xf32>
    %1370 = arith.addf %1367, %1369 : vector<8x128xf32>
    %1371 = vector.broadcast %1359 : f32 to vector<8x128xf32>
    %1372 = arith.mulf %1371, %126 : vector<8x128xf32>
    %1373 = arith.addf %1358, %1372 : vector<8x128xf32>
    %1374 = vector.broadcast %1360 : f32 to vector<8x128xf32>
    %1375 = arith.mulf %1374, %128 : vector<8x128xf32>
    %1376 = arith.addf %1373, %1375 : vector<8x128xf32>
    %1377 = vector.broadcast %1361 : f32 to vector<8x128xf32>
    %1378 = arith.mulf %1377, %778 : vector<8x128xf32>
    %1379 = arith.addf %1376, %1378 : vector<8x128xf32>
    %c75_182 = arith.constant 75 : index
    %1380 = memref.load %arg3[%c75_182] : memref<192xf32, #tpu.memory_space<smem>>
    %c76_183 = arith.constant 76 : index
    %1381 = memref.load %arg3[%c76_183] : memref<192xf32, #tpu.memory_space<smem>>
    %c77_184 = arith.constant 77 : index
    %1382 = memref.load %arg3[%c77_184] : memref<192xf32, #tpu.memory_space<smem>>
    %1383 = vector.broadcast %1380 : f32 to vector<8x128xf32>
    %1384 = arith.mulf %1383, %781 : vector<8x128xf32>
    %1385 = arith.addf %1370, %1384 : vector<8x128xf32>
    %1386 = vector.broadcast %1381 : f32 to vector<8x128xf32>
    %1387 = arith.mulf %1386, %218 : vector<8x128xf32>
    %1388 = arith.addf %1385, %1387 : vector<8x128xf32>
    %1389 = vector.broadcast %1382 : f32 to vector<8x128xf32>
    %1390 = arith.mulf %1389, %220 : vector<8x128xf32>
    %1391 = arith.addf %1388, %1390 : vector<8x128xf32>
    %1392 = vector.broadcast %1380 : f32 to vector<8x128xf32>
    %1393 = arith.mulf %1392, %218 : vector<8x128xf32>
    %1394 = arith.addf %1379, %1393 : vector<8x128xf32>
    %1395 = vector.broadcast %1381 : f32 to vector<8x128xf32>
    %1396 = arith.mulf %1395, %220 : vector<8x128xf32>
    %1397 = arith.addf %1394, %1396 : vector<8x128xf32>
    %1398 = vector.broadcast %1382 : f32 to vector<8x128xf32>
    %1399 = arith.mulf %1398, %784 : vector<8x128xf32>
    %1400 = arith.addf %1397, %1399 : vector<8x128xf32>
    %c78_185 = arith.constant 78 : index
    %1401 = memref.load %arg3[%c78_185] : memref<192xf32, #tpu.memory_space<smem>>
    %c79_186 = arith.constant 79 : index
    %1402 = memref.load %arg3[%c79_186] : memref<192xf32, #tpu.memory_space<smem>>
    %c80_187 = arith.constant 80 : index
    %1403 = memref.load %arg3[%c80_187] : memref<192xf32, #tpu.memory_space<smem>>
    %1404 = vector.broadcast %1401 : f32 to vector<8x128xf32>
    %1405 = arith.mulf %1404, %787 : vector<8x128xf32>
    %1406 = arith.addf %1391, %1405 : vector<8x128xf32>
    %1407 = vector.broadcast %1402 : f32 to vector<8x128xf32>
    %1408 = arith.mulf %1407, %310 : vector<8x128xf32>
    %1409 = arith.addf %1406, %1408 : vector<8x128xf32>
    %1410 = vector.broadcast %1403 : f32 to vector<8x128xf32>
    %1411 = arith.mulf %1410, %312 : vector<8x128xf32>
    %1412 = arith.addf %1409, %1411 : vector<8x128xf32>
    %1413 = vector.broadcast %1401 : f32 to vector<8x128xf32>
    %1414 = arith.mulf %1413, %310 : vector<8x128xf32>
    %1415 = arith.addf %1400, %1414 : vector<8x128xf32>
    %1416 = vector.broadcast %1402 : f32 to vector<8x128xf32>
    %1417 = arith.mulf %1416, %312 : vector<8x128xf32>
    %1418 = arith.addf %1415, %1417 : vector<8x128xf32>
    %1419 = vector.broadcast %1403 : f32 to vector<8x128xf32>
    %1420 = arith.mulf %1419, %790 : vector<8x128xf32>
    %1421 = arith.addf %1418, %1420 : vector<8x128xf32>
    %c81_188 = arith.constant 81 : index
    %1422 = memref.load %arg3[%c81_188] : memref<192xf32, #tpu.memory_space<smem>>
    %c82_189 = arith.constant 82 : index
    %1423 = memref.load %arg3[%c82_189] : memref<192xf32, #tpu.memory_space<smem>>
    %c83_190 = arith.constant 83 : index
    %1424 = memref.load %arg3[%c83_190] : memref<192xf32, #tpu.memory_space<smem>>
    %1425 = vector.broadcast %1422 : f32 to vector<8x128xf32>
    %1426 = arith.mulf %1425, %793 : vector<8x128xf32>
    %1427 = arith.addf %1412, %1426 : vector<8x128xf32>
    %1428 = vector.broadcast %1423 : f32 to vector<8x128xf32>
    %1429 = arith.mulf %1428, %402 : vector<8x128xf32>
    %1430 = arith.addf %1427, %1429 : vector<8x128xf32>
    %1431 = vector.broadcast %1424 : f32 to vector<8x128xf32>
    %1432 = arith.mulf %1431, %404 : vector<8x128xf32>
    %1433 = arith.addf %1430, %1432 : vector<8x128xf32>
    %1434 = vector.broadcast %1422 : f32 to vector<8x128xf32>
    %1435 = arith.mulf %1434, %402 : vector<8x128xf32>
    %1436 = arith.addf %1421, %1435 : vector<8x128xf32>
    %1437 = vector.broadcast %1423 : f32 to vector<8x128xf32>
    %1438 = arith.mulf %1437, %404 : vector<8x128xf32>
    %1439 = arith.addf %1436, %1438 : vector<8x128xf32>
    %1440 = vector.broadcast %1424 : f32 to vector<8x128xf32>
    %1441 = arith.mulf %1440, %796 : vector<8x128xf32>
    %1442 = arith.addf %1439, %1441 : vector<8x128xf32>
    %c84_191 = arith.constant 84 : index
    %1443 = memref.load %arg3[%c84_191] : memref<192xf32, #tpu.memory_space<smem>>
    %c85_192 = arith.constant 85 : index
    %1444 = memref.load %arg3[%c85_192] : memref<192xf32, #tpu.memory_space<smem>>
    %c86_193 = arith.constant 86 : index
    %1445 = memref.load %arg3[%c86_193] : memref<192xf32, #tpu.memory_space<smem>>
    %1446 = vector.broadcast %1443 : f32 to vector<8x128xf32>
    %1447 = arith.mulf %1446, %799 : vector<8x128xf32>
    %1448 = arith.addf %1433, %1447 : vector<8x128xf32>
    %1449 = vector.broadcast %1444 : f32 to vector<8x128xf32>
    %1450 = arith.mulf %1449, %494 : vector<8x128xf32>
    %1451 = arith.addf %1448, %1450 : vector<8x128xf32>
    %1452 = vector.broadcast %1445 : f32 to vector<8x128xf32>
    %1453 = arith.mulf %1452, %496 : vector<8x128xf32>
    %1454 = arith.addf %1451, %1453 : vector<8x128xf32>
    %1455 = vector.broadcast %1443 : f32 to vector<8x128xf32>
    %1456 = arith.mulf %1455, %494 : vector<8x128xf32>
    %1457 = arith.addf %1442, %1456 : vector<8x128xf32>
    %1458 = vector.broadcast %1444 : f32 to vector<8x128xf32>
    %1459 = arith.mulf %1458, %496 : vector<8x128xf32>
    %1460 = arith.addf %1457, %1459 : vector<8x128xf32>
    %1461 = vector.broadcast %1445 : f32 to vector<8x128xf32>
    %1462 = arith.mulf %1461, %802 : vector<8x128xf32>
    %1463 = arith.addf %1460, %1462 : vector<8x128xf32>
    %c87_194 = arith.constant 87 : index
    %1464 = memref.load %arg3[%c87_194] : memref<192xf32, #tpu.memory_space<smem>>
    %c88_195 = arith.constant 88 : index
    %1465 = memref.load %arg3[%c88_195] : memref<192xf32, #tpu.memory_space<smem>>
    %c89_196 = arith.constant 89 : index
    %1466 = memref.load %arg3[%c89_196] : memref<192xf32, #tpu.memory_space<smem>>
    %1467 = vector.broadcast %1464 : f32 to vector<8x128xf32>
    %1468 = arith.mulf %1467, %805 : vector<8x128xf32>
    %1469 = arith.addf %1454, %1468 : vector<8x128xf32>
    %1470 = vector.broadcast %1465 : f32 to vector<8x128xf32>
    %1471 = arith.mulf %1470, %586 : vector<8x128xf32>
    %1472 = arith.addf %1469, %1471 : vector<8x128xf32>
    %1473 = vector.broadcast %1466 : f32 to vector<8x128xf32>
    %1474 = arith.mulf %1473, %588 : vector<8x128xf32>
    %1475 = arith.addf %1472, %1474 : vector<8x128xf32>
    %1476 = vector.broadcast %1464 : f32 to vector<8x128xf32>
    %1477 = arith.mulf %1476, %586 : vector<8x128xf32>
    %1478 = arith.addf %1463, %1477 : vector<8x128xf32>
    %1479 = vector.broadcast %1465 : f32 to vector<8x128xf32>
    %1480 = arith.mulf %1479, %588 : vector<8x128xf32>
    %1481 = arith.addf %1478, %1480 : vector<8x128xf32>
    %1482 = vector.broadcast %1466 : f32 to vector<8x128xf32>
    %1483 = arith.mulf %1482, %808 : vector<8x128xf32>
    %1484 = arith.addf %1481, %1483 : vector<8x128xf32>
    %c90_197 = arith.constant 90 : index
    %1485 = memref.load %arg3[%c90_197] : memref<192xf32, #tpu.memory_space<smem>>
    %c91_198 = arith.constant 91 : index
    %1486 = memref.load %arg3[%c91_198] : memref<192xf32, #tpu.memory_space<smem>>
    %c92_199 = arith.constant 92 : index
    %1487 = memref.load %arg3[%c92_199] : memref<192xf32, #tpu.memory_space<smem>>
    %1488 = vector.broadcast %1485 : f32 to vector<8x128xf32>
    %1489 = arith.mulf %1488, %811 : vector<8x128xf32>
    %1490 = arith.addf %1475, %1489 : vector<8x128xf32>
    %1491 = vector.broadcast %1486 : f32 to vector<8x128xf32>
    %1492 = arith.mulf %1491, %678 : vector<8x128xf32>
    %1493 = arith.addf %1490, %1492 : vector<8x128xf32>
    %1494 = vector.broadcast %1487 : f32 to vector<8x128xf32>
    %1495 = arith.mulf %1494, %680 : vector<8x128xf32>
    %1496 = arith.addf %1493, %1495 : vector<8x128xf32>
    %1497 = vector.broadcast %1485 : f32 to vector<8x128xf32>
    %1498 = arith.mulf %1497, %678 : vector<8x128xf32>
    %1499 = arith.addf %1484, %1498 : vector<8x128xf32>
    %1500 = vector.broadcast %1486 : f32 to vector<8x128xf32>
    %1501 = arith.mulf %1500, %680 : vector<8x128xf32>
    %1502 = arith.addf %1499, %1501 : vector<8x128xf32>
    %1503 = vector.broadcast %1487 : f32 to vector<8x128xf32>
    %1504 = arith.mulf %1503, %814 : vector<8x128xf32>
    %1505 = arith.addf %1502, %1504 : vector<8x128xf32>
    %c93_200 = arith.constant 93 : index
    %1506 = memref.load %arg3[%c93_200] : memref<192xf32, #tpu.memory_space<smem>>
    %c94_201 = arith.constant 94 : index
    %1507 = memref.load %arg3[%c94_201] : memref<192xf32, #tpu.memory_space<smem>>
    %c95_202 = arith.constant 95 : index
    %1508 = memref.load %arg3[%c95_202] : memref<192xf32, #tpu.memory_space<smem>>
    %1509 = vector.broadcast %1506 : f32 to vector<8x128xf32>
    %1510 = arith.mulf %1509, %817 : vector<8x128xf32>
    %1511 = arith.addf %1496, %1510 : vector<8x128xf32>
    %1512 = vector.broadcast %1507 : f32 to vector<8x128xf32>
    %1513 = arith.mulf %1512, %770 : vector<8x128xf32>
    %1514 = arith.addf %1511, %1513 : vector<8x128xf32>
    %1515 = vector.broadcast %1508 : f32 to vector<8x128xf32>
    %1516 = arith.mulf %1515, %772 : vector<8x128xf32>
    %1517 = arith.addf %1514, %1516 : vector<8x128xf32>
    %1518 = vector.broadcast %1506 : f32 to vector<8x128xf32>
    %1519 = arith.mulf %1518, %770 : vector<8x128xf32>
    %1520 = arith.addf %1505, %1519 : vector<8x128xf32>
    %1521 = vector.broadcast %1507 : f32 to vector<8x128xf32>
    %1522 = arith.mulf %1521, %772 : vector<8x128xf32>
    %1523 = arith.addf %1520, %1522 : vector<8x128xf32>
    %1524 = vector.broadcast %1508 : f32 to vector<8x128xf32>
    %1525 = arith.mulf %1524, %820 : vector<8x128xf32>
    %1526 = arith.addf %1523, %1525 : vector<8x128xf32>
    %cst_203 = arith.constant 0.000000e+00 : f32
    %1527 = vector.broadcast %cst_203 : f32 to vector<8x128xf32>
    %1528 = arith.maximumf %1517, %1527 : vector<8x128xf32>
    %cst_204 = arith.constant 0.000000e+00 : f32
    %1529 = vector.broadcast %cst_204 : f32 to vector<8x128xf32>
    %1530 = arith.maximumf %1526, %1529 : vector<8x128xf32>
    %1531 = arith.maximumf %1528, %1530 : vector<8x128xf32>
    %c0_205 = arith.constant 0 : index
    %c384_206 = arith.constant 384 : index
    %1532 = vector.load %arg6[%c0_205, %c384_206] : memref<8x1024xf32, #tpu.memory_space<vmem>>, vector<8x128xf32>
    tpu.vector_store %arg6[%c0_205, %c384_206], %1531 {strides = array<i32>} : memref<8x1024xf32, #tpu.memory_space<vmem>>, vector<8x128xf32>,
    %c4_207 = arith.constant 4 : index
    %1533 = memref.load %arg4[%c4_207] : memref<8xf32, #tpu.memory_space<smem>>
    %1534 = vector.broadcast %1533 : f32 to vector<8x128xf32>
    %c4_208 = arith.constant 4 : index
    %1535 = memref.load %arg4[%c4_208] : memref<8xf32, #tpu.memory_space<smem>>
    %1536 = vector.broadcast %1535 : f32 to vector<8x128xf32>
    %c96 = arith.constant 96 : index
    %1537 = memref.load %arg3[%c96] : memref<192xf32, #tpu.memory_space<smem>>
    %c97 = arith.constant 97 : index
    %1538 = memref.load %arg3[%c97] : memref<192xf32, #tpu.memory_space<smem>>
    %c98 = arith.constant 98 : index
    %1539 = memref.load %arg3[%c98] : memref<192xf32, #tpu.memory_space<smem>>
    %1540 = vector.broadcast %1537 : f32 to vector<8x128xf32>
    %1541 = arith.mulf %1540, %775 : vector<8x128xf32>
    %1542 = arith.addf %1534, %1541 : vector<8x128xf32>
    %1543 = vector.broadcast %1538 : f32 to vector<8x128xf32>
    %1544 = arith.mulf %1543, %126 : vector<8x128xf32>
    %1545 = arith.addf %1542, %1544 : vector<8x128xf32>
    %1546 = vector.broadcast %1539 : f32 to vector<8x128xf32>
    %1547 = arith.mulf %1546, %128 : vector<8x128xf32>
    %1548 = arith.addf %1545, %1547 : vector<8x128xf32>
    %1549 = vector.broadcast %1537 : f32 to vector<8x128xf32>
    %1550 = arith.mulf %1549, %126 : vector<8x128xf32>
    %1551 = arith.addf %1536, %1550 : vector<8x128xf32>
    %1552 = vector.broadcast %1538 : f32 to vector<8x128xf32>
    %1553 = arith.mulf %1552, %128 : vector<8x128xf32>
    %1554 = arith.addf %1551, %1553 : vector<8x128xf32>
    %1555 = vector.broadcast %1539 : f32 to vector<8x128xf32>
    %1556 = arith.mulf %1555, %778 : vector<8x128xf32>
    %1557 = arith.addf %1554, %1556 : vector<8x128xf32>
    %c99 = arith.constant 99 : index
    %1558 = memref.load %arg3[%c99] : memref<192xf32, #tpu.memory_space<smem>>
    %c100 = arith.constant 100 : index
    %1559 = memref.load %arg3[%c100] : memref<192xf32, #tpu.memory_space<smem>>
    %c101 = arith.constant 101 : index
    %1560 = memref.load %arg3[%c101] : memref<192xf32, #tpu.memory_space<smem>>
    %1561 = vector.broadcast %1558 : f32 to vector<8x128xf32>
    %1562 = arith.mulf %1561, %781 : vector<8x128xf32>
    %1563 = arith.addf %1548, %1562 : vector<8x128xf32>
    %1564 = vector.broadcast %1559 : f32 to vector<8x128xf32>
    %1565 = arith.mulf %1564, %218 : vector<8x128xf32>
    %1566 = arith.addf %1563, %1565 : vector<8x128xf32>
    %1567 = vector.broadcast %1560 : f32 to vector<8x128xf32>
    %1568 = arith.mulf %1567, %220 : vector<8x128xf32>
    %1569 = arith.addf %1566, %1568 : vector<8x128xf32>
    %1570 = vector.broadcast %1558 : f32 to vector<8x128xf32>
    %1571 = arith.mulf %1570, %218 : vector<8x128xf32>
    %1572 = arith.addf %1557, %1571 : vector<8x128xf32>
    %1573 = vector.broadcast %1559 : f32 to vector<8x128xf32>
    %1574 = arith.mulf %1573, %220 : vector<8x128xf32>
    %1575 = arith.addf %1572, %1574 : vector<8x128xf32>
    %1576 = vector.broadcast %1560 : f32 to vector<8x128xf32>
    %1577 = arith.mulf %1576, %784 : vector<8x128xf32>
    %1578 = arith.addf %1575, %1577 : vector<8x128xf32>
    %c102 = arith.constant 102 : index
    %1579 = memref.load %arg3[%c102] : memref<192xf32, #tpu.memory_space<smem>>
    %c103 = arith.constant 103 : index
    %1580 = memref.load %arg3[%c103] : memref<192xf32, #tpu.memory_space<smem>>
    %c104 = arith.constant 104 : index
    %1581 = memref.load %arg3[%c104] : memref<192xf32, #tpu.memory_space<smem>>
    %1582 = vector.broadcast %1579 : f32 to vector<8x128xf32>
    %1583 = arith.mulf %1582, %787 : vector<8x128xf32>
    %1584 = arith.addf %1569, %1583 : vector<8x128xf32>
    %1585 = vector.broadcast %1580 : f32 to vector<8x128xf32>
    %1586 = arith.mulf %1585, %310 : vector<8x128xf32>
    %1587 = arith.addf %1584, %1586 : vector<8x128xf32>
    %1588 = vector.broadcast %1581 : f32 to vector<8x128xf32>
    %1589 = arith.mulf %1588, %312 : vector<8x128xf32>
    %1590 = arith.addf %1587, %1589 : vector<8x128xf32>
    %1591 = vector.broadcast %1579 : f32 to vector<8x128xf32>
    %1592 = arith.mulf %1591, %310 : vector<8x128xf32>
    %1593 = arith.addf %1578, %1592 : vector<8x128xf32>
    %1594 = vector.broadcast %1580 : f32 to vector<8x128xf32>
    %1595 = arith.mulf %1594, %312 : vector<8x128xf32>
    %1596 = arith.addf %1593, %1595 : vector<8x128xf32>
    %1597 = vector.broadcast %1581 : f32 to vector<8x128xf32>
    %1598 = arith.mulf %1597, %790 : vector<8x128xf32>
    %1599 = arith.addf %1596, %1598 : vector<8x128xf32>
    %c105 = arith.constant 105 : index
    %1600 = memref.load %arg3[%c105] : memref<192xf32, #tpu.memory_space<smem>>
    %c106 = arith.constant 106 : index
    %1601 = memref.load %arg3[%c106] : memref<192xf32, #tpu.memory_space<smem>>
    %c107 = arith.constant 107 : index
    %1602 = memref.load %arg3[%c107] : memref<192xf32, #tpu.memory_space<smem>>
    %1603 = vector.broadcast %1600 : f32 to vector<8x128xf32>
    %1604 = arith.mulf %1603, %793 : vector<8x128xf32>
    %1605 = arith.addf %1590, %1604 : vector<8x128xf32>
    %1606 = vector.broadcast %1601 : f32 to vector<8x128xf32>
    %1607 = arith.mulf %1606, %402 : vector<8x128xf32>
    %1608 = arith.addf %1605, %1607 : vector<8x128xf32>
    %1609 = vector.broadcast %1602 : f32 to vector<8x128xf32>
    %1610 = arith.mulf %1609, %404 : vector<8x128xf32>
    %1611 = arith.addf %1608, %1610 : vector<8x128xf32>
    %1612 = vector.broadcast %1600 : f32 to vector<8x128xf32>
    %1613 = arith.mulf %1612, %402 : vector<8x128xf32>
    %1614 = arith.addf %1599, %1613 : vector<8x128xf32>
    %1615 = vector.broadcast %1601 : f32 to vector<8x128xf32>
    %1616 = arith.mulf %1615, %404 : vector<8x128xf32>
    %1617 = arith.addf %1614, %1616 : vector<8x128xf32>
    %1618 = vector.broadcast %1602 : f32 to vector<8x128xf32>
    %1619 = arith.mulf %1618, %796 : vector<8x128xf32>
    %1620 = arith.addf %1617, %1619 : vector<8x128xf32>
    %c108 = arith.constant 108 : index
    %1621 = memref.load %arg3[%c108] : memref<192xf32, #tpu.memory_space<smem>>
    %c109 = arith.constant 109 : index
    %1622 = memref.load %arg3[%c109] : memref<192xf32, #tpu.memory_space<smem>>
    %c110 = arith.constant 110 : index
    %1623 = memref.load %arg3[%c110] : memref<192xf32, #tpu.memory_space<smem>>
    %1624 = vector.broadcast %1621 : f32 to vector<8x128xf32>
    %1625 = arith.mulf %1624, %799 : vector<8x128xf32>
    %1626 = arith.addf %1611, %1625 : vector<8x128xf32>
    %1627 = vector.broadcast %1622 : f32 to vector<8x128xf32>
    %1628 = arith.mulf %1627, %494 : vector<8x128xf32>
    %1629 = arith.addf %1626, %1628 : vector<8x128xf32>
    %1630 = vector.broadcast %1623 : f32 to vector<8x128xf32>
    %1631 = arith.mulf %1630, %496 : vector<8x128xf32>
    %1632 = arith.addf %1629, %1631 : vector<8x128xf32>
    %1633 = vector.broadcast %1621 : f32 to vector<8x128xf32>
    %1634 = arith.mulf %1633, %494 : vector<8x128xf32>
    %1635 = arith.addf %1620, %1634 : vector<8x128xf32>
    %1636 = vector.broadcast %1622 : f32 to vector<8x128xf32>
    %1637 = arith.mulf %1636, %496 : vector<8x128xf32>
    %1638 = arith.addf %1635, %1637 : vector<8x128xf32>
    %1639 = vector.broadcast %1623 : f32 to vector<8x128xf32>
    %1640 = arith.mulf %1639, %802 : vector<8x128xf32>
    %1641 = arith.addf %1638, %1640 : vector<8x128xf32>
    %c111 = arith.constant 111 : index
    %1642 = memref.load %arg3[%c111] : memref<192xf32, #tpu.memory_space<smem>>
    %c112 = arith.constant 112 : index
    %1643 = memref.load %arg3[%c112] : memref<192xf32, #tpu.memory_space<smem>>
    %c113 = arith.constant 113 : index
    %1644 = memref.load %arg3[%c113] : memref<192xf32, #tpu.memory_space<smem>>
    %1645 = vector.broadcast %1642 : f32 to vector<8x128xf32>
    %1646 = arith.mulf %1645, %805 : vector<8x128xf32>
    %1647 = arith.addf %1632, %1646 : vector<8x128xf32>
    %1648 = vector.broadcast %1643 : f32 to vector<8x128xf32>
    %1649 = arith.mulf %1648, %586 : vector<8x128xf32>
    %1650 = arith.addf %1647, %1649 : vector<8x128xf32>
    %1651 = vector.broadcast %1644 : f32 to vector<8x128xf32>
    %1652 = arith.mulf %1651, %588 : vector<8x128xf32>
    %1653 = arith.addf %1650, %1652 : vector<8x128xf32>
    %1654 = vector.broadcast %1642 : f32 to vector<8x128xf32>
    %1655 = arith.mulf %1654, %586 : vector<8x128xf32>
    %1656 = arith.addf %1641, %1655 : vector<8x128xf32>
    %1657 = vector.broadcast %1643 : f32 to vector<8x128xf32>
    %1658 = arith.mulf %1657, %588 : vector<8x128xf32>
    %1659 = arith.addf %1656, %1658 : vector<8x128xf32>
    %1660 = vector.broadcast %1644 : f32 to vector<8x128xf32>
    %1661 = arith.mulf %1660, %808 : vector<8x128xf32>
    %1662 = arith.addf %1659, %1661 : vector<8x128xf32>
    %c114 = arith.constant 114 : index
    %1663 = memref.load %arg3[%c114] : memref<192xf32, #tpu.memory_space<smem>>
    %c115 = arith.constant 115 : index
    %1664 = memref.load %arg3[%c115] : memref<192xf32, #tpu.memory_space<smem>>
    %c116 = arith.constant 116 : index
    %1665 = memref.load %arg3[%c116] : memref<192xf32, #tpu.memory_space<smem>>
    %1666 = vector.broadcast %1663 : f32 to vector<8x128xf32>
    %1667 = arith.mulf %1666, %811 : vector<8x128xf32>
    %1668 = arith.addf %1653, %1667 : vector<8x128xf32>
    %1669 = vector.broadcast %1664 : f32 to vector<8x128xf32>
    %1670 = arith.mulf %1669, %678 : vector<8x128xf32>
    %1671 = arith.addf %1668, %1670 : vector<8x128xf32>
    %1672 = vector.broadcast %1665 : f32 to vector<8x128xf32>
    %1673 = arith.mulf %1672, %680 : vector<8x128xf32>
    %1674 = arith.addf %1671, %1673 : vector<8x128xf32>
    %1675 = vector.broadcast %1663 : f32 to vector<8x128xf32>
    %1676 = arith.mulf %1675, %678 : vector<8x128xf32>
    %1677 = arith.addf %1662, %1676 : vector<8x128xf32>
    %1678 = vector.broadcast %1664 : f32 to vector<8x128xf32>
    %1679 = arith.mulf %1678, %680 : vector<8x128xf32>
    %1680 = arith.addf %1677, %1679 : vector<8x128xf32>
    %1681 = vector.broadcast %1665 : f32 to vector<8x128xf32>
    %1682 = arith.mulf %1681, %814 : vector<8x128xf32>
    %1683 = arith.addf %1680, %1682 : vector<8x128xf32>
    %c117 = arith.constant 117 : index
    %1684 = memref.load %arg3[%c117] : memref<192xf32, #tpu.memory_space<smem>>
    %c118 = arith.constant 118 : index
    %1685 = memref.load %arg3[%c118] : memref<192xf32, #tpu.memory_space<smem>>
    %c119 = arith.constant 119 : index
    %1686 = memref.load %arg3[%c119] : memref<192xf32, #tpu.memory_space<smem>>
    %1687 = vector.broadcast %1684 : f32 to vector<8x128xf32>
    %1688 = arith.mulf %1687, %817 : vector<8x128xf32>
    %1689 = arith.addf %1674, %1688 : vector<8x128xf32>
    %1690 = vector.broadcast %1685 : f32 to vector<8x128xf32>
    %1691 = arith.mulf %1690, %770 : vector<8x128xf32>
    %1692 = arith.addf %1689, %1691 : vector<8x128xf32>
    %1693 = vector.broadcast %1686 : f32 to vector<8x128xf32>
    %1694 = arith.mulf %1693, %772 : vector<8x128xf32>
    %1695 = arith.addf %1692, %1694 : vector<8x128xf32>
    %1696 = vector.broadcast %1684 : f32 to vector<8x128xf32>
    %1697 = arith.mulf %1696, %770 : vector<8x128xf32>
    %1698 = arith.addf %1683, %1697 : vector<8x128xf32>
    %1699 = vector.broadcast %1685 : f32 to vector<8x128xf32>
    %1700 = arith.mulf %1699, %772 : vector<8x128xf32>
    %1701 = arith.addf %1698, %1700 : vector<8x128xf32>
    %1702 = vector.broadcast %1686 : f32 to vector<8x128xf32>
    %1703 = arith.mulf %1702, %820 : vector<8x128xf32>
    %1704 = arith.addf %1701, %1703 : vector<8x128xf32>
    %cst_209 = arith.constant 0.000000e+00 : f32
    %1705 = vector.broadcast %cst_209 : f32 to vector<8x128xf32>
    %1706 = arith.maximumf %1695, %1705 : vector<8x128xf32>
    %cst_210 = arith.constant 0.000000e+00 : f32
    %1707 = vector.broadcast %cst_210 : f32 to vector<8x128xf32>
    %1708 = arith.maximumf %1704, %1707 : vector<8x128xf32>
    %1709 = arith.maximumf %1706, %1708 : vector<8x128xf32>
    %c0_211 = arith.constant 0 : index
    %c512_212 = arith.constant 512 : index
    %1710 = vector.load %arg6[%c0_211, %c512_212] : memref<8x1024xf32, #tpu.memory_space<vmem>>, vector<8x128xf32>
    tpu.vector_store %arg6[%c0_211, %c512_212], %1709 {strides = array<i32>} : memref<8x1024xf32, #tpu.memory_space<vmem>>, vector<8x128xf32>,
    %c5_213 = arith.constant 5 : index
    %1711 = memref.load %arg4[%c5_213] : memref<8xf32, #tpu.memory_space<smem>>
    %1712 = vector.broadcast %1711 : f32 to vector<8x128xf32>
    %c5_214 = arith.constant 5 : index
    %1713 = memref.load %arg4[%c5_214] : memref<8xf32, #tpu.memory_space<smem>>
    %1714 = vector.broadcast %1713 : f32 to vector<8x128xf32>
    %c120 = arith.constant 120 : index
    %1715 = memref.load %arg3[%c120] : memref<192xf32, #tpu.memory_space<smem>>
    %c121 = arith.constant 121 : index
    %1716 = memref.load %arg3[%c121] : memref<192xf32, #tpu.memory_space<smem>>
    %c122 = arith.constant 122 : index
    %1717 = memref.load %arg3[%c122] : memref<192xf32, #tpu.memory_space<smem>>
    %1718 = vector.broadcast %1715 : f32 to vector<8x128xf32>
    %1719 = arith.mulf %1718, %775 : vector<8x128xf32>
    %1720 = arith.addf %1712, %1719 : vector<8x128xf32>
    %1721 = vector.broadcast %1716 : f32 to vector<8x128xf32>
    %1722 = arith.mulf %1721, %126 : vector<8x128xf32>
    %1723 = arith.addf %1720, %1722 : vector<8x128xf32>
    %1724 = vector.broadcast %1717 : f32 to vector<8x128xf32>
    %1725 = arith.mulf %1724, %128 : vector<8x128xf32>
    %1726 = arith.addf %1723, %1725 : vector<8x128xf32>
    %1727 = vector.broadcast %1715 : f32 to vector<8x128xf32>
    %1728 = arith.mulf %1727, %126 : vector<8x128xf32>
    %1729 = arith.addf %1714, %1728 : vector<8x128xf32>
    %1730 = vector.broadcast %1716 : f32 to vector<8x128xf32>
    %1731 = arith.mulf %1730, %128 : vector<8x128xf32>
    %1732 = arith.addf %1729, %1731 : vector<8x128xf32>
    %1733 = vector.broadcast %1717 : f32 to vector<8x128xf32>
    %1734 = arith.mulf %1733, %778 : vector<8x128xf32>
    %1735 = arith.addf %1732, %1734 : vector<8x128xf32>
    %c123 = arith.constant 123 : index
    %1736 = memref.load %arg3[%c123] : memref<192xf32, #tpu.memory_space<smem>>
    %c124 = arith.constant 124 : index
    %1737 = memref.load %arg3[%c124] : memref<192xf32, #tpu.memory_space<smem>>
    %c125 = arith.constant 125 : index
    %1738 = memref.load %arg3[%c125] : memref<192xf32, #tpu.memory_space<smem>>
    %1739 = vector.broadcast %1736 : f32 to vector<8x128xf32>
    %1740 = arith.mulf %1739, %781 : vector<8x128xf32>
    %1741 = arith.addf %1726, %1740 : vector<8x128xf32>
    %1742 = vector.broadcast %1737 : f32 to vector<8x128xf32>
    %1743 = arith.mulf %1742, %218 : vector<8x128xf32>
    %1744 = arith.addf %1741, %1743 : vector<8x128xf32>
    %1745 = vector.broadcast %1738 : f32 to vector<8x128xf32>
    %1746 = arith.mulf %1745, %220 : vector<8x128xf32>
    %1747 = arith.addf %1744, %1746 : vector<8x128xf32>
    %1748 = vector.broadcast %1736 : f32 to vector<8x128xf32>
    %1749 = arith.mulf %1748, %218 : vector<8x128xf32>
    %1750 = arith.addf %1735, %1749 : vector<8x128xf32>
    %1751 = vector.broadcast %1737 : f32 to vector<8x128xf32>
    %1752 = arith.mulf %1751, %220 : vector<8x128xf32>
    %1753 = arith.addf %1750, %1752 : vector<8x128xf32>
    %1754 = vector.broadcast %1738 : f32 to vector<8x128xf32>
    %1755 = arith.mulf %1754, %784 : vector<8x128xf32>
    %1756 = arith.addf %1753, %1755 : vector<8x128xf32>
    %c126 = arith.constant 126 : index
    %1757 = memref.load %arg3[%c126] : memref<192xf32, #tpu.memory_space<smem>>
    %c127 = arith.constant 127 : index
    %1758 = memref.load %arg3[%c127] : memref<192xf32, #tpu.memory_space<smem>>
    %c128_215 = arith.constant 128 : index
    %1759 = memref.load %arg3[%c128_215] : memref<192xf32, #tpu.memory_space<smem>>
    %1760 = vector.broadcast %1757 : f32 to vector<8x128xf32>
    %1761 = arith.mulf %1760, %787 : vector<8x128xf32>
    %1762 = arith.addf %1747, %1761 : vector<8x128xf32>
    %1763 = vector.broadcast %1758 : f32 to vector<8x128xf32>
    %1764 = arith.mulf %1763, %310 : vector<8x128xf32>
    %1765 = arith.addf %1762, %1764 : vector<8x128xf32>
    %1766 = vector.broadcast %1759 : f32 to vector<8x128xf32>
    %1767 = arith.mulf %1766, %312 : vector<8x128xf32>
    %1768 = arith.addf %1765, %1767 : vector<8x128xf32>
    %1769 = vector.broadcast %1757 : f32 to vector<8x128xf32>
    %1770 = arith.mulf %1769, %310 : vector<8x128xf32>
    %1771 = arith.addf %1756, %1770 : vector<8x128xf32>
    %1772 = vector.broadcast %1758 : f32 to vector<8x128xf32>
    %1773 = arith.mulf %1772, %312 : vector<8x128xf32>
    %1774 = arith.addf %1771, %1773 : vector<8x128xf32>
    %1775 = vector.broadcast %1759 : f32 to vector<8x128xf32>
    %1776 = arith.mulf %1775, %790 : vector<8x128xf32>
    %1777 = arith.addf %1774, %1776 : vector<8x128xf32>
    %c129 = arith.constant 129 : index
    %1778 = memref.load %arg3[%c129] : memref<192xf32, #tpu.memory_space<smem>>
    %c130 = arith.constant 130 : index
    %1779 = memref.load %arg3[%c130] : memref<192xf32, #tpu.memory_space<smem>>
    %c131 = arith.constant 131 : index
    %1780 = memref.load %arg3[%c131] : memref<192xf32, #tpu.memory_space<smem>>
    %1781 = vector.broadcast %1778 : f32 to vector<8x128xf32>
    %1782 = arith.mulf %1781, %793 : vector<8x128xf32>
    %1783 = arith.addf %1768, %1782 : vector<8x128xf32>
    %1784 = vector.broadcast %1779 : f32 to vector<8x128xf32>
    %1785 = arith.mulf %1784, %402 : vector<8x128xf32>
    %1786 = arith.addf %1783, %1785 : vector<8x128xf32>
    %1787 = vector.broadcast %1780 : f32 to vector<8x128xf32>
    %1788 = arith.mulf %1787, %404 : vector<8x128xf32>
    %1789 = arith.addf %1786, %1788 : vector<8x128xf32>
    %1790 = vector.broadcast %1778 : f32 to vector<8x128xf32>
    %1791 = arith.mulf %1790, %402 : vector<8x128xf32>
    %1792 = arith.addf %1777, %1791 : vector<8x128xf32>
    %1793 = vector.broadcast %1779 : f32 to vector<8x128xf32>
    %1794 = arith.mulf %1793, %404 : vector<8x128xf32>
    %1795 = arith.addf %1792, %1794 : vector<8x128xf32>
    %1796 = vector.broadcast %1780 : f32 to vector<8x128xf32>
    %1797 = arith.mulf %1796, %796 : vector<8x128xf32>
    %1798 = arith.addf %1795, %1797 : vector<8x128xf32>
    %c132 = arith.constant 132 : index
    %1799 = memref.load %arg3[%c132] : memref<192xf32, #tpu.memory_space<smem>>
    %c133 = arith.constant 133 : index
    %1800 = memref.load %arg3[%c133] : memref<192xf32, #tpu.memory_space<smem>>
    %c134 = arith.constant 134 : index
    %1801 = memref.load %arg3[%c134] : memref<192xf32, #tpu.memory_space<smem>>
    %1802 = vector.broadcast %1799 : f32 to vector<8x128xf32>
    %1803 = arith.mulf %1802, %799 : vector<8x128xf32>
    %1804 = arith.addf %1789, %1803 : vector<8x128xf32>
    %1805 = vector.broadcast %1800 : f32 to vector<8x128xf32>
    %1806 = arith.mulf %1805, %494 : vector<8x128xf32>
    %1807 = arith.addf %1804, %1806 : vector<8x128xf32>
    %1808 = vector.broadcast %1801 : f32 to vector<8x128xf32>
    %1809 = arith.mulf %1808, %496 : vector<8x128xf32>
    %1810 = arith.addf %1807, %1809 : vector<8x128xf32>
    %1811 = vector.broadcast %1799 : f32 to vector<8x128xf32>
    %1812 = arith.mulf %1811, %494 : vector<8x128xf32>
    %1813 = arith.addf %1798, %1812 : vector<8x128xf32>
    %1814 = vector.broadcast %1800 : f32 to vector<8x128xf32>
    %1815 = arith.mulf %1814, %496 : vector<8x128xf32>
    %1816 = arith.addf %1813, %1815 : vector<8x128xf32>
    %1817 = vector.broadcast %1801 : f32 to vector<8x128xf32>
    %1818 = arith.mulf %1817, %802 : vector<8x128xf32>
    %1819 = arith.addf %1816, %1818 : vector<8x128xf32>
    %c135 = arith.constant 135 : index
    %1820 = memref.load %arg3[%c135] : memref<192xf32, #tpu.memory_space<smem>>
    %c136 = arith.constant 136 : index
    %1821 = memref.load %arg3[%c136] : memref<192xf32, #tpu.memory_space<smem>>
    %c137 = arith.constant 137 : index
    %1822 = memref.load %arg3[%c137] : memref<192xf32, #tpu.memory_space<smem>>
    %1823 = vector.broadcast %1820 : f32 to vector<8x128xf32>
    %1824 = arith.mulf %1823, %805 : vector<8x128xf32>
    %1825 = arith.addf %1810, %1824 : vector<8x128xf32>
    %1826 = vector.broadcast %1821 : f32 to vector<8x128xf32>
    %1827 = arith.mulf %1826, %586 : vector<8x128xf32>
    %1828 = arith.addf %1825, %1827 : vector<8x128xf32>
    %1829 = vector.broadcast %1822 : f32 to vector<8x128xf32>
    %1830 = arith.mulf %1829, %588 : vector<8x128xf32>
    %1831 = arith.addf %1828, %1830 : vector<8x128xf32>
    %1832 = vector.broadcast %1820 : f32 to vector<8x128xf32>
    %1833 = arith.mulf %1832, %586 : vector<8x128xf32>
    %1834 = arith.addf %1819, %1833 : vector<8x128xf32>
    %1835 = vector.broadcast %1821 : f32 to vector<8x128xf32>
    %1836 = arith.mulf %1835, %588 : vector<8x128xf32>
    %1837 = arith.addf %1834, %1836 : vector<8x128xf32>
    %1838 = vector.broadcast %1822 : f32 to vector<8x128xf32>
    %1839 = arith.mulf %1838, %808 : vector<8x128xf32>
    %1840 = arith.addf %1837, %1839 : vector<8x128xf32>
    %c138 = arith.constant 138 : index
    %1841 = memref.load %arg3[%c138] : memref<192xf32, #tpu.memory_space<smem>>
    %c139 = arith.constant 139 : index
    %1842 = memref.load %arg3[%c139] : memref<192xf32, #tpu.memory_space<smem>>
    %c140 = arith.constant 140 : index
    %1843 = memref.load %arg3[%c140] : memref<192xf32, #tpu.memory_space<smem>>
    %1844 = vector.broadcast %1841 : f32 to vector<8x128xf32>
    %1845 = arith.mulf %1844, %811 : vector<8x128xf32>
    %1846 = arith.addf %1831, %1845 : vector<8x128xf32>
    %1847 = vector.broadcast %1842 : f32 to vector<8x128xf32>
    %1848 = arith.mulf %1847, %678 : vector<8x128xf32>
    %1849 = arith.addf %1846, %1848 : vector<8x128xf32>
    %1850 = vector.broadcast %1843 : f32 to vector<8x128xf32>
    %1851 = arith.mulf %1850, %680 : vector<8x128xf32>
    %1852 = arith.addf %1849, %1851 : vector<8x128xf32>
    %1853 = vector.broadcast %1841 : f32 to vector<8x128xf32>
    %1854 = arith.mulf %1853, %678 : vector<8x128xf32>
    %1855 = arith.addf %1840, %1854 : vector<8x128xf32>
    %1856 = vector.broadcast %1842 : f32 to vector<8x128xf32>
    %1857 = arith.mulf %1856, %680 : vector<8x128xf32>
    %1858 = arith.addf %1855, %1857 : vector<8x128xf32>
    %1859 = vector.broadcast %1843 : f32 to vector<8x128xf32>
    %1860 = arith.mulf %1859, %814 : vector<8x128xf32>
    %1861 = arith.addf %1858, %1860 : vector<8x128xf32>
    %c141 = arith.constant 141 : index
    %1862 = memref.load %arg3[%c141] : memref<192xf32, #tpu.memory_space<smem>>
    %c142 = arith.constant 142 : index
    %1863 = memref.load %arg3[%c142] : memref<192xf32, #tpu.memory_space<smem>>
    %c143 = arith.constant 143 : index
    %1864 = memref.load %arg3[%c143] : memref<192xf32, #tpu.memory_space<smem>>
    %1865 = vector.broadcast %1862 : f32 to vector<8x128xf32>
    %1866 = arith.mulf %1865, %817 : vector<8x128xf32>
    %1867 = arith.addf %1852, %1866 : vector<8x128xf32>
    %1868 = vector.broadcast %1863 : f32 to vector<8x128xf32>
    %1869 = arith.mulf %1868, %770 : vector<8x128xf32>
    %1870 = arith.addf %1867, %1869 : vector<8x128xf32>
    %1871 = vector.broadcast %1864 : f32 to vector<8x128xf32>
    %1872 = arith.mulf %1871, %772 : vector<8x128xf32>
    %1873 = arith.addf %1870, %1872 : vector<8x128xf32>
    %1874 = vector.broadcast %1862 : f32 to vector<8x128xf32>
    %1875 = arith.mulf %1874, %770 : vector<8x128xf32>
    %1876 = arith.addf %1861, %1875 : vector<8x128xf32>
    %1877 = vector.broadcast %1863 : f32 to vector<8x128xf32>
    %1878 = arith.mulf %1877, %772 : vector<8x128xf32>
    %1879 = arith.addf %1876, %1878 : vector<8x128xf32>
    %1880 = vector.broadcast %1864 : f32 to vector<8x128xf32>
    %1881 = arith.mulf %1880, %820 : vector<8x128xf32>
    %1882 = arith.addf %1879, %1881 : vector<8x128xf32>
    %cst_216 = arith.constant 0.000000e+00 : f32
    %1883 = vector.broadcast %cst_216 : f32 to vector<8x128xf32>
    %1884 = arith.maximumf %1873, %1883 : vector<8x128xf32>
    %cst_217 = arith.constant 0.000000e+00 : f32
    %1885 = vector.broadcast %cst_217 : f32 to vector<8x128xf32>
    %1886 = arith.maximumf %1882, %1885 : vector<8x128xf32>
    %1887 = arith.maximumf %1884, %1886 : vector<8x128xf32>
    %c0_218 = arith.constant 0 : index
    %c640_219 = arith.constant 640 : index
    %1888 = vector.load %arg6[%c0_218, %c640_219] : memref<8x1024xf32, #tpu.memory_space<vmem>>, vector<8x128xf32>
    tpu.vector_store %arg6[%c0_218, %c640_219], %1887 {strides = array<i32>} : memref<8x1024xf32, #tpu.memory_space<vmem>>, vector<8x128xf32>,
    %c6_220 = arith.constant 6 : index
    %1889 = memref.load %arg4[%c6_220] : memref<8xf32, #tpu.memory_space<smem>>
    %1890 = vector.broadcast %1889 : f32 to vector<8x128xf32>
    %c6_221 = arith.constant 6 : index
    %1891 = memref.load %arg4[%c6_221] : memref<8xf32, #tpu.memory_space<smem>>
    %1892 = vector.broadcast %1891 : f32 to vector<8x128xf32>
    %c144 = arith.constant 144 : index
    %1893 = memref.load %arg3[%c144] : memref<192xf32, #tpu.memory_space<smem>>
    %c145 = arith.constant 145 : index
    %1894 = memref.load %arg3[%c145] : memref<192xf32, #tpu.memory_space<smem>>
    %c146 = arith.constant 146 : index
    %1895 = memref.load %arg3[%c146] : memref<192xf32, #tpu.memory_space<smem>>
    %1896 = vector.broadcast %1893 : f32 to vector<8x128xf32>
    %1897 = arith.mulf %1896, %775 : vector<8x128xf32>
    %1898 = arith.addf %1890, %1897 : vector<8x128xf32>
    %1899 = vector.broadcast %1894 : f32 to vector<8x128xf32>
    %1900 = arith.mulf %1899, %126 : vector<8x128xf32>
    %1901 = arith.addf %1898, %1900 : vector<8x128xf32>
    %1902 = vector.broadcast %1895 : f32 to vector<8x128xf32>
    %1903 = arith.mulf %1902, %128 : vector<8x128xf32>
    %1904 = arith.addf %1901, %1903 : vector<8x128xf32>
    %1905 = vector.broadcast %1893 : f32 to vector<8x128xf32>
    %1906 = arith.mulf %1905, %126 : vector<8x128xf32>
    %1907 = arith.addf %1892, %1906 : vector<8x128xf32>
    %1908 = vector.broadcast %1894 : f32 to vector<8x128xf32>
    %1909 = arith.mulf %1908, %128 : vector<8x128xf32>
    %1910 = arith.addf %1907, %1909 : vector<8x128xf32>
    %1911 = vector.broadcast %1895 : f32 to vector<8x128xf32>
    %1912 = arith.mulf %1911, %778 : vector<8x128xf32>
    %1913 = arith.addf %1910, %1912 : vector<8x128xf32>
    %c147 = arith.constant 147 : index
    %1914 = memref.load %arg3[%c147] : memref<192xf32, #tpu.memory_space<smem>>
    %c148 = arith.constant 148 : index
    %1915 = memref.load %arg3[%c148] : memref<192xf32, #tpu.memory_space<smem>>
    %c149 = arith.constant 149 : index
    %1916 = memref.load %arg3[%c149] : memref<192xf32, #tpu.memory_space<smem>>
    %1917 = vector.broadcast %1914 : f32 to vector<8x128xf32>
    %1918 = arith.mulf %1917, %781 : vector<8x128xf32>
    %1919 = arith.addf %1904, %1918 : vector<8x128xf32>
    %1920 = vector.broadcast %1915 : f32 to vector<8x128xf32>
    %1921 = arith.mulf %1920, %218 : vector<8x128xf32>
    %1922 = arith.addf %1919, %1921 : vector<8x128xf32>
    %1923 = vector.broadcast %1916 : f32 to vector<8x128xf32>
    %1924 = arith.mulf %1923, %220 : vector<8x128xf32>
    %1925 = arith.addf %1922, %1924 : vector<8x128xf32>
    %1926 = vector.broadcast %1914 : f32 to vector<8x128xf32>
    %1927 = arith.mulf %1926, %218 : vector<8x128xf32>
    %1928 = arith.addf %1913, %1927 : vector<8x128xf32>
    %1929 = vector.broadcast %1915 : f32 to vector<8x128xf32>
    %1930 = arith.mulf %1929, %220 : vector<8x128xf32>
    %1931 = arith.addf %1928, %1930 : vector<8x128xf32>
    %1932 = vector.broadcast %1916 : f32 to vector<8x128xf32>
    %1933 = arith.mulf %1932, %784 : vector<8x128xf32>
    %1934 = arith.addf %1931, %1933 : vector<8x128xf32>
    %c150 = arith.constant 150 : index
    %1935 = memref.load %arg3[%c150] : memref<192xf32, #tpu.memory_space<smem>>
    %c151 = arith.constant 151 : index
    %1936 = memref.load %arg3[%c151] : memref<192xf32, #tpu.memory_space<smem>>
    %c152 = arith.constant 152 : index
    %1937 = memref.load %arg3[%c152] : memref<192xf32, #tpu.memory_space<smem>>
    %1938 = vector.broadcast %1935 : f32 to vector<8x128xf32>
    %1939 = arith.mulf %1938, %787 : vector<8x128xf32>
    %1940 = arith.addf %1925, %1939 : vector<8x128xf32>
    %1941 = vector.broadcast %1936 : f32 to vector<8x128xf32>
    %1942 = arith.mulf %1941, %310 : vector<8x128xf32>
    %1943 = arith.addf %1940, %1942 : vector<8x128xf32>
    %1944 = vector.broadcast %1937 : f32 to vector<8x128xf32>
    %1945 = arith.mulf %1944, %312 : vector<8x128xf32>
    %1946 = arith.addf %1943, %1945 : vector<8x128xf32>
    %1947 = vector.broadcast %1935 : f32 to vector<8x128xf32>
    %1948 = arith.mulf %1947, %310 : vector<8x128xf32>
    %1949 = arith.addf %1934, %1948 : vector<8x128xf32>
    %1950 = vector.broadcast %1936 : f32 to vector<8x128xf32>
    %1951 = arith.mulf %1950, %312 : vector<8x128xf32>
    %1952 = arith.addf %1949, %1951 : vector<8x128xf32>
    %1953 = vector.broadcast %1937 : f32 to vector<8x128xf32>
    %1954 = arith.mulf %1953, %790 : vector<8x128xf32>
    %1955 = arith.addf %1952, %1954 : vector<8x128xf32>
    %c153 = arith.constant 153 : index
    %1956 = memref.load %arg3[%c153] : memref<192xf32, #tpu.memory_space<smem>>
    %c154 = arith.constant 154 : index
    %1957 = memref.load %arg3[%c154] : memref<192xf32, #tpu.memory_space<smem>>
    %c155 = arith.constant 155 : index
    %1958 = memref.load %arg3[%c155] : memref<192xf32, #tpu.memory_space<smem>>
    %1959 = vector.broadcast %1956 : f32 to vector<8x128xf32>
    %1960 = arith.mulf %1959, %793 : vector<8x128xf32>
    %1961 = arith.addf %1946, %1960 : vector<8x128xf32>
    %1962 = vector.broadcast %1957 : f32 to vector<8x128xf32>
    %1963 = arith.mulf %1962, %402 : vector<8x128xf32>
    %1964 = arith.addf %1961, %1963 : vector<8x128xf32>
    %1965 = vector.broadcast %1958 : f32 to vector<8x128xf32>
    %1966 = arith.mulf %1965, %404 : vector<8x128xf32>
    %1967 = arith.addf %1964, %1966 : vector<8x128xf32>
    %1968 = vector.broadcast %1956 : f32 to vector<8x128xf32>
    %1969 = arith.mulf %1968, %402 : vector<8x128xf32>
    %1970 = arith.addf %1955, %1969 : vector<8x128xf32>
    %1971 = vector.broadcast %1957 : f32 to vector<8x128xf32>
    %1972 = arith.mulf %1971, %404 : vector<8x128xf32>
    %1973 = arith.addf %1970, %1972 : vector<8x128xf32>
    %1974 = vector.broadcast %1958 : f32 to vector<8x128xf32>
    %1975 = arith.mulf %1974, %796 : vector<8x128xf32>
    %1976 = arith.addf %1973, %1975 : vector<8x128xf32>
    %c156 = arith.constant 156 : index
    %1977 = memref.load %arg3[%c156] : memref<192xf32, #tpu.memory_space<smem>>
    %c157 = arith.constant 157 : index
    %1978 = memref.load %arg3[%c157] : memref<192xf32, #tpu.memory_space<smem>>
    %c158 = arith.constant 158 : index
    %1979 = memref.load %arg3[%c158] : memref<192xf32, #tpu.memory_space<smem>>
    %1980 = vector.broadcast %1977 : f32 to vector<8x128xf32>
    %1981 = arith.mulf %1980, %799 : vector<8x128xf32>
    %1982 = arith.addf %1967, %1981 : vector<8x128xf32>
    %1983 = vector.broadcast %1978 : f32 to vector<8x128xf32>
    %1984 = arith.mulf %1983, %494 : vector<8x128xf32>
    %1985 = arith.addf %1982, %1984 : vector<8x128xf32>
    %1986 = vector.broadcast %1979 : f32 to vector<8x128xf32>
    %1987 = arith.mulf %1986, %496 : vector<8x128xf32>
    %1988 = arith.addf %1985, %1987 : vector<8x128xf32>
    %1989 = vector.broadcast %1977 : f32 to vector<8x128xf32>
    %1990 = arith.mulf %1989, %494 : vector<8x128xf32>
    %1991 = arith.addf %1976, %1990 : vector<8x128xf32>
    %1992 = vector.broadcast %1978 : f32 to vector<8x128xf32>
    %1993 = arith.mulf %1992, %496 : vector<8x128xf32>
    %1994 = arith.addf %1991, %1993 : vector<8x128xf32>
    %1995 = vector.broadcast %1979 : f32 to vector<8x128xf32>
    %1996 = arith.mulf %1995, %802 : vector<8x128xf32>
    %1997 = arith.addf %1994, %1996 : vector<8x128xf32>
    %c159 = arith.constant 159 : index
    %1998 = memref.load %arg3[%c159] : memref<192xf32, #tpu.memory_space<smem>>
    %c160 = arith.constant 160 : index
    %1999 = memref.load %arg3[%c160] : memref<192xf32, #tpu.memory_space<smem>>
    %c161 = arith.constant 161 : index
    %2000 = memref.load %arg3[%c161] : memref<192xf32, #tpu.memory_space<smem>>
    %2001 = vector.broadcast %1998 : f32 to vector<8x128xf32>
    %2002 = arith.mulf %2001, %805 : vector<8x128xf32>
    %2003 = arith.addf %1988, %2002 : vector<8x128xf32>
    %2004 = vector.broadcast %1999 : f32 to vector<8x128xf32>
    %2005 = arith.mulf %2004, %586 : vector<8x128xf32>
    %2006 = arith.addf %2003, %2005 : vector<8x128xf32>
    %2007 = vector.broadcast %2000 : f32 to vector<8x128xf32>
    %2008 = arith.mulf %2007, %588 : vector<8x128xf32>
    %2009 = arith.addf %2006, %2008 : vector<8x128xf32>
    %2010 = vector.broadcast %1998 : f32 to vector<8x128xf32>
    %2011 = arith.mulf %2010, %586 : vector<8x128xf32>
    %2012 = arith.addf %1997, %2011 : vector<8x128xf32>
    %2013 = vector.broadcast %1999 : f32 to vector<8x128xf32>
    %2014 = arith.mulf %2013, %588 : vector<8x128xf32>
    %2015 = arith.addf %2012, %2014 : vector<8x128xf32>
    %2016 = vector.broadcast %2000 : f32 to vector<8x128xf32>
    %2017 = arith.mulf %2016, %808 : vector<8x128xf32>
    %2018 = arith.addf %2015, %2017 : vector<8x128xf32>
    %c162 = arith.constant 162 : index
    %2019 = memref.load %arg3[%c162] : memref<192xf32, #tpu.memory_space<smem>>
    %c163 = arith.constant 163 : index
    %2020 = memref.load %arg3[%c163] : memref<192xf32, #tpu.memory_space<smem>>
    %c164 = arith.constant 164 : index
    %2021 = memref.load %arg3[%c164] : memref<192xf32, #tpu.memory_space<smem>>
    %2022 = vector.broadcast %2019 : f32 to vector<8x128xf32>
    %2023 = arith.mulf %2022, %811 : vector<8x128xf32>
    %2024 = arith.addf %2009, %2023 : vector<8x128xf32>
    %2025 = vector.broadcast %2020 : f32 to vector<8x128xf32>
    %2026 = arith.mulf %2025, %678 : vector<8x128xf32>
    %2027 = arith.addf %2024, %2026 : vector<8x128xf32>
    %2028 = vector.broadcast %2021 : f32 to vector<8x128xf32>
    %2029 = arith.mulf %2028, %680 : vector<8x128xf32>
    %2030 = arith.addf %2027, %2029 : vector<8x128xf32>
    %2031 = vector.broadcast %2019 : f32 to vector<8x128xf32>
    %2032 = arith.mulf %2031, %678 : vector<8x128xf32>
    %2033 = arith.addf %2018, %2032 : vector<8x128xf32>
    %2034 = vector.broadcast %2020 : f32 to vector<8x128xf32>
    %2035 = arith.mulf %2034, %680 : vector<8x128xf32>
    %2036 = arith.addf %2033, %2035 : vector<8x128xf32>
    %2037 = vector.broadcast %2021 : f32 to vector<8x128xf32>
    %2038 = arith.mulf %2037, %814 : vector<8x128xf32>
    %2039 = arith.addf %2036, %2038 : vector<8x128xf32>
    %c165 = arith.constant 165 : index
    %2040 = memref.load %arg3[%c165] : memref<192xf32, #tpu.memory_space<smem>>
    %c166 = arith.constant 166 : index
    %2041 = memref.load %arg3[%c166] : memref<192xf32, #tpu.memory_space<smem>>
    %c167 = arith.constant 167 : index
    %2042 = memref.load %arg3[%c167] : memref<192xf32, #tpu.memory_space<smem>>
    %2043 = vector.broadcast %2040 : f32 to vector<8x128xf32>
    %2044 = arith.mulf %2043, %817 : vector<8x128xf32>
    %2045 = arith.addf %2030, %2044 : vector<8x128xf32>
    %2046 = vector.broadcast %2041 : f32 to vector<8x128xf32>
    %2047 = arith.mulf %2046, %770 : vector<8x128xf32>
    %2048 = arith.addf %2045, %2047 : vector<8x128xf32>
    %2049 = vector.broadcast %2042 : f32 to vector<8x128xf32>
    %2050 = arith.mulf %2049, %772 : vector<8x128xf32>
    %2051 = arith.addf %2048, %2050 : vector<8x128xf32>
    %2052 = vector.broadcast %2040 : f32 to vector<8x128xf32>
    %2053 = arith.mulf %2052, %770 : vector<8x128xf32>
    %2054 = arith.addf %2039, %2053 : vector<8x128xf32>
    %2055 = vector.broadcast %2041 : f32 to vector<8x128xf32>
    %2056 = arith.mulf %2055, %772 : vector<8x128xf32>
    %2057 = arith.addf %2054, %2056 : vector<8x128xf32>
    %2058 = vector.broadcast %2042 : f32 to vector<8x128xf32>
    %2059 = arith.mulf %2058, %820 : vector<8x128xf32>
    %2060 = arith.addf %2057, %2059 : vector<8x128xf32>
    %cst_222 = arith.constant 0.000000e+00 : f32
    %2061 = vector.broadcast %cst_222 : f32 to vector<8x128xf32>
    %2062 = arith.maximumf %2051, %2061 : vector<8x128xf32>
    %cst_223 = arith.constant 0.000000e+00 : f32
    %2063 = vector.broadcast %cst_223 : f32 to vector<8x128xf32>
    %2064 = arith.maximumf %2060, %2063 : vector<8x128xf32>
    %2065 = arith.maximumf %2062, %2064 : vector<8x128xf32>
    %c0_224 = arith.constant 0 : index
    %c768_225 = arith.constant 768 : index
    %2066 = vector.load %arg6[%c0_224, %c768_225] : memref<8x1024xf32, #tpu.memory_space<vmem>>, vector<8x128xf32>
    tpu.vector_store %arg6[%c0_224, %c768_225], %2065 {strides = array<i32>} : memref<8x1024xf32, #tpu.memory_space<vmem>>, vector<8x128xf32>,
    %c7_226 = arith.constant 7 : index
    %2067 = memref.load %arg4[%c7_226] : memref<8xf32, #tpu.memory_space<smem>>
    %2068 = vector.broadcast %2067 : f32 to vector<8x128xf32>
    %c7_227 = arith.constant 7 : index
    %2069 = memref.load %arg4[%c7_227] : memref<8xf32, #tpu.memory_space<smem>>
    %2070 = vector.broadcast %2069 : f32 to vector<8x128xf32>
    %c168 = arith.constant 168 : index
    %2071 = memref.load %arg3[%c168] : memref<192xf32, #tpu.memory_space<smem>>
    %c169 = arith.constant 169 : index
    %2072 = memref.load %arg3[%c169] : memref<192xf32, #tpu.memory_space<smem>>
    %c170 = arith.constant 170 : index
    %2073 = memref.load %arg3[%c170] : memref<192xf32, #tpu.memory_space<smem>>
    %2074 = vector.broadcast %2071 : f32 to vector<8x128xf32>
    %2075 = arith.mulf %2074, %775 : vector<8x128xf32>
    %2076 = arith.addf %2068, %2075 : vector<8x128xf32>
    %2077 = vector.broadcast %2072 : f32 to vector<8x128xf32>
    %2078 = arith.mulf %2077, %126 : vector<8x128xf32>
    %2079 = arith.addf %2076, %2078 : vector<8x128xf32>
    %2080 = vector.broadcast %2073 : f32 to vector<8x128xf32>
    %2081 = arith.mulf %2080, %128 : vector<8x128xf32>
    %2082 = arith.addf %2079, %2081 : vector<8x128xf32>
    %2083 = vector.broadcast %2071 : f32 to vector<8x128xf32>
    %2084 = arith.mulf %2083, %126 : vector<8x128xf32>
    %2085 = arith.addf %2070, %2084 : vector<8x128xf32>
    %2086 = vector.broadcast %2072 : f32 to vector<8x128xf32>
    %2087 = arith.mulf %2086, %128 : vector<8x128xf32>
    %2088 = arith.addf %2085, %2087 : vector<8x128xf32>
    %2089 = vector.broadcast %2073 : f32 to vector<8x128xf32>
    %2090 = arith.mulf %2089, %778 : vector<8x128xf32>
    %2091 = arith.addf %2088, %2090 : vector<8x128xf32>
    %c171 = arith.constant 171 : index
    %2092 = memref.load %arg3[%c171] : memref<192xf32, #tpu.memory_space<smem>>
    %c172 = arith.constant 172 : index
    %2093 = memref.load %arg3[%c172] : memref<192xf32, #tpu.memory_space<smem>>
    %c173 = arith.constant 173 : index
    %2094 = memref.load %arg3[%c173] : memref<192xf32, #tpu.memory_space<smem>>
    %2095 = vector.broadcast %2092 : f32 to vector<8x128xf32>
    %2096 = arith.mulf %2095, %781 : vector<8x128xf32>
    %2097 = arith.addf %2082, %2096 : vector<8x128xf32>
    %2098 = vector.broadcast %2093 : f32 to vector<8x128xf32>
    %2099 = arith.mulf %2098, %218 : vector<8x128xf32>
    %2100 = arith.addf %2097, %2099 : vector<8x128xf32>
    %2101 = vector.broadcast %2094 : f32 to vector<8x128xf32>
    %2102 = arith.mulf %2101, %220 : vector<8x128xf32>
    %2103 = arith.addf %2100, %2102 : vector<8x128xf32>
    %2104 = vector.broadcast %2092 : f32 to vector<8x128xf32>
    %2105 = arith.mulf %2104, %218 : vector<8x128xf32>
    %2106 = arith.addf %2091, %2105 : vector<8x128xf32>
    %2107 = vector.broadcast %2093 : f32 to vector<8x128xf32>
    %2108 = arith.mulf %2107, %220 : vector<8x128xf32>
    %2109 = arith.addf %2106, %2108 : vector<8x128xf32>
    %2110 = vector.broadcast %2094 : f32 to vector<8x128xf32>
    %2111 = arith.mulf %2110, %784 : vector<8x128xf32>
    %2112 = arith.addf %2109, %2111 : vector<8x128xf32>
    %c174 = arith.constant 174 : index
    %2113 = memref.load %arg3[%c174] : memref<192xf32, #tpu.memory_space<smem>>
    %c175 = arith.constant 175 : index
    %2114 = memref.load %arg3[%c175] : memref<192xf32, #tpu.memory_space<smem>>
    %c176 = arith.constant 176 : index
    %2115 = memref.load %arg3[%c176] : memref<192xf32, #tpu.memory_space<smem>>
    %2116 = vector.broadcast %2113 : f32 to vector<8x128xf32>
    %2117 = arith.mulf %2116, %787 : vector<8x128xf32>
    %2118 = arith.addf %2103, %2117 : vector<8x128xf32>
    %2119 = vector.broadcast %2114 : f32 to vector<8x128xf32>
    %2120 = arith.mulf %2119, %310 : vector<8x128xf32>
    %2121 = arith.addf %2118, %2120 : vector<8x128xf32>
    %2122 = vector.broadcast %2115 : f32 to vector<8x128xf32>
    %2123 = arith.mulf %2122, %312 : vector<8x128xf32>
    %2124 = arith.addf %2121, %2123 : vector<8x128xf32>
    %2125 = vector.broadcast %2113 : f32 to vector<8x128xf32>
    %2126 = arith.mulf %2125, %310 : vector<8x128xf32>
    %2127 = arith.addf %2112, %2126 : vector<8x128xf32>
    %2128 = vector.broadcast %2114 : f32 to vector<8x128xf32>
    %2129 = arith.mulf %2128, %312 : vector<8x128xf32>
    %2130 = arith.addf %2127, %2129 : vector<8x128xf32>
    %2131 = vector.broadcast %2115 : f32 to vector<8x128xf32>
    %2132 = arith.mulf %2131, %790 : vector<8x128xf32>
    %2133 = arith.addf %2130, %2132 : vector<8x128xf32>
    %c177 = arith.constant 177 : index
    %2134 = memref.load %arg3[%c177] : memref<192xf32, #tpu.memory_space<smem>>
    %c178 = arith.constant 178 : index
    %2135 = memref.load %arg3[%c178] : memref<192xf32, #tpu.memory_space<smem>>
    %c179 = arith.constant 179 : index
    %2136 = memref.load %arg3[%c179] : memref<192xf32, #tpu.memory_space<smem>>
    %2137 = vector.broadcast %2134 : f32 to vector<8x128xf32>
    %2138 = arith.mulf %2137, %793 : vector<8x128xf32>
    %2139 = arith.addf %2124, %2138 : vector<8x128xf32>
    %2140 = vector.broadcast %2135 : f32 to vector<8x128xf32>
    %2141 = arith.mulf %2140, %402 : vector<8x128xf32>
    %2142 = arith.addf %2139, %2141 : vector<8x128xf32>
    %2143 = vector.broadcast %2136 : f32 to vector<8x128xf32>
    %2144 = arith.mulf %2143, %404 : vector<8x128xf32>
    %2145 = arith.addf %2142, %2144 : vector<8x128xf32>
    %2146 = vector.broadcast %2134 : f32 to vector<8x128xf32>
    %2147 = arith.mulf %2146, %402 : vector<8x128xf32>
    %2148 = arith.addf %2133, %2147 : vector<8x128xf32>
    %2149 = vector.broadcast %2135 : f32 to vector<8x128xf32>
    %2150 = arith.mulf %2149, %404 : vector<8x128xf32>
    %2151 = arith.addf %2148, %2150 : vector<8x128xf32>
    %2152 = vector.broadcast %2136 : f32 to vector<8x128xf32>
    %2153 = arith.mulf %2152, %796 : vector<8x128xf32>
    %2154 = arith.addf %2151, %2153 : vector<8x128xf32>
    %c180 = arith.constant 180 : index
    %2155 = memref.load %arg3[%c180] : memref<192xf32, #tpu.memory_space<smem>>
    %c181 = arith.constant 181 : index
    %2156 = memref.load %arg3[%c181] : memref<192xf32, #tpu.memory_space<smem>>
    %c182 = arith.constant 182 : index
    %2157 = memref.load %arg3[%c182] : memref<192xf32, #tpu.memory_space<smem>>
    %2158 = vector.broadcast %2155 : f32 to vector<8x128xf32>
    %2159 = arith.mulf %2158, %799 : vector<8x128xf32>
    %2160 = arith.addf %2145, %2159 : vector<8x128xf32>
    %2161 = vector.broadcast %2156 : f32 to vector<8x128xf32>
    %2162 = arith.mulf %2161, %494 : vector<8x128xf32>
    %2163 = arith.addf %2160, %2162 : vector<8x128xf32>
    %2164 = vector.broadcast %2157 : f32 to vector<8x128xf32>
    %2165 = arith.mulf %2164, %496 : vector<8x128xf32>
    %2166 = arith.addf %2163, %2165 : vector<8x128xf32>
    %2167 = vector.broadcast %2155 : f32 to vector<8x128xf32>
    %2168 = arith.mulf %2167, %494 : vector<8x128xf32>
    %2169 = arith.addf %2154, %2168 : vector<8x128xf32>
    %2170 = vector.broadcast %2156 : f32 to vector<8x128xf32>
    %2171 = arith.mulf %2170, %496 : vector<8x128xf32>
    %2172 = arith.addf %2169, %2171 : vector<8x128xf32>
    %2173 = vector.broadcast %2157 : f32 to vector<8x128xf32>
    %2174 = arith.mulf %2173, %802 : vector<8x128xf32>
    %2175 = arith.addf %2172, %2174 : vector<8x128xf32>
    %c183 = arith.constant 183 : index
    %2176 = memref.load %arg3[%c183] : memref<192xf32, #tpu.memory_space<smem>>
    %c184 = arith.constant 184 : index
    %2177 = memref.load %arg3[%c184] : memref<192xf32, #tpu.memory_space<smem>>
    %c185 = arith.constant 185 : index
    %2178 = memref.load %arg3[%c185] : memref<192xf32, #tpu.memory_space<smem>>
    %2179 = vector.broadcast %2176 : f32 to vector<8x128xf32>
    %2180 = arith.mulf %2179, %805 : vector<8x128xf32>
    %2181 = arith.addf %2166, %2180 : vector<8x128xf32>
    %2182 = vector.broadcast %2177 : f32 to vector<8x128xf32>
    %2183 = arith.mulf %2182, %586 : vector<8x128xf32>
    %2184 = arith.addf %2181, %2183 : vector<8x128xf32>
    %2185 = vector.broadcast %2178 : f32 to vector<8x128xf32>
    %2186 = arith.mulf %2185, %588 : vector<8x128xf32>
    %2187 = arith.addf %2184, %2186 : vector<8x128xf32>
    %2188 = vector.broadcast %2176 : f32 to vector<8x128xf32>
    %2189 = arith.mulf %2188, %586 : vector<8x128xf32>
    %2190 = arith.addf %2175, %2189 : vector<8x128xf32>
    %2191 = vector.broadcast %2177 : f32 to vector<8x128xf32>
    %2192 = arith.mulf %2191, %588 : vector<8x128xf32>
    %2193 = arith.addf %2190, %2192 : vector<8x128xf32>
    %2194 = vector.broadcast %2178 : f32 to vector<8x128xf32>
    %2195 = arith.mulf %2194, %808 : vector<8x128xf32>
    %2196 = arith.addf %2193, %2195 : vector<8x128xf32>
    %c186 = arith.constant 186 : index
    %2197 = memref.load %arg3[%c186] : memref<192xf32, #tpu.memory_space<smem>>
    %c187 = arith.constant 187 : index
    %2198 = memref.load %arg3[%c187] : memref<192xf32, #tpu.memory_space<smem>>
    %c188 = arith.constant 188 : index
    %2199 = memref.load %arg3[%c188] : memref<192xf32, #tpu.memory_space<smem>>
    %2200 = vector.broadcast %2197 : f32 to vector<8x128xf32>
    %2201 = arith.mulf %2200, %811 : vector<8x128xf32>
    %2202 = arith.addf %2187, %2201 : vector<8x128xf32>
    %2203 = vector.broadcast %2198 : f32 to vector<8x128xf32>
    %2204 = arith.mulf %2203, %678 : vector<8x128xf32>
    %2205 = arith.addf %2202, %2204 : vector<8x128xf32>
    %2206 = vector.broadcast %2199 : f32 to vector<8x128xf32>
    %2207 = arith.mulf %2206, %680 : vector<8x128xf32>
    %2208 = arith.addf %2205, %2207 : vector<8x128xf32>
    %2209 = vector.broadcast %2197 : f32 to vector<8x128xf32>
    %2210 = arith.mulf %2209, %678 : vector<8x128xf32>
    %2211 = arith.addf %2196, %2210 : vector<8x128xf32>
    %2212 = vector.broadcast %2198 : f32 to vector<8x128xf32>
    %2213 = arith.mulf %2212, %680 : vector<8x128xf32>
    %2214 = arith.addf %2211, %2213 : vector<8x128xf32>
    %2215 = vector.broadcast %2199 : f32 to vector<8x128xf32>
    %2216 = arith.mulf %2215, %814 : vector<8x128xf32>
    %2217 = arith.addf %2214, %2216 : vector<8x128xf32>
    %c189 = arith.constant 189 : index
    %2218 = memref.load %arg3[%c189] : memref<192xf32, #tpu.memory_space<smem>>
    %c190 = arith.constant 190 : index
    %2219 = memref.load %arg3[%c190] : memref<192xf32, #tpu.memory_space<smem>>
    %c191 = arith.constant 191 : index
    %2220 = memref.load %arg3[%c191] : memref<192xf32, #tpu.memory_space<smem>>
    %2221 = vector.broadcast %2218 : f32 to vector<8x128xf32>
    %2222 = arith.mulf %2221, %817 : vector<8x128xf32>
    %2223 = arith.addf %2208, %2222 : vector<8x128xf32>
    %2224 = vector.broadcast %2219 : f32 to vector<8x128xf32>
    %2225 = arith.mulf %2224, %770 : vector<8x128xf32>
    %2226 = arith.addf %2223, %2225 : vector<8x128xf32>
    %2227 = vector.broadcast %2220 : f32 to vector<8x128xf32>
    %2228 = arith.mulf %2227, %772 : vector<8x128xf32>
    %2229 = arith.addf %2226, %2228 : vector<8x128xf32>
    %2230 = vector.broadcast %2218 : f32 to vector<8x128xf32>
    %2231 = arith.mulf %2230, %770 : vector<8x128xf32>
    %2232 = arith.addf %2217, %2231 : vector<8x128xf32>
    %2233 = vector.broadcast %2219 : f32 to vector<8x128xf32>
    %2234 = arith.mulf %2233, %772 : vector<8x128xf32>
    %2235 = arith.addf %2232, %2234 : vector<8x128xf32>
    %2236 = vector.broadcast %2220 : f32 to vector<8x128xf32>
    %2237 = arith.mulf %2236, %820 : vector<8x128xf32>
    %2238 = arith.addf %2235, %2237 : vector<8x128xf32>
    %cst_228 = arith.constant 0.000000e+00 : f32
    %2239 = vector.broadcast %cst_228 : f32 to vector<8x128xf32>
    %2240 = arith.maximumf %2229, %2239 : vector<8x128xf32>
    %cst_229 = arith.constant 0.000000e+00 : f32
    %2241 = vector.broadcast %cst_229 : f32 to vector<8x128xf32>
    %2242 = arith.maximumf %2238, %2241 : vector<8x128xf32>
    %2243 = arith.maximumf %2240, %2242 : vector<8x128xf32>
    %c0_230 = arith.constant 0 : index
    %c896_231 = arith.constant 896 : index
    %2244 = vector.load %arg6[%c0_230, %c896_231] : memref<8x1024xf32, #tpu.memory_space<vmem>>, vector<8x128xf32>
    tpu.vector_store %arg6[%c0_230, %c896_231], %2243 {strides = array<i32>} : memref<8x1024xf32, #tpu.memory_space<vmem>>, vector<8x128xf32>,
    return
  }
  func.func @transform_0(%arg0: i32) -> i32 {
    %c0_i32 = arith.constant 0 : i32
    %c0_i32_0 = arith.constant 0 : i32
    return %c0_i32 : i32
  }
  func.func @transform_1(%arg0: i32) -> i32 {
    %c0_i32 = arith.constant 0 : i32
    %c0_i32_0 = arith.constant 0 : i32
    return %c0_i32 : i32
  }
  func.func @transform_2(%arg0: i32) -> i32 {
    %c0_i32 = arith.constant 0 : i32
    %c0_i32_0 = arith.constant 0 : i32
    return %c0_i32 : i32
  }
  func.func @transform_3(%arg0: i32) -> i32 {
    %c0_i32 = arith.constant 0 : i32
    %c0_i32_0 = arith.constant 0 : i32
    return %c0_i32 : i32
  }
  func.func @transform_4(%arg0: i32) -> (i32, i32) {
    %c0_i32 = arith.constant 0 : i32
    %c0_i32_0 = arith.constant 0 : i32
    return %arg0, %c0_i32 : i32, i32
  }
  func.func @transform_5(%arg0: i32) -> (i32, i32) {
    %c0_i32 = arith.constant 0 : i32
    %c0_i32_0 = arith.constant 0 : i32
    return %arg0, %c0_i32 : i32, i32
  }
}

</mosaic_0001>

<llo_original>
// kernel: cnn1d_double_maxpool.1
$region0: #{cnn1d_double_maxpool.1}
  #allocation0 [shape = 'u32[]', space=smem, size = 0x4, offset = 0x4, fixed_abs, tag = 'smem constant byte address 0x4 - core index']
  #allocation1 [shape = 'u32[144,128]{1,0:T(1,128)}', space=vmem, size = 0x12000, scoped, tag = 'internal scratch']
  %s0 = inlined_call_operand.vmem [shape: f32[96], index: 0, kind: input, shape index: {}]
  %s1 = inlined_call_operand.vmem [shape: f32[8], index: 1, kind: input, shape index: {}]
  %s2 = inlined_call_operand.vmem [shape: f32[192], index: 2, kind: input, shape index: {}]
  %s3 = inlined_call_operand.vmem [shape: f32[8], index: 3, kind: input, shape index: {}]
  %s4 = inlined_call_operand.vmem [shape: f32[16,1024], index: 4, kind: input, shape index: {}]
  %s5 = inlined_call_operand.vmem [shape: f32[16,1024], index: 5, kind: output, shape index: {}]
  %s6 = sld [smem:[#allocation0]]
  $region69: #{cnn1d_double_maxpool.1} parent=0
    _
  %s8 = ssub.s32 1, %s6
  %s9 = scalar_select 0, %s8, %s6
  $region1: #{cnn1d_double_maxpool.1} parent=0
    #allocation2 [shape = 'u8[512]{0}', space=smem, size = 0x200, scoped, tag = 'input window, operand 0, single buffered']
    #allocation3 [shape = 's32[2]{0}', space=sflag, size = 0x8, scoped, tag = 'scoped memory for cnn1d_double_maxpool.1']
    #allocation4 [shape = 'u8[512]{0}', space=smem, size = 0x200, scoped, tag = 'input window, operand 1, single buffered']
    #allocation5 [shape = 's32[1]{0}', space=sflag, size = 0x4, scoped, tag = 'scoped memory for cnn1d_double_maxpool.1']
    #allocation6 [shape = 'u8[1024]{0}', space=smem, size = 0x400, scoped, tag = 'input window, operand 2, single buffered']
    #allocation7 [shape = 'u8[512]{0}', space=smem, size = 0x200, scoped, tag = 'input window, operand 3, single buffered']
    #allocation8 [shape = 's32[1]{0}', space=sflag, size = 0x4, scoped, tag = 'scoped memory for cnn1d_double_maxpool.1']
    %10 = vsyncpa [#allocation3], 0
    %11 = vsyncpa [#allocation5], 0
    %12 = vsyncpa [#allocation8], 0
    loop: start=0, step=1, limit=4
    $region2: #{cnn1d_double_maxpool.1} parent=1 // loop_pre_header
      _
    $region3: #{cnn1d_double_maxpool.1} parent=1 // loop_header
      %s14 = sphi 0, %s18
      %p15 = scmp.ge.s32.totalorder %s14, 4
      %s22 = sphi 0, %s22
      %s24 = sphi 0, %s22
      %s25 = sphi 0, %s24
      %s39 = sphi 0, %s25
      %s43 = sphi 0, %s43
      %s45 = sphi 0, %s43
      %s46 = sphi 0, %s45
      %s60 = sphi 0, %s46
      %s64 = sphi 0, %s64
      %s66 = sphi 0, %s64
      %s67 = sphi 0, %s66
      %s81 = sphi 0, %s67
      %s85 = sphi 0, %s85
      %s87 = sphi 0, %s85
      %s88 = sphi 0, %s87
      %s102 = sphi 0, %s88
      %s108 = sphi 0, %s110
      %s111 = sphi 0, %s108
      %s112 = sphi 0, %s111
      %s128 = sphi 0, %s112
      %s134 = sphi 0, %s136
      %s137 = sphi 0, %s134
      %s138 = sphi 0, %s137
      %s154 = sphi 0, %s138
    $region4: #{cnn1d_double_maxpool.1} parent=1 // loop_header_branch
      %17 = sbr.rel (%p15) target = $region8
    $region5: #{cnn1d_double_maxpool.1} parent=1 // loop_body
      %s19 = ssub.s32 %s14, 1
      %s20 = ssub.s32 %s14, 2
      %s21 = sadd.s32 %s14, 1
      %s23 = sadd.s32 %s22, 1
      %p26 = scmp.eq.s32.totalorder %s14, 1
      %p27 = scmp.ne.s32.totalorder %s22, %s24
      %p28 = scmp.eq.s32.totalorder %s14, 0
      %p29 = por %p27, %p28
      %p30 = scmp.ne.s32.totalorder %s22, %s24
      %p31 = scmp.eq.s32.totalorder %s19, 1
      %p32 = por %p30, %p31
      %p33 = scmp.ne.s32.totalorder %s24, %s25
      %p34 = scmp.eq.s32.totalorder %s19, 0
      %p35 = por %p33, %p34
      %p36 = scmp.ne.s32.totalorder %s24, %s25
      %p37 = scmp.eq.s32.totalorder %s20, 1
      %p38 = por %p36, %p37
      %p40 = scmp.ne.s32.totalorder %s25, %s39
      %p41 = scmp.eq.s32.totalorder %s20, 0
      %p42 = por %p40, %p41
      %s44 = sadd.s32 %s43, 1
      %p47 = scmp.eq.s32.totalorder %s14, 1
      %p48 = scmp.ne.s32.totalorder %s43, %s45
      %p49 = scmp.eq.s32.totalorder %s14, 0
      %p50 = por %p48, %p49
      %p51 = scmp.ne.s32.totalorder %s43, %s45
      %p52 = scmp.eq.s32.totalorder %s19, 1
      %p53 = por %p51, %p52
      %p54 = scmp.ne.s32.totalorder %s45, %s46
      %p55 = scmp.eq.s32.totalorder %s19, 0
      %p56 = por %p54, %p55
      %p57 = scmp.ne.s32.totalorder %s45, %s46
      %p58 = scmp.eq.s32.totalorder %s20, 1
      %p59 = por %p57, %p58
      %p61 = scmp.ne.s32.totalorder %s46, %s60
      %p62 = scmp.eq.s32.totalorder %s20, 0
      %p63 = por %p61, %p62
      %s65 = sadd.s32 %s64, 1
      %p68 = scmp.eq.s32.totalorder %s14, 1
      %p69 = scmp.ne.s32.totalorder %s64, %s66
      %p70 = scmp.eq.s32.totalorder %s14, 0
      %p71 = por %p69, %p70
      %p72 = scmp.ne.s32.totalorder %s64, %s66
      %p73 = scmp.eq.s32.totalorder %s19, 1
      %p74 = por %p72, %p73
      %p75 = scmp.ne.s32.totalorder %s66, %s67
      %p76 = scmp.eq.s32.totalorder %s19, 0
      %p77 = por %p75, %p76
      %p78 = scmp.ne.s32.totalorder %s66, %s67
      %p79 = scmp.eq.s32.totalorder %s20, 1
      %p80 = por %p78, %p79
      %p82 = scmp.ne.s32.totalorder %s67, %s81
      %p83 = scmp.eq.s32.totalorder %s20, 0
      %p84 = por %p82, %p83
      %s86 = sadd.s32 %s85, 1
      %p89 = scmp.eq.s32.totalorder %s14, 1
      %p90 = scmp.ne.s32.totalorder %s85, %s87
      %p91 = scmp.eq.s32.totalorder %s14, 0
      %p92 = por %p90, %p91
      %p93 = scmp.ne.s32.totalorder %s85, %s87
      %p94 = scmp.eq.s32.totalorder %s19, 1
      %p95 = por %p93, %p94
      %p96 = scmp.ne.s32.totalorder %s87, %s88
      %p97 = scmp.eq.s32.totalorder %s19, 0
      %p98 = por %p96, %p97
      %p99 = scmp.ne.s32.totalorder %s87, %s88
      %p100 = scmp.eq.s32.totalorder %s20, 1
      %p101 = por %p99, %p100
      %p103 = scmp.ne.s32.totalorder %s88, %s102
      %p104 = scmp.eq.s32.totalorder %s20, 0
      %p105 = por %p103, %p104
      %s106 = ssub.s32 %s14, %s21
      %p107 = scmp.eq.s32.totalorder %s106, 0
      %s109 = sadd.s32 %s108, 1
      %s110 = scalar_select %p107, %s108, %s109
      %p113 = pneg %p107
      %p114 = scmp.eq.s32.totalorder %s14, 1
      %p115 = por %p113, %p114
      %p116 = scmp.ne.s32.totalorder %s108, %s111
      %p117 = scmp.eq.s32.totalorder %s14, 0
      %p118 = por %p116, %p117
      %p119 = scmp.ne.s32.totalorder %s108, %s111
      %p120 = scmp.eq.s32.totalorder %s19, 1
      %p121 = por %p119, %p120
      %p122 = scmp.ne.s32.totalorder %s111, %s112
      %p123 = scmp.eq.s32.totalorder %s19, 0
      %p124 = por %p122, %p123
      %p125 = scmp.ne.s32.totalorder %s111, %s112
      %p126 = scmp.eq.s32.totalorder %s20, 1
      %p127 = por %p125, %p126
      %p129 = scmp.ne.s32.totalorder %s112, %s128
      %p130 = scmp.eq.s32.totalorder %s20, 0
      %p131 = por %p129, %p130
      %s132 = ssub.s32 %s14, %s21
      %p133 = scmp.eq.s32.totalorder %s132, 0
      %s135 = sadd.s32 %s134, 1
      %s136 = scalar_select %p133, %s134, %s135
      %p139 = pneg %p133
      %p140 = scmp.eq.s32.totalorder %s14, 1
      %p141 = por %p139, %p140
      %p142 = scmp.ne.s32.totalorder %s134, %s137
      %p143 = scmp.eq.s32.totalorder %s14, 0
      %p144 = por %p142, %p143
      %p145 = scmp.ne.s32.totalorder %s134, %s137
      %p146 = scmp.eq.s32.totalorder %s19, 1
      %p147 = por %p145, %p146
      %p148 = scmp.ne.s32.totalorder %s137, %s138
      %p149 = scmp.eq.s32.totalorder %s19, 0
      %p150 = por %p148, %p149
      %p151 = scmp.ne.s32.totalorder %s137, %s138
      %p152 = scmp.eq.s32.totalorder %s20, 1
      %p153 = por %p151, %p152
      %p155 = scmp.ne.s32.totalorder %s138, %s154
      %p156 = scmp.eq.s32.totalorder %s20, 0
      %p157 = por %p155, %p156
      %p158 = scmp.le.s32.totalorder 1, %s14
      %p159 = scmp.lt.s32.totalorder %s14, 3
      %p160 = pnand %p158, %p159
      %p161 = pneg %p160
      // Predicated region
      $region9: #{cnn1d_double_maxpool.1} parent=5 // pred_check
        _
      $region10: #{cnn1d_double_maxpool.1} parent=5 // pred_check_branch
        %163 = sbr.rel (%p160) target = $region12
      $region11: #{cnn1d_double_maxpool.1} parent=5 // pred_region
        %s164 = ssub.s32 %s14, 1
        // Predicated region
        $region13: #{cnn1d_double_maxpool.1} parent=11 // pred_check
          %p165 = pneg %p35
        $region14: #{cnn1d_double_maxpool.1} parent=11 // pred_check_branch
          %167 = sbr.rel (%p165) target = $region16
        $region15: #{cnn1d_double_maxpool.1} parent=11 // pred_region
          %s169 = ssub.s32 16, 16
          %170 = vsyncadd [#allocation3], %s169
          %s172 = sshll.u32 %s0, 4
          %s173 = int_to_ptr.vmem [resolvable:$true] %s172
          %175 = dma.vmem_to_smem %s173, 16, [#allocation2], [#allocation3]
        $region16: #{cnn1d_double_maxpool.1} parent=11 // pred_fallthru
          _
        // Predicated region
        $region17: #{cnn1d_double_maxpool.1} parent=11 // pred_check
          %p176 = pneg %p56
        $region18: #{cnn1d_double_maxpool.1} parent=11 // pred_check_branch
          %178 = sbr.rel (%p176) target = $region20
        $region19: #{cnn1d_double_maxpool.1} parent=11 // pred_region
          %s180 = ssub.s32 16, 16
          %181 = vsyncadd [#allocation5], %s180
          %s183 = sshll.u32 %s1, 4
          %s184 = int_to_ptr.vmem [resolvable:$true] %s183
          %186 = dma.vmem_to_smem %s184, 16, [#allocation4], [#allocation5]
        $region20: #{cnn1d_double_maxpool.1} parent=11 // pred_fallthru
          _
        // Predicated region
        $region21: #{cnn1d_double_maxpool.1} parent=11 // pred_check
          %p187 = pneg %p77
        $region22: #{cnn1d_double_maxpool.1} parent=11 // pred_check_branch
          %189 = sbr.rel (%p187) target = $region24
        $region23: #{cnn1d_double_maxpool.1} parent=11 // pred_region
          %s191 = ssub.s32 32, 32
          %192 = vsyncadd [#allocation5], %s191
          %s194 = sshll.u32 %s2, 4
          %s195 = int_to_ptr.vmem [resolvable:$true] %s194
          %197 = dma.vmem_to_smem %s195, 32, [#allocation6], [#allocation5]
        $region24: #{cnn1d_double_maxpool.1} parent=11 // pred_fallthru
          _
        // Predicated region
        $region25: #{cnn1d_double_maxpool.1} parent=11 // pred_check
          %p198 = pneg %p98
        $region26: #{cnn1d_double_maxpool.1} parent=11 // pred_check_branch
          %200 = sbr.rel (%p198) target = $region28
        $region27: #{cnn1d_double_maxpool.1} parent=11 // pred_region
          %s202 = ssub.s32 16, 16
          %203 = vsyncadd [#allocation8], %s202
          %s205 = sshll.u32 %s3, 4
          %s206 = int_to_ptr.vmem [resolvable:$true] %s205
          %208 = dma.vmem_to_smem %s206, 16, [#allocation7], [#allocation8]
        $region28: #{cnn1d_double_maxpool.1} parent=11 // pred_fallthru
          _
      $region12: #{cnn1d_double_maxpool.1} parent=5 // pred_fallthru
        _
      %p209 = scmp.lt.s32.totalorder %s14, 2
      // Predicated region
      $region29: #{cnn1d_double_maxpool.1} parent=5 // pred_check
        %p210 = pneg %p209
      $region30: #{cnn1d_double_maxpool.1} parent=5 // pred_check_branch
        %212 = sbr.rel (%p210) target = $region32
      $region31: #{cnn1d_double_maxpool.1} parent=5 // pred_region
        // Predicated region
        $region33: #{cnn1d_double_maxpool.1} parent=31 // pred_check
          %p213 = pneg %p118
        $region34: #{cnn1d_double_maxpool.1} parent=31 // pred_check_branch
          %215 = sbr.rel (%p213) target = $region36
        $region35: #{cnn1d_double_maxpool.1} parent=31 // pred_region
          %p216 = scmp.lt.s32.totalorder %s14, 1
          %s217 = scalar_select %p216, %s14, 1
          %s218 = smul.addr %s217, 8
          %s219 = smul.addr %s218, 8
          %s220 = scalar_lea.vmem %s4, %s219
        $region36: #{cnn1d_double_maxpool.1} parent=31 // pred_fallthru
          _
      $region32: #{cnn1d_double_maxpool.1} parent=5 // pred_fallthru
        _
      %p221 = scmp.le.s32.totalorder 1, %s14
      %p222 = scmp.lt.s32.totalorder %s14, 3
      %p223 = pnand %p221, %p222
      %p224 = pneg %p223
      // Predicated region
      $region37: #{cnn1d_double_maxpool.1} parent=5 // pred_check
        _
      $region38: #{cnn1d_double_maxpool.1} parent=5 // pred_check_branch
        %226 = sbr.rel (%p223) target = $region40
      $region39: #{cnn1d_double_maxpool.1} parent=5 // pred_region
        %s227 = ssub.s32 %s14, 1
        // Predicated region
        $region41: #{cnn1d_double_maxpool.1} parent=39 // pred_check
          %p228 = pneg %p35
        $region42: #{cnn1d_double_maxpool.1} parent=39 // pred_check_branch
          %230 = sbr.rel (%p228) target = $region44
        $region43: #{cnn1d_double_maxpool.1} parent=39 // pred_region
          %231 = dma.done [#allocation3], 16
        $region44: #{cnn1d_double_maxpool.1} parent=39 // pred_fallthru
          _
        // Predicated region
        $region45: #{cnn1d_double_maxpool.1} parent=39 // pred_check
          %p232 = pneg %p56
        $region46: #{cnn1d_double_maxpool.1} parent=39 // pred_check_branch
          %234 = sbr.rel (%p232) target = $region48
        $region47: #{cnn1d_double_maxpool.1} parent=39 // pred_region
          %235 = dma.done [#allocation5], 16
        $region48: #{cnn1d_double_maxpool.1} parent=39 // pred_fallthru
          _
        // Predicated region
        $region49: #{cnn1d_double_maxpool.1} parent=39 // pred_check
          %p236 = pneg %p77
        $region50: #{cnn1d_double_maxpool.1} parent=39 // pred_check_branch
          %238 = sbr.rel (%p236) target = $region52
        $region51: #{cnn1d_double_maxpool.1} parent=39 // pred_region
          %239 = dma.done [#allocation5], 32
        $region52: #{cnn1d_double_maxpool.1} parent=39 // pred_fallthru
          _
        // Predicated region
        $region53: #{cnn1d_double_maxpool.1} parent=39 // pred_check
          %p240 = pneg %p98
        $region54: #{cnn1d_double_maxpool.1} parent=39 // pred_check_branch
          %242 = sbr.rel (%p240) target = $region56
        $region55: #{cnn1d_double_maxpool.1} parent=39 // pred_region
          %243 = dma.done [#allocation8], 16
        $region56: #{cnn1d_double_maxpool.1} parent=39 // pred_fallthru
          _
        %244 = sfence
        %p245 = pneg %p35
        %p246 = pneg %p32
        %p247 = pneg %p56
        %p248 = pneg %p53
        %p249 = pneg %p77
        %p250 = pneg %p74
        %p251 = pneg %p98
        %p252 = pneg %p95
        %p253 = scmp.lt.s32.totalorder %s19, 1
        %s254 = scalar_select %p253, %s19, 1
        %s255 = smul.addr %s254, 8
        %s256 = smul.addr %s255, 8
        %s257 = scalar_lea.vmem %s4, %s256
        %p258 = pneg %p124
        %p259 = pneg %p121
        %p260 = pneg %p150
        %p261 = pneg %p147
        %p262 = scmp.lt.s32.totalorder %s19, 1
        %s263 = scalar_select %p262, %s19, 1
        %s264 = smul.addr %s263, 8
        %s265 = smul.addr %s264, 8
        %s266 = scalar_lea.vmem %s5, %s265
        %p267 = scmp.lt.s32.totalorder %s19, 1
        %s268 = scalar_select %p267, %s19, 1
        %s269 = smul.addr %s268, 8
        %s270 = smul.addr %s269, 8
        %s271 = scalar_lea.vmem %s4, %s270
        %p272 = scmp.lt.s32.totalorder %s19, 1
        %s273 = scalar_select %p272, %s19, 1
        %s274 = smul.addr %s273, 8
        %s275 = smul.addr %s274, 8
        %s276 = scalar_lea.vmem %s5, %s275
        %v277 = vlaneseq
        %v278 = vand.u32 %v277, 127
        %vm279 = vcmp.gt.s32.totalorder %v278, 0
        %vm280 = vcmp.lt.s32.totalorder %v278, 127
        %v281 = vld [vmem:[%s271] sm:$0xff]
        %v282 = vld [vmem:[%s271 + $0x8] sm:$0xff]
        %283 = vrot.lane.b32.xlu0 %v282, 1
        %v284 = vpop.permute.xlu0 %283
        %v285 = vsel %vm279, %v284, 0.0
        %286 = vrot.lane.b32.xlu0 %v281, 127
        %v287 = vpop.permute.xlu0 %286
        %v288 = vsel %vm280, %v287, 0.0
        %v289 = vld [vmem:[%s271 + $0x10] sm:$0xff]
        %v290 = vld [vmem:[%s271 + $0x18] sm:$0xff]
        %291 = vrot.lane.b32.xlu0 %v290, 1
        %v292 = vpop.permute.xlu0 %291
        %v293 = vsel %vm279, %v292, 0.0
        %294 = vrot.lane.b32.xlu0 %v289, 127
        %v295 = vpop.permute.xlu0 %294
        %v296 = vsel %vm280, %v295, 0.0
        %v297 = vld [vmem:[%s271 + $0x20] sm:$0xff]
        %v298 = vld [vmem:[%s271 + $0x28] sm:$0xff]
        %299 = vrot.lane.b32.xlu0 %v298, 1
        %v300 = vpop.permute.xlu0 %299
        %v301 = vsel %vm279, %v300, 0.0
        %302 = vrot.lane.b32.xlu0 %v297, 127
        %v303 = vpop.permute.xlu0 %302
        %v304 = vsel %vm280, %v303, 0.0
        %v305 = vld [vmem:[%s271 + $0x30] sm:$0xff]
        %v306 = vld [vmem:[%s271 + $0x38] sm:$0xff]
        %307 = vrot.lane.b32.xlu0 %v306, 1
        %v308 = vpop.permute.xlu0 %307
        %v309 = vsel %vm279, %v308, 0.0
        %310 = vrot.lane.b32.xlu0 %v305, 127
        %v311 = vpop.permute.xlu0 %310
        %v312 = vsel %vm280, %v311, 0.0
        %s313 = sld [smem:[#allocation4]]
        %v314 = vstv %s313
        %s315 = sld [smem:[#allocation2]]
        %s316 = sld [smem:[#allocation2 + $0x1]]
        %s317 = sld [smem:[#allocation2 + $0x2]]
        %v318 = vstv %s315
        %v319 = vmul.f32 %v318, %v285
        %v320 = vadd.f32 %v314, %v319
        %v321 = vstv %s316
        %v322 = vmul.f32 %v321, %v281
        %v323 = vadd.f32 %v320, %v322
        %v324 = vstv %s317
        %v325 = vmul.f32 %v324, %v282
        %v326 = vadd.f32 %v323, %v325
        %v327 = vmul.f32 %v318, %v281
        %v328 = vadd.f32 %v314, %v327
        %v329 = vmul.f32 %v321, %v282
        %v330 = vadd.f32 %v328, %v329
        %v331 = vmul.f32 %v324, %v288
        %v332 = vadd.f32 %v330, %v331
        %s333 = sld [smem:[#allocation2 + $0x3]]
        %s334 = sld [smem:[#allocation2 + $0x4]]
        %s335 = sld [smem:[#allocation2 + $0x5]]
        %v336 = vstv %s333
        %v337 = vmul.f32 %v336, %v293
        %v338 = vadd.f32 %v326, %v337
        %v339 = vstv %s334
        %v340 = vmul.f32 %v339, %v289
        %v341 = vadd.f32 %v338, %v340
        %v342 = vstv %s335
        %v343 = vmul.f32 %v342, %v290
        %v344 = vadd.f32 %v341, %v343
        %v345 = vmul.f32 %v336, %v289
        %v346 = vadd.f32 %v332, %v345
        %v347 = vmul.f32 %v339, %v290
        %v348 = vadd.f32 %v346, %v347
        %v349 = vmul.f32 %v342, %v296
        %v350 = vadd.f32 %v348, %v349
        %s351 = sld [smem:[#allocation2 + $0x6]]
        %s352 = sld [smem:[#allocation2 + $0x7]]
        %s353 = sld [smem:[#allocation2 + $0x8]]
        %v354 = vstv %s351
        %v355 = vmul.f32 %v354, %v301
        %v356 = vadd.f32 %v344, %v355
        %v357 = vstv %s352
        %v358 = vmul.f32 %v357, %v297
        %v359 = vadd.f32 %v356, %v358
        %v360 = vstv %s353
        %v361 = vmul.f32 %v360, %v298
        %v362 = vadd.f32 %v359, %v361
        %v363 = vmul.f32 %v354, %v297
        %v364 = vadd.f32 %v350, %v363
        %v365 = vmul.f32 %v357, %v298
        %v366 = vadd.f32 %v364, %v365
        %v367 = vmul.f32 %v360, %v304
        %v368 = vadd.f32 %v366, %v367
        %s369 = sld [smem:[#allocation2 + $0x9]]
        %s370 = sld [smem:[#allocation2 + $0xa]]
        %s371 = sld [smem:[#allocation2 + $0xb]]
        %v372 = vstv %s369
        %v373 = vmul.f32 %v372, %v309
        %v374 = vadd.f32 %v362, %v373
        %v375 = vstv %s370
        %v376 = vmul.f32 %v375, %v305
        %v377 = vadd.f32 %v374, %v376
        %v378 = vstv %s371
        %v379 = vmul.f32 %v378, %v306
        %v380 = vadd.f32 %v377, %v379
        %v381 = vmul.f32 %v372, %v305
        %v382 = vadd.f32 %v368, %v381
        %v383 = vmul.f32 %v375, %v306
        %v384 = vadd.f32 %v382, %v383
        %v385 = vmul.f32 %v378, %v312
        %v386 = vadd.f32 %v384, %v385
        %v387 = vmax.f32 %v380, 0.0
        %v388 = vmax.f32 %v386, 0.0
        %s389 = sld [smem:[#allocation4 + $0x1]]
        %v390 = vstv %s389
        %s391 = sld [smem:[#allocation2 + $0xc]]
        %s392 = sld [smem:[#allocation2 + $0xd]]
        %s393 = sld [smem:[#allocation2 + $0xe]]
        %v394 = vstv %s391
        %v395 = vmul.f32 %v394, %v285
        %v396 = vadd.f32 %v390, %v395
        %v397 = vstv %s392
        %v398 = vmul.f32 %v397, %v281
        %v399 = vadd.f32 %v396, %v398
        %v400 = vstv %s393
        %v401 = vmul.f32 %v400, %v282
        %v402 = vadd.f32 %v399, %v401
        %v403 = vmul.f32 %v394, %v281
        %v404 = vadd.f32 %v390, %v403
        %v405 = vmul.f32 %v397, %v282
        %v406 = vadd.f32 %v404, %v405
        %v407 = vmul.f32 %v400, %v288
        %v408 = vadd.f32 %v406, %v407
        %s409 = sld [smem:[#allocation2 + $0xf]]
        %s410 = sld [smem:[#allocation2 + $0x10]]
        %s411 = sld [smem:[#allocation2 + $0x11]]
        %v412 = vstv %s409
        %v413 = vmul.f32 %v412, %v293
        %v414 = vadd.f32 %v402, %v413
        %v415 = vstv %s410
        %v416 = vmul.f32 %v415, %v289
        %v417 = vadd.f32 %v414, %v416
        %v418 = vstv %s411
        %v419 = vmul.f32 %v418, %v290
        %v420 = vadd.f32 %v417, %v419
        %v421 = vmul.f32 %v412, %v289
        %v422 = vadd.f32 %v408, %v421
        %v423 = vmul.f32 %v415, %v290
        %v424 = vadd.f32 %v422, %v423
        %v425 = vmul.f32 %v418, %v296
        %v426 = vadd.f32 %v424, %v425
        %s427 = sld [smem:[#allocation2 + $0x12]]
        %s428 = sld [smem:[#allocation2 + $0x13]]
        %s429 = sld [smem:[#allocation2 + $0x14]]
        %v430 = vstv %s427
        %v431 = vmul.f32 %v430, %v301
        %v432 = vadd.f32 %v420, %v431
        %v433 = vstv %s428
        %v434 = vmul.f32 %v433, %v297
        %v435 = vadd.f32 %v432, %v434
        %v436 = vstv %s429
        %v437 = vmul.f32 %v436, %v298
        %v438 = vadd.f32 %v435, %v437
        %v439 = vmul.f32 %v430, %v297
        %v440 = vadd.f32 %v426, %v439
        %v441 = vmul.f32 %v433, %v298
        %v442 = vadd.f32 %v440, %v441
        %v443 = vmul.f32 %v436, %v304
        %v444 = vadd.f32 %v442, %v443
        %s445 = sld [smem:[#allocation2 + $0x15]]
        %s446 = sld [smem:[#allocation2 + $0x16]]
        %s447 = sld [smem:[#allocation2 + $0x17]]
        %v448 = vstv %s445
        %v449 = vmul.f32 %v448, %v309
        %v450 = vadd.f32 %v438, %v449
        %v451 = vstv %s446
        %v452 = vmul.f32 %v451, %v305
        %v453 = vadd.f32 %v450, %v452
        %v454 = vstv %s447
        %v455 = vmul.f32 %v454, %v306
        %v456 = vadd.f32 %v453, %v455
        %v457 = vmul.f32 %v448, %v305
        %v458 = vadd.f32 %v444, %v457
        %v459 = vmul.f32 %v451, %v306
        %v460 = vadd.f32 %v458, %v459
        %v461 = vmul.f32 %v454, %v312
        %v462 = vadd.f32 %v460, %v461
        %v463 = vmax.f32 %v456, 0.0
        %v464 = vmax.f32 %v462, 0.0
        %s465 = sld [smem:[#allocation4 + $0x2]]
        %v466 = vstv %s465
        %s467 = sld [smem:[#allocation2 + $0x18]]
        %s468 = sld [smem:[#allocation2 + $0x19]]
        %s469 = sld [smem:[#allocation2 + $0x1a]]
        %v470 = vstv %s467
        %v471 = vmul.f32 %v470, %v285
        %v472 = vadd.f32 %v466, %v471
        %v473 = vstv %s468
        %v474 = vmul.f32 %v473, %v281
        %v475 = vadd.f32 %v472, %v474
        %v476 = vstv %s469
        %v477 = vmul.f32 %v476, %v282
        %v478 = vadd.f32 %v475, %v477
        %v479 = vmul.f32 %v470, %v281
        %v480 = vadd.f32 %v466, %v479
        %v481 = vmul.f32 %v473, %v282
        %v482 = vadd.f32 %v480, %v481
        %v483 = vmul.f32 %v476, %v288
        %v484 = vadd.f32 %v482, %v483
        %s485 = sld [smem:[#allocation2 + $0x1b]]
        %s486 = sld [smem:[#allocation2 + $0x1c]]
        %s487 = sld [smem:[#allocation2 + $0x1d]]
        %v488 = vstv %s485
        %v489 = vmul.f32 %v488, %v293
        %v490 = vadd.f32 %v478, %v489
        %v491 = vstv %s486
        %v492 = vmul.f32 %v491, %v289
        %v493 = vadd.f32 %v490, %v492
        %v494 = vstv %s487
        %v495 = vmul.f32 %v494, %v290
        %v496 = vadd.f32 %v493, %v495
        %v497 = vmul.f32 %v488, %v289
        %v498 = vadd.f32 %v484, %v497
        %v499 = vmul.f32 %v491, %v290
        %v500 = vadd.f32 %v498, %v499
        %v501 = vmul.f32 %v494, %v296
        %v502 = vadd.f32 %v500, %v501
        %s503 = sld [smem:[#allocation2 + $0x1e]]
        %s504 = sld [smem:[#allocation2 + $0x1f]]
        %s505 = sld [smem:[#allocation2 + $0x20]]
        %v506 = vstv %s503
        %v507 = vmul.f32 %v506, %v301
        %v508 = vadd.f32 %v496, %v507
        %v509 = vstv %s504
        %v510 = vmul.f32 %v509, %v297
        %v511 = vadd.f32 %v508, %v510
        %v512 = vstv %s505
        %v513 = vmul.f32 %v512, %v298
        %v514 = vadd.f32 %v511, %v513
        %v515 = vmul.f32 %v506, %v297
        %v516 = vadd.f32 %v502, %v515
        %v517 = vmul.f32 %v509, %v298
        %v518 = vadd.f32 %v516, %v517
        %v519 = vmul.f32 %v512, %v304
        %v520 = vadd.f32 %v518, %v519
        %s521 = sld [smem:[#allocation2 + $0x21]]
        %s522 = sld [smem:[#allocation2 + $0x22]]
        %s523 = sld [smem:[#allocation2 + $0x23]]
        %v524 = vstv %s521
        %v525 = vmul.f32 %v524, %v309
        %v526 = vadd.f32 %v514, %v525
        %v527 = vstv %s522
        %v528 = vmul.f32 %v527, %v305
        %v529 = vadd.f32 %v526, %v528
        %v530 = vstv %s523
        %v531 = vmul.f32 %v530, %v306
        %v532 = vadd.f32 %v529, %v531
        %v533 = vmul.f32 %v524, %v305
        %v534 = vadd.f32 %v520, %v533
        %v535 = vmul.f32 %v527, %v306
        %v536 = vadd.f32 %v534, %v535
        %v537 = vmul.f32 %v530, %v312
        %v538 = vadd.f32 %v536, %v537
        %v539 = vmax.f32 %v532, 0.0
        %v540 = vmax.f32 %v538, 0.0
        %s541 = sld [smem:[#allocation4 + $0x3]]
        %v542 = vstv %s541
        %s543 = sld [smem:[#allocation2 + $0x24]]
        %s544 = sld [smem:[#allocation2 + $0x25]]
        %s545 = sld [smem:[#allocation2 + $0x26]]
        %v546 = vstv %s543
        %v547 = vmul.f32 %v546, %v285
        %v548 = vadd.f32 %v542, %v547
        %v549 = vstv %s544
        %v550 = vmul.f32 %v549, %v281
        %v551 = vadd.f32 %v548, %v550
        %v552 = vstv %s545
        %v553 = vmul.f32 %v552, %v282
        %v554 = vadd.f32 %v551, %v553
        %v555 = vmul.f32 %v546, %v281
        %v556 = vadd.f32 %v542, %v555
        %v557 = vmul.f32 %v549, %v282
        %v558 = vadd.f32 %v556, %v557
        %v559 = vmul.f32 %v552, %v288
        %v560 = vadd.f32 %v558, %v559
        %s561 = sld [smem:[#allocation2 + $0x27]]
        %s562 = sld [smem:[#allocation2 + $0x28]]
        %s563 = sld [smem:[#allocation2 + $0x29]]
        %v564 = vstv %s561
        %v565 = vmul.f32 %v564, %v293
        %v566 = vadd.f32 %v554, %v565
        %v567 = vstv %s562
        %v568 = vmul.f32 %v567, %v289
        %v569 = vadd.f32 %v566, %v568
        %v570 = vstv %s563
        %v571 = vmul.f32 %v570, %v290
        %v572 = vadd.f32 %v569, %v571
        %v573 = vmul.f32 %v564, %v289
        %v574 = vadd.f32 %v560, %v573
        %v575 = vmul.f32 %v567, %v290
        %v576 = vadd.f32 %v574, %v575
        %v577 = vmul.f32 %v570, %v296
        %v578 = vadd.f32 %v576, %v577
        %s579 = sld [smem:[#allocation2 + $0x2a]]
        %s580 = sld [smem:[#allocation2 + $0x2b]]
        %s581 = sld [smem:[#allocation2 + $0x2c]]
        %v582 = vstv %s579
        %v583 = vmul.f32 %v582, %v301
        %v584 = vadd.f32 %v572, %v583
        %v585 = vstv %s580
        %v586 = vmul.f32 %v585, %v297
        %v587 = vadd.f32 %v584, %v586
        %v588 = vstv %s581
        %v589 = vmul.f32 %v588, %v298
        %v590 = vadd.f32 %v587, %v589
        %v591 = vmul.f32 %v582, %v297
        %v592 = vadd.f32 %v578, %v591
        %v593 = vmul.f32 %v585, %v298
        %v594 = vadd.f32 %v592, %v593
        %v595 = vmul.f32 %v588, %v304
        %v596 = vadd.f32 %v594, %v595
        %s597 = sld [smem:[#allocation2 + $0x2d]]
        %s598 = sld [smem:[#allocation2 + $0x2e]]
        %s599 = sld [smem:[#allocation2 + $0x2f]]
        %v600 = vstv %s597
        %v601 = vmul.f32 %v600, %v309
        %v602 = vadd.f32 %v590, %v601
        %v603 = vstv %s598
        %v604 = vmul.f32 %v603, %v305
        %v605 = vadd.f32 %v602, %v604
        %v606 = vstv %s599
        %v607 = vmul.f32 %v606, %v306
        %v608 = vadd.f32 %v605, %v607
        %v609 = vmul.f32 %v600, %v305
        %v610 = vadd.f32 %v596, %v609
        %v611 = vmul.f32 %v603, %v306
        %v612 = vadd.f32 %v610, %v611
        %v613 = vmul.f32 %v606, %v312
        %v614 = vadd.f32 %v612, %v613
        %v615 = vmax.f32 %v608, 0.0
        %v616 = vmax.f32 %v614, 0.0
        %s617 = sld [smem:[#allocation4 + $0x4]]
        %v618 = vstv %s617
        %s619 = sld [smem:[#allocation2 + $0x30]]
        %s620 = sld [smem:[#allocation2 + $0x31]]
        %s621 = sld [smem:[#allocation2 + $0x32]]
        %v622 = vstv %s619
        %v623 = vmul.f32 %v622, %v285
        %v624 = vadd.f32 %v618, %v623
        %v625 = vstv %s620
        %v626 = vmul.f32 %v625, %v281
        %v627 = vadd.f32 %v624, %v626
        %v628 = vstv %s621
        %v629 = vmul.f32 %v628, %v282
        %v630 = vadd.f32 %v627, %v629
        %v631 = vmul.f32 %v622, %v281
        %v632 = vadd.f32 %v618, %v631
        %v633 = vmul.f32 %v625, %v282
        %v634 = vadd.f32 %v632, %v633
        %v635 = vmul.f32 %v628, %v288
        %v636 = vadd.f32 %v634, %v635
        %s637 = sld [smem:[#allocation2 + $0x33]]
        %s638 = sld [smem:[#allocation2 + $0x34]]
        %s639 = sld [smem:[#allocation2 + $0x35]]
        %v640 = vstv %s637
        %v641 = vmul.f32 %v640, %v293
        %v642 = vadd.f32 %v630, %v641
        %v643 = vstv %s638
        %v644 = vmul.f32 %v643, %v289
        %v645 = vadd.f32 %v642, %v644
        %v646 = vstv %s639
        %v647 = vmul.f32 %v646, %v290
        %v648 = vadd.f32 %v645, %v647
        %v649 = vmul.f32 %v640, %v289
        %v650 = vadd.f32 %v636, %v649
        %v651 = vmul.f32 %v643, %v290
        %v652 = vadd.f32 %v650, %v651
        %v653 = vmul.f32 %v646, %v296
        %v654 = vadd.f32 %v652, %v653
        %s655 = sld [smem:[#allocation2 + $0x36]]
        %s656 = sld [smem:[#allocation2 + $0x37]]
        %s657 = sld [smem:[#allocation2 + $0x38]]
        %v658 = vstv %s655
        %v659 = vmul.f32 %v658, %v301
        %v660 = vadd.f32 %v648, %v659
        %v661 = vstv %s656
        %v662 = vmul.f32 %v661, %v297
        %v663 = vadd.f32 %v660, %v662
        %v664 = vstv %s657
        %v665 = vmul.f32 %v664, %v298
        %v666 = vadd.f32 %v663, %v665
        %v667 = vmul.f32 %v658, %v297
        %v668 = vadd.f32 %v654, %v667
        %v669 = vmul.f32 %v661, %v298
        %v670 = vadd.f32 %v668, %v669
        %v671 = vmul.f32 %v664, %v304
        %v672 = vadd.f32 %v670, %v671
        %s673 = sld [smem:[#allocation2 + $0x39]]
        %s674 = sld [smem:[#allocation2 + $0x3a]]
        %s675 = sld [smem:[#allocation2 + $0x3b]]
        %v676 = vstv %s673
        %v677 = vmul.f32 %v676, %v309
        %v678 = vadd.f32 %v666, %v677
        %v679 = vstv %s674
        %v680 = vmul.f32 %v679, %v305
        %v681 = vadd.f32 %v678, %v680
        %v682 = vstv %s675
        %v683 = vmul.f32 %v682, %v306
        %v684 = vadd.f32 %v681, %v683
        %v685 = vmul.f32 %v676, %v305
        %v686 = vadd.f32 %v672, %v685
        %v687 = vmul.f32 %v679, %v306
        %v688 = vadd.f32 %v686, %v687
        %v689 = vmul.f32 %v682, %v312
        %v690 = vadd.f32 %v688, %v689
        %v691 = vmax.f32 %v684, 0.0
        %v692 = vmax.f32 %v690, 0.0
        %s693 = sld [smem:[#allocation4 + $0x5]]
        %v694 = vstv %s693
        %s695 = sld [smem:[#allocation2 + $0x3c]]
        %s696 = sld [smem:[#allocation2 + $0x3d]]
        %s697 = sld [smem:[#allocation2 + $0x3e]]
        %v698 = vstv %s695
        %v699 = vmul.f32 %v698, %v285
        %v700 = vadd.f32 %v694, %v699
        %v701 = vstv %s696
        %v702 = vmul.f32 %v701, %v281
        %v703 = vadd.f32 %v700, %v702
        %v704 = vstv %s697
        %v705 = vmul.f32 %v704, %v282
        %v706 = vadd.f32 %v703, %v705
        %v707 = vmul.f32 %v698, %v281
        %v708 = vadd.f32 %v694, %v707
        %v709 = vmul.f32 %v701, %v282
        %v710 = vadd.f32 %v708, %v709
        %v711 = vmul.f32 %v704, %v288
        %v712 = vadd.f32 %v710, %v711
        %s713 = sld [smem:[#allocation2 + $0x3f]]
        %s714 = sld [smem:[#allocation2 + $0x40]]
        %s715 = sld [smem:[#allocation2 + $0x41]]
        %v716 = vstv %s713
        %v717 = vmul.f32 %v716, %v293
        %v718 = vadd.f32 %v706, %v717
        %v719 = vstv %s714
        %v720 = vmul.f32 %v719, %v289
        %v721 = vadd.f32 %v718, %v720
        %v722 = vstv %s715
        %v723 = vmul.f32 %v722, %v290
        %v724 = vadd.f32 %v721, %v723
        %v725 = vmul.f32 %v716, %v289
        %v726 = vadd.f32 %v712, %v725
        %v727 = vmul.f32 %v719, %v290
        %v728 = vadd.f32 %v726, %v727
        %v729 = vmul.f32 %v722, %v296
        %v730 = vadd.f32 %v728, %v729
        %s731 = sld [smem:[#allocation2 + $0x42]]
        %s732 = sld [smem:[#allocation2 + $0x43]]
        %s733 = sld [smem:[#allocation2 + $0x44]]
        %v734 = vstv %s731
        %v735 = vmul.f32 %v734, %v301
        %v736 = vadd.f32 %v724, %v735
        %v737 = vstv %s732
        %v738 = vmul.f32 %v737, %v297
        %v739 = vadd.f32 %v736, %v738
        %v740 = vstv %s733
        %v741 = vmul.f32 %v740, %v298
        %v742 = vadd.f32 %v739, %v741
        %v743 = vmul.f32 %v734, %v297
        %v744 = vadd.f32 %v730, %v743
        %v745 = vmul.f32 %v737, %v298
        %v746 = vadd.f32 %v744, %v745
        %v747 = vmul.f32 %v740, %v304
        %v748 = vadd.f32 %v746, %v747
        %s749 = sld [smem:[#allocation2 + $0x45]]
        %s750 = sld [smem:[#allocation2 + $0x46]]
        %s751 = sld [smem:[#allocation2 + $0x47]]
        %v752 = vstv %s749
        %v753 = vmul.f32 %v752, %v309
        %v754 = vadd.f32 %v742, %v753
        %v755 = vstv %s750
        %v756 = vmul.f32 %v755, %v305
        %v757 = vadd.f32 %v754, %v756
        %v758 = vstv %s751
        %v759 = vmul.f32 %v758, %v306
        %v760 = vadd.f32 %v757, %v759
        %v761 = vmul.f32 %v752, %v305
        %v762 = vadd.f32 %v748, %v761
        %v763 = vmul.f32 %v755, %v306
        %v764 = vadd.f32 %v762, %v763
        %v765 = vmul.f32 %v758, %v312
        %v766 = vadd.f32 %v764, %v765
        %v767 = vmax.f32 %v760, 0.0
        %v768 = vmax.f32 %v766, 0.0
        %s769 = sld [smem:[#allocation4 + $0x6]]
        %v770 = vstv %s769
        %s771 = sld [smem:[#allocation2 + $0x48]]
        %s772 = sld [smem:[#allocation2 + $0x49]]
        %s773 = sld [smem:[#allocation2 + $0x4a]]
        %v774 = vstv %s771
        %v775 = vmul.f32 %v774, %v285
        %v776 = vadd.f32 %v770, %v775
        %v777 = vstv %s772
        %v778 = vmul.f32 %v777, %v281
        %v779 = vadd.f32 %v776, %v778
        %v780 = vstv %s773
        %v781 = vmul.f32 %v780, %v282
        %v782 = vadd.f32 %v779, %v781
        %v783 = vmul.f32 %v774, %v281
        %v784 = vadd.f32 %v770, %v783
        %v785 = vmul.f32 %v777, %v282
        %v786 = vadd.f32 %v784, %v785
        %v787 = vmul.f32 %v780, %v288
        %v788 = vadd.f32 %v786, %v787
        %s789 = sld [smem:[#allocation2 + $0x4b]]
        %s790 = sld [smem:[#allocation2 + $0x4c]]
        %s791 = sld [smem:[#allocation2 + $0x4d]]
        %v792 = vstv %s789
        %v793 = vmul.f32 %v792, %v293
        %v794 = vadd.f32 %v782, %v793
        %v795 = vstv %s790
        %v796 = vmul.f32 %v795, %v289
        %v797 = vadd.f32 %v794, %v796
        %v798 = vstv %s791
        %v799 = vmul.f32 %v798, %v290
        %v800 = vadd.f32 %v797, %v799
        %v801 = vmul.f32 %v792, %v289
        %v802 = vadd.f32 %v788, %v801
        %v803 = vmul.f32 %v795, %v290
        %v804 = vadd.f32 %v802, %v803
        %v805 = vmul.f32 %v798, %v296
        %v806 = vadd.f32 %v804, %v805
        %s807 = sld [smem:[#allocation2 + $0x4e]]
        %s808 = sld [smem:[#allocation2 + $0x4f]]
        %s809 = sld [smem:[#allocation2 + $0x50]]
        %v810 = vstv %s807
        %v811 = vmul.f32 %v810, %v301
        %v812 = vadd.f32 %v800, %v811
        %v813 = vstv %s808
        %v814 = vmul.f32 %v813, %v297
        %v815 = vadd.f32 %v812, %v814
        %v816 = vstv %s809
        %v817 = vmul.f32 %v816, %v298
        %v818 = vadd.f32 %v815, %v817
        %v819 = vmul.f32 %v810, %v297
        %v820 = vadd.f32 %v806, %v819
        %v821 = vmul.f32 %v813, %v298
        %v822 = vadd.f32 %v820, %v821
        %v823 = vmul.f32 %v816, %v304
        %v824 = vadd.f32 %v822, %v823
        %s825 = sld [smem:[#allocation2 + $0x51]]
        %s826 = sld [smem:[#allocation2 + $0x52]]
        %s827 = sld [smem:[#allocation2 + $0x53]]
        %v828 = vstv %s825
        %v829 = vmul.f32 %v828, %v309
        %v830 = vadd.f32 %v818, %v829
        %v831 = vstv %s826
        %v832 = vmul.f32 %v831, %v305
        %v833 = vadd.f32 %v830, %v832
        %v834 = vstv %s827
        %v835 = vmul.f32 %v834, %v306
        %v836 = vadd.f32 %v833, %v835
        %v837 = vmul.f32 %v828, %v305
        %v838 = vadd.f32 %v824, %v837
        %v839 = vmul.f32 %v831, %v306
        %v840 = vadd.f32 %v838, %v839
        %v841 = vmul.f32 %v834, %v312
        %v842 = vadd.f32 %v840, %v841
        %v843 = vmax.f32 %v836, 0.0
        %v844 = vmax.f32 %v842, 0.0
        %s845 = sld [smem:[#allocation4 + $0x7]]
        %v846 = vstv %s845
        %s847 = sld [smem:[#allocation2 + $0x54]]
        %s848 = sld [smem:[#allocation2 + $0x55]]
        %s849 = sld [smem:[#allocation2 + $0x56]]
        %v850 = vstv %s847
        %v851 = vmul.f32 %v850, %v285
        %v852 = vadd.f32 %v846, %v851
        %v853 = vstv %s848
        %v854 = vmul.f32 %v853, %v281
        %v855 = vadd.f32 %v852, %v854
        %v856 = vstv %s849
        %v857 = vmul.f32 %v856, %v282
        %v858 = vadd.f32 %v855, %v857
        %v859 = vmul.f32 %v850, %v281
        %v860 = vadd.f32 %v846, %v859
        %v861 = vmul.f32 %v853, %v282
        %v862 = vadd.f32 %v860, %v861
        %v863 = vmul.f32 %v856, %v288
        %v864 = vadd.f32 %v862, %v863
        %s865 = sld [smem:[#allocation2 + $0x57]]
        %s866 = sld [smem:[#allocation2 + $0x58]]
        %s867 = sld [smem:[#allocation2 + $0x59]]
        %v868 = vstv %s865
        %v869 = vmul.f32 %v868, %v293
        %v870 = vadd.f32 %v858, %v869
        %v871 = vstv %s866
        %v872 = vmul.f32 %v871, %v289
        %v873 = vadd.f32 %v870, %v872
        %v874 = vstv %s867
        %v875 = vmul.f32 %v874, %v290
        %v876 = vadd.f32 %v873, %v875
        %v877 = vmul.f32 %v868, %v289
        %v878 = vadd.f32 %v864, %v877
        %v879 = vmul.f32 %v871, %v290
        %v880 = vadd.f32 %v878, %v879
        %v881 = vmul.f32 %v874, %v296
        %v882 = vadd.f32 %v880, %v881
        %s883 = sld [smem:[#allocation2 + $0x5a]]
        %s884 = sld [smem:[#allocation2 + $0x5b]]
        %s885 = sld [smem:[#allocation2 + $0x5c]]
        %v886 = vstv %s883
        %v887 = vmul.f32 %v886, %v301
        %v888 = vadd.f32 %v876, %v887
        %v889 = vstv %s884
        %v890 = vmul.f32 %v889, %v297
        %v891 = vadd.f32 %v888, %v890
        %v892 = vstv %s885
        %v893 = vmul.f32 %v892, %v298
        %v894 = vadd.f32 %v891, %v893
        %v895 = vmul.f32 %v886, %v297
        %v896 = vadd.f32 %v882, %v895
        %v897 = vmul.f32 %v889, %v298
        %v898 = vadd.f32 %v896, %v897
        %v899 = vmul.f32 %v892, %v304
        %v900 = vadd.f32 %v898, %v899
        %s901 = sld [smem:[#allocation2 + $0x5d]]
        %s902 = sld [smem:[#allocation2 + $0x5e]]
        %s903 = sld [smem:[#allocation2 + $0x5f]]
        %v904 = vstv %s901
        %v905 = vmul.f32 %v904, %v309
        %v906 = vadd.f32 %v894, %v905
        %v907 = vstv %s902
        %v908 = vmul.f32 %v907, %v305
        %v909 = vadd.f32 %v906, %v908
        %v910 = vstv %s903
        %v911 = vmul.f32 %v910, %v306
        %v912 = vadd.f32 %v909, %v911
        %v913 = vmul.f32 %v904, %v305
        %v914 = vadd.f32 %v900, %v913
        %v915 = vmul.f32 %v907, %v306
        %v916 = vadd.f32 %v914, %v915
        %v917 = vmul.f32 %v910, %v312
        %v918 = vadd.f32 %v916, %v917
        %v919 = vmax.f32 %v912, 0.0
        %v920 = vmax.f32 %v918, 0.0
        %921 = vrot.lane.b32.xlu0 %v388, 1
        %v922 = vpop.permute.xlu0 %921
        %v923 = vsel %vm279, %v922, 0.0
        %924 = vrot.lane.b32.xlu0 %v387, 127
        %v925 = vpop.permute.xlu0 %924
        %v926 = vsel %vm280, %v925, 0.0
        %927 = vrot.lane.b32.xlu0 %v464, 1
        %v928 = vpop.permute.xlu0 %927
        %v929 = vsel %vm279, %v928, 0.0
        %930 = vrot.lane.b32.xlu0 %v463, 127
        %v931 = vpop.permute.xlu0 %930
        %v932 = vsel %vm280, %v931, 0.0
        %933 = vrot.lane.b32.xlu0 %v540, 1
        %v934 = vpop.permute.xlu0 %933
        %v935 = vsel %vm279, %v934, 0.0
        %936 = vrot.lane.b32.xlu0 %v539, 127
        %v937 = vpop.permute.xlu0 %936
        %v938 = vsel %vm280, %v937, 0.0
        %939 = vrot.lane.b32.xlu0 %v616, 1
        %v940 = vpop.permute.xlu0 %939
        %v941 = vsel %vm279, %v940, 0.0
        %942 = vrot.lane.b32.xlu0 %v615, 127
        %v943 = vpop.permute.xlu0 %942
        %v944 = vsel %vm280, %v943, 0.0
        %945 = vrot.lane.b32.xlu0 %v692, 1
        %v946 = vpop.permute.xlu0 %945
        %v947 = vsel %vm279, %v946, 0.0
        %948 = vrot.lane.b32.xlu0 %v691, 127
        %v949 = vpop.permute.xlu0 %948
        %v950 = vsel %vm280, %v949, 0.0
        %951 = vrot.lane.b32.xlu0 %v768, 1
        %v952 = vpop.permute.xlu0 %951
        %v953 = vsel %vm279, %v952, 0.0
        %954 = vrot.lane.b32.xlu0 %v767, 127
        %v955 = vpop.permute.xlu0 %954
        %v956 = vsel %vm280, %v955, 0.0
        %957 = vrot.lane.b32.xlu0 %v844, 1
        %v958 = vpop.permute.xlu0 %957
        %v959 = vsel %vm279, %v958, 0.0
        %960 = vrot.lane.b32.xlu0 %v843, 127
        %v961 = vpop.permute.xlu0 %960
        %v962 = vsel %vm280, %v961, 0.0
        %963 = vrot.lane.b32.xlu0 %v920, 1
        %v964 = vpop.permute.xlu0 %963
        %v965 = vsel %vm279, %v964, 0.0
        %966 = vrot.lane.b32.xlu0 %v919, 127
        %v967 = vpop.permute.xlu0 %966
        %v968 = vsel %vm280, %v967, 0.0
        %s969 = sld [smem:[#allocation7]]
        %v970 = vstv %s969
        %s971 = sld [smem:[#allocation6]]
        %s972 = sld [smem:[#allocation6 + $0x1]]
        %s973 = sld [smem:[#allocation6 + $0x2]]
        %v974 = vstv %s971
        %v975 = vmul.f32 %v974, %v923
        %v976 = vadd.f32 %v970, %v975
        %v977 = vstv %s972
        %v978 = vmul.f32 %v977, %v387
        %v979 = vadd.f32 %v976, %v978
        %v980 = vstv %s973
        %v981 = vmul.f32 %v980, %v388
        %v982 = vadd.f32 %v979, %v981
        %v983 = vmul.f32 %v974, %v387
        %v984 = vadd.f32 %v970, %v983
        %v985 = vmul.f32 %v977, %v388
        %v986 = vadd.f32 %v984, %v985
        %v987 = vmul.f32 %v980, %v926
        %v988 = vadd.f32 %v986, %v987
        %s989 = sld [smem:[#allocation6 + $0x3]]
        %s990 = sld [smem:[#allocation6 + $0x4]]
        %s991 = sld [smem:[#allocation6 + $0x5]]
        %v992 = vstv %s989
        %v993 = vmul.f32 %v992, %v929
        %v994 = vadd.f32 %v982, %v993
        %v995 = vstv %s990
        %v996 = vmul.f32 %v995, %v463
        %v997 = vadd.f32 %v994, %v996
        %v998 = vstv %s991
        %v999 = vmul.f32 %v998, %v464
        %v1000 = vadd.f32 %v997, %v999
        %v1001 = vmul.f32 %v992, %v463
        %v1002 = vadd.f32 %v988, %v1001
        %v1003 = vmul.f32 %v995, %v464
        %v1004 = vadd.f32 %v1002, %v1003
        %v1005 = vmul.f32 %v998, %v932
        %v1006 = vadd.f32 %v1004, %v1005
        %s1007 = sld [smem:[#allocation6 + $0x6]]
        %s1008 = sld [smem:[#allocation6 + $0x7]]
        %s1009 = sld [smem:[#allocation6 + $0x8]]
        %v1010 = vstv %s1007
        %v1011 = vmul.f32 %v1010, %v935
        %v1012 = vadd.f32 %v1000, %v1011
        %v1013 = vstv %s1008
        %v1014 = vmul.f32 %v1013, %v539
        %v1015 = vadd.f32 %v1012, %v1014
        %v1016 = vstv %s1009
        %v1017 = vmul.f32 %v1016, %v540
        %v1018 = vadd.f32 %v1015, %v1017
        %v1019 = vmul.f32 %v1010, %v539
        %v1020 = vadd.f32 %v1006, %v1019
        %v1021 = vmul.f32 %v1013, %v540
        %v1022 = vadd.f32 %v1020, %v1021
        %v1023 = vmul.f32 %v1016, %v938
        %v1024 = vadd.f32 %v1022, %v1023
        %s1025 = sld [smem:[#allocation6 + $0x9]]
        %s1026 = sld [smem:[#allocation6 + $0xa]]
        %s1027 = sld [smem:[#allocation6 + $0xb]]
        %v1028 = vstv %s1025
        %v1029 = vmul.f32 %v1028, %v941
        %v1030 = vadd.f32 %v1018, %v1029
        %v1031 = vstv %s1026
        %v1032 = vmul.f32 %v1031, %v615
        %v1033 = vadd.f32 %v1030, %v1032
        %v1034 = vstv %s1027
        %v1035 = vmul.f32 %v1034, %v616
        %v1036 = vadd.f32 %v1033, %v1035
        %v1037 = vmul.f32 %v1028, %v615
        %v1038 = vadd.f32 %v1024, %v1037
        %v1039 = vmul.f32 %v1031, %v616
        %v1040 = vadd.f32 %v1038, %v1039
        %v1041 = vmul.f32 %v1034, %v944
        %v1042 = vadd.f32 %v1040, %v1041
        %s1043 = sld [smem:[#allocation6 + $0xc]]
        %s1044 = sld [smem:[#allocation6 + $0xd]]
        %s1045 = sld [smem:[#allocation6 + $0xe]]
        %v1046 = vstv %s1043
        %v1047 = vmul.f32 %v1046, %v947
        %v1048 = vadd.f32 %v1036, %v1047
        %v1049 = vstv %s1044
        %v1050 = vmul.f32 %v1049, %v691
        %v1051 = vadd.f32 %v1048, %v1050
        %v1052 = vstv %s1045
        %v1053 = vmul.f32 %v1052, %v692
        %v1054 = vadd.f32 %v1051, %v1053
        %v1055 = vmul.f32 %v1046, %v691
        %v1056 = vadd.f32 %v1042, %v1055
        %v1057 = vmul.f32 %v1049, %v692
        %v1058 = vadd.f32 %v1056, %v1057
        %v1059 = vmul.f32 %v1052, %v950
        %v1060 = vadd.f32 %v1058, %v1059
        %s1061 = sld [smem:[#allocation6 + $0xf]]
        %s1062 = sld [smem:[#allocation6 + $0x10]]
        %s1063 = sld [smem:[#allocation6 + $0x11]]
        %v1064 = vstv %s1061
        %v1065 = vmul.f32 %v1064, %v953
        %v1066 = vadd.f32 %v1054, %v1065
        %v1067 = vstv %s1062
        %v1068 = vmul.f32 %v1067, %v767
        %v1069 = vadd.f32 %v1066, %v1068
        %v1070 = vstv %s1063
        %v1071 = vmul.f32 %v1070, %v768
        %v1072 = vadd.f32 %v1069, %v1071
        %v1073 = vmul.f32 %v1064, %v767
        %v1074 = vadd.f32 %v1060, %v1073
        %v1075 = vmul.f32 %v1067, %v768
        %v1076 = vadd.f32 %v1074, %v1075
        %v1077 = vmul.f32 %v1070, %v956
        %v1078 = vadd.f32 %v1076, %v1077
        %s1079 = sld [smem:[#allocation6 + $0x12]]
        %s1080 = sld [smem:[#allocation6 + $0x13]]
        %s1081 = sld [smem:[#allocation6 + $0x14]]
        %v1082 = vstv %s1079
        %v1083 = vmul.f32 %v1082, %v959
        %v1084 = vadd.f32 %v1072, %v1083
        %v1085 = vstv %s1080
        %v1086 = vmul.f32 %v1085, %v843
        %v1087 = vadd.f32 %v1084, %v1086
        %v1088 = vstv %s1081
        %v1089 = vmul.f32 %v1088, %v844
        %v1090 = vadd.f32 %v1087, %v1089
        %v1091 = vmul.f32 %v1082, %v843
        %v1092 = vadd.f32 %v1078, %v1091
        %v1093 = vmul.f32 %v1085, %v844
        %v1094 = vadd.f32 %v1092, %v1093
        %v1095 = vmul.f32 %v1088, %v962
        %v1096 = vadd.f32 %v1094, %v1095
        %s1097 = sld [smem:[#allocation6 + $0x15]]
        %s1098 = sld [smem:[#allocation6 + $0x16]]
        %s1099 = sld [smem:[#allocation6 + $0x17]]
        %v1100 = vstv %s1097
        %v1101 = vmul.f32 %v1100, %v965
        %v1102 = vadd.f32 %v1090, %v1101
        %v1103 = vstv %s1098
        %v1104 = vmul.f32 %v1103, %v919
        %v1105 = vadd.f32 %v1102, %v1104
        %v1106 = vstv %s1099
        %v1107 = vmul.f32 %v1106, %v920
        %v1108 = vadd.f32 %v1105, %v1107
        %v1109 = vmul.f32 %v1100, %v919
        %v1110 = vadd.f32 %v1096, %v1109
        %v1111 = vmul.f32 %v1103, %v920
        %v1112 = vadd.f32 %v1110, %v1111
        %v1113 = vmul.f32 %v1106, %v968
        %v1114 = vadd.f32 %v1112, %v1113
        %v1115 = vmax.f32 %v1108, 0.0
        %v1116 = vmax.f32 %v1114, 0.0
        %v1117 = vmax.f32 %v1115, %v1116
        %1118 = vst [vmem:[%s276] sm:$0xff] %v1117
        %s1119 = sld [smem:[#allocation7 + $0x1]]
        %v1120 = vstv %s1119
        %s1121 = sld [smem:[#allocation6 + $0x18]]
        %s1122 = sld [smem:[#allocation6 + $0x19]]
        %s1123 = sld [smem:[#allocation6 + $0x1a]]
        %v1124 = vstv %s1121
        %v1125 = vmul.f32 %v1124, %v923
        %v1126 = vadd.f32 %v1120, %v1125
        %v1127 = vstv %s1122
        %v1128 = vmul.f32 %v1127, %v387
        %v1129 = vadd.f32 %v1126, %v1128
        %v1130 = vstv %s1123
        %v1131 = vmul.f32 %v1130, %v388
        %v1132 = vadd.f32 %v1129, %v1131
        %v1133 = vmul.f32 %v1124, %v387
        %v1134 = vadd.f32 %v1120, %v1133
        %v1135 = vmul.f32 %v1127, %v388
        %v1136 = vadd.f32 %v1134, %v1135
        %v1137 = vmul.f32 %v1130, %v926
        %v1138 = vadd.f32 %v1136, %v1137
        %s1139 = sld [smem:[#allocation6 + $0x1b]]
        %s1140 = sld [smem:[#allocation6 + $0x1c]]
        %s1141 = sld [smem:[#allocation6 + $0x1d]]
        %v1142 = vstv %s1139
        %v1143 = vmul.f32 %v1142, %v929
        %v1144 = vadd.f32 %v1132, %v1143
        %v1145 = vstv %s1140
        %v1146 = vmul.f32 %v1145, %v463
        %v1147 = vadd.f32 %v1144, %v1146
        %v1148 = vstv %s1141
        %v1149 = vmul.f32 %v1148, %v464
        %v1150 = vadd.f32 %v1147, %v1149
        %v1151 = vmul.f32 %v1142, %v463
        %v1152 = vadd.f32 %v1138, %v1151
        %v1153 = vmul.f32 %v1145, %v464
        %v1154 = vadd.f32 %v1152, %v1153
        %v1155 = vmul.f32 %v1148, %v932
        %v1156 = vadd.f32 %v1154, %v1155
        %s1157 = sld [smem:[#allocation6 + $0x1e]]
        %s1158 = sld [smem:[#allocation6 + $0x1f]]
        %s1159 = sld [smem:[#allocation6 + $0x20]]
        %v1160 = vstv %s1157
        %v1161 = vmul.f32 %v1160, %v935
        %v1162 = vadd.f32 %v1150, %v1161
        %v1163 = vstv %s1158
        %v1164 = vmul.f32 %v1163, %v539
        %v1165 = vadd.f32 %v1162, %v1164
        %v1166 = vstv %s1159
        %v1167 = vmul.f32 %v1166, %v540
        %v1168 = vadd.f32 %v1165, %v1167
        %v1169 = vmul.f32 %v1160, %v539
        %v1170 = vadd.f32 %v1156, %v1169
        %v1171 = vmul.f32 %v1163, %v540
        %v1172 = vadd.f32 %v1170, %v1171
        %v1173 = vmul.f32 %v1166, %v938
        %v1174 = vadd.f32 %v1172, %v1173
        %s1175 = sld [smem:[#allocation6 + $0x21]]
        %s1176 = sld [smem:[#allocation6 + $0x22]]
        %s1177 = sld [smem:[#allocation6 + $0x23]]
        %v1178 = vstv %s1175
        %v1179 = vmul.f32 %v1178, %v941
        %v1180 = vadd.f32 %v1168, %v1179
        %v1181 = vstv %s1176
        %v1182 = vmul.f32 %v1181, %v615
        %v1183 = vadd.f32 %v1180, %v1182
        %v1184 = vstv %s1177
        %v1185 = vmul.f32 %v1184, %v616
        %v1186 = vadd.f32 %v1183, %v1185
        %v1187 = vmul.f32 %v1178, %v615
        %v1188 = vadd.f32 %v1174, %v1187
        %v1189 = vmul.f32 %v1181, %v616
        %v1190 = vadd.f32 %v1188, %v1189
        %v1191 = vmul.f32 %v1184, %v944
        %v1192 = vadd.f32 %v1190, %v1191
        %s1193 = sld [smem:[#allocation6 + $0x24]]
        %s1194 = sld [smem:[#allocation6 + $0x25]]
        %s1195 = sld [smem:[#allocation6 + $0x26]]
        %v1196 = vstv %s1193
        %v1197 = vmul.f32 %v1196, %v947
        %v1198 = vadd.f32 %v1186, %v1197
        %v1199 = vstv %s1194
        %v1200 = vmul.f32 %v1199, %v691
        %v1201 = vadd.f32 %v1198, %v1200
        %v1202 = vstv %s1195
        %v1203 = vmul.f32 %v1202, %v692
        %v1204 = vadd.f32 %v1201, %v1203
        %v1205 = vmul.f32 %v1196, %v691
        %v1206 = vadd.f32 %v1192, %v1205
        %v1207 = vmul.f32 %v1199, %v692
        %v1208 = vadd.f32 %v1206, %v1207
        %v1209 = vmul.f32 %v1202, %v950
        %v1210 = vadd.f32 %v1208, %v1209
        %s1211 = sld [smem:[#allocation6 + $0x27]]
        %s1212 = sld [smem:[#allocation6 + $0x28]]
        %s1213 = sld [smem:[#allocation6 + $0x29]]
        %v1214 = vstv %s1211
        %v1215 = vmul.f32 %v1214, %v953
        %v1216 = vadd.f32 %v1204, %v1215
        %v1217 = vstv %s1212
        %v1218 = vmul.f32 %v1217, %v767
        %v1219 = vadd.f32 %v1216, %v1218
        %v1220 = vstv %s1213
        %v1221 = vmul.f32 %v1220, %v768
        %v1222 = vadd.f32 %v1219, %v1221
        %v1223 = vmul.f32 %v1214, %v767
        %v1224 = vadd.f32 %v1210, %v1223
        %v1225 = vmul.f32 %v1217, %v768
        %v1226 = vadd.f32 %v1224, %v1225
        %v1227 = vmul.f32 %v1220, %v956
        %v1228 = vadd.f32 %v1226, %v1227
        %s1229 = sld [smem:[#allocation6 + $0x2a]]
        %s1230 = sld [smem:[#allocation6 + $0x2b]]
        %s1231 = sld [smem:[#allocation6 + $0x2c]]
        %v1232 = vstv %s1229
        %v1233 = vmul.f32 %v1232, %v959
        %v1234 = vadd.f32 %v1222, %v1233
        %v1235 = vstv %s1230
        %v1236 = vmul.f32 %v1235, %v843
        %v1237 = vadd.f32 %v1234, %v1236
        %v1238 = vstv %s1231
        %v1239 = vmul.f32 %v1238, %v844
        %v1240 = vadd.f32 %v1237, %v1239
        %v1241 = vmul.f32 %v1232, %v843
        %v1242 = vadd.f32 %v1228, %v1241
        %v1243 = vmul.f32 %v1235, %v844
        %v1244 = vadd.f32 %v1242, %v1243
        %v1245 = vmul.f32 %v1238, %v962
        %v1246 = vadd.f32 %v1244, %v1245
        %s1247 = sld [smem:[#allocation6 + $0x2d]]
        %s1248 = sld [smem:[#allocation6 + $0x2e]]
        %s1249 = sld [smem:[#allocation6 + $0x2f]]
        %v1250 = vstv %s1247
        %v1251 = vmul.f32 %v1250, %v965
        %v1252 = vadd.f32 %v1240, %v1251
        %v1253 = vstv %s1248
        %v1254 = vmul.f32 %v1253, %v919
        %v1255 = vadd.f32 %v1252, %v1254
        %v1256 = vstv %s1249
        %v1257 = vmul.f32 %v1256, %v920
        %v1258 = vadd.f32 %v1255, %v1257
        %v1259 = vmul.f32 %v1250, %v919
        %v1260 = vadd.f32 %v1246, %v1259
        %v1261 = vmul.f32 %v1253, %v920
        %v1262 = vadd.f32 %v1260, %v1261
        %v1263 = vmul.f32 %v1256, %v968
        %v1264 = vadd.f32 %v1262, %v1263
        %v1265 = vmax.f32 %v1258, 0.0
        %v1266 = vmax.f32 %v1264, 0.0
        %v1267 = vmax.f32 %v1265, %v1266
        %1268 = vst [vmem:[%s276 + $0x8] sm:$0xff] %v1267
        %s1269 = sld [smem:[#allocation7 + $0x2]]
        %v1270 = vstv %s1269
        %s1271 = sld [smem:[#allocation6 + $0x30]]
        %s1272 = sld [smem:[#allocation6 + $0x31]]
        %s1273 = sld [smem:[#allocation6 + $0x32]]
        %v1274 = vstv %s1271
        %v1275 = vmul.f32 %v1274, %v923
        %v1276 = vadd.f32 %v1270, %v1275
        %v1277 = vstv %s1272
        %v1278 = vmul.f32 %v1277, %v387
        %v1279 = vadd.f32 %v1276, %v1278
        %v1280 = vstv %s1273
        %v1281 = vmul.f32 %v1280, %v388
        %v1282 = vadd.f32 %v1279, %v1281
        %v1283 = vmul.f32 %v1274, %v387
        %v1284 = vadd.f32 %v1270, %v1283
        %v1285 = vmul.f32 %v1277, %v388
        %v1286 = vadd.f32 %v1284, %v1285
        %v1287 = vmul.f32 %v1280, %v926
        %v1288 = vadd.f32 %v1286, %v1287
        %s1289 = sld [smem:[#allocation6 + $0x33]]
        %s1290 = sld [smem:[#allocation6 + $0x34]]
        %s1291 = sld [smem:[#allocation6 + $0x35]]
        %v1292 = vstv %s1289
        %v1293 = vmul.f32 %v1292, %v929
        %v1294 = vadd.f32 %v1282, %v1293
        %v1295 = vstv %s1290
        %v1296 = vmul.f32 %v1295, %v463
        %v1297 = vadd.f32 %v1294, %v1296
        %v1298 = vstv %s1291
        %v1299 = vmul.f32 %v1298, %v464
        %v1300 = vadd.f32 %v1297, %v1299
        %v1301 = vmul.f32 %v1292, %v463
        %v1302 = vadd.f32 %v1288, %v1301
        %v1303 = vmul.f32 %v1295, %v464
        %v1304 = vadd.f32 %v1302, %v1303
        %v1305 = vmul.f32 %v1298, %v932
        %v1306 = vadd.f32 %v1304, %v1305
        %s1307 = sld [smem:[#allocation6 + $0x36]]
        %s1308 = sld [smem:[#allocation6 + $0x37]]
        %s1309 = sld [smem:[#allocation6 + $0x38]]
        %v1310 = vstv %s1307
        %v1311 = vmul.f32 %v1310, %v935
        %v1312 = vadd.f32 %v1300, %v1311
        %v1313 = vstv %s1308
        %v1314 = vmul.f32 %v1313, %v539
        %v1315 = vadd.f32 %v1312, %v1314
        %v1316 = vstv %s1309
        %v1317 = vmul.f32 %v1316, %v540
        %v1318 = vadd.f32 %v1315, %v1317
        %v1319 = vmul.f32 %v1310, %v539
        %v1320 = vadd.f32 %v1306, %v1319
        %v1321 = vmul.f32 %v1313, %v540
        %v1322 = vadd.f32 %v1320, %v1321
        %v1323 = vmul.f32 %v1316, %v938
        %v1324 = vadd.f32 %v1322, %v1323
        %s1325 = sld [smem:[#allocation6 + $0x39]]
        %s1326 = sld [smem:[#allocation6 + $0x3a]]
        %s1327 = sld [smem:[#allocation6 + $0x3b]]
        %v1328 = vstv %s1325
        %v1329 = vmul.f32 %v1328, %v941
        %v1330 = vadd.f32 %v1318, %v1329
        %v1331 = vstv %s1326
        %v1332 = vmul.f32 %v1331, %v615
        %v1333 = vadd.f32 %v1330, %v1332
        %v1334 = vstv %s1327
        %v1335 = vmul.f32 %v1334, %v616
        %v1336 = vadd.f32 %v1333, %v1335
        %v1337 = vmul.f32 %v1328, %v615
        %v1338 = vadd.f32 %v1324, %v1337
        %v1339 = vmul.f32 %v1331, %v616
        %v1340 = vadd.f32 %v1338, %v1339
        %v1341 = vmul.f32 %v1334, %v944
        %v1342 = vadd.f32 %v1340, %v1341
        %s1343 = sld [smem:[#allocation6 + $0x3c]]
        %s1344 = sld [smem:[#allocation6 + $0x3d]]
        %s1345 = sld [smem:[#allocation6 + $0x3e]]
        %v1346 = vstv %s1343
        %v1347 = vmul.f32 %v1346, %v947
        %v1348 = vadd.f32 %v1336, %v1347
        %v1349 = vstv %s1344
        %v1350 = vmul.f32 %v1349, %v691
        %v1351 = vadd.f32 %v1348, %v1350
        %v1352 = vstv %s1345
        %v1353 = vmul.f32 %v1352, %v692
        %v1354 = vadd.f32 %v1351, %v1353
        %v1355 = vmul.f32 %v1346, %v691
        %v1356 = vadd.f32 %v1342, %v1355
        %v1357 = vmul.f32 %v1349, %v692
        %v1358 = vadd.f32 %v1356, %v1357
        %v1359 = vmul.f32 %v1352, %v950
        %v1360 = vadd.f32 %v1358, %v1359
        %s1361 = sld [smem:[#allocation6 + $0x3f]]
        %s1362 = sld [smem:[#allocation6 + $0x40]]
        %s1363 = sld [smem:[#allocation6 + $0x41]]
        %v1364 = vstv %s1361
        %v1365 = vmul.f32 %v1364, %v953
        %v1366 = vadd.f32 %v1354, %v1365
        %v1367 = vstv %s1362
        %v1368 = vmul.f32 %v1367, %v767
        %v1369 = vadd.f32 %v1366, %v1368
        %v1370 = vstv %s1363
        %v1371 = vmul.f32 %v1370, %v768
        %v1372 = vadd.f32 %v1369, %v1371
        %v1373 = vmul.f32 %v1364, %v767
        %v1374 = vadd.f32 %v1360, %v1373
        %v1375 = vmul.f32 %v1367, %v768
        %v1376 = vadd.f32 %v1374, %v1375
        %v1377 = vmul.f32 %v1370, %v956
        %v1378 = vadd.f32 %v1376, %v1377
        %s1379 = sld [smem:[#allocation6 + $0x42]]
        %s1380 = sld [smem:[#allocation6 + $0x43]]
        %s1381 = sld [smem:[#allocation6 + $0x44]]
        %v1382 = vstv %s1379
        %v1383 = vmul.f32 %v1382, %v959
        %v1384 = vadd.f32 %v1372, %v1383
        %v1385 = vstv %s1380
        %v1386 = vmul.f32 %v1385, %v843
        %v1387 = vadd.f32 %v1384, %v1386
        %v1388 = vstv %s1381
        %v1389 = vmul.f32 %v1388, %v844
        %v1390 = vadd.f32 %v1387, %v1389
        %v1391 = vmul.f32 %v1382, %v843
        %v1392 = vadd.f32 %v1378, %v1391
        %v1393 = vmul.f32 %v1385, %v844
        %v1394 = vadd.f32 %v1392, %v1393
        %v1395 = vmul.f32 %v1388, %v962
        %v1396 = vadd.f32 %v1394, %v1395
        %s1397 = sld [smem:[#allocation6 + $0x45]]
        %s1398 = sld [smem:[#allocation6 + $0x46]]
        %s1399 = sld [smem:[#allocation6 + $0x47]]
        %v1400 = vstv %s1397
        %v1401 = vmul.f32 %v1400, %v965
        %v1402 = vadd.f32 %v1390, %v1401
        %v1403 = vstv %s1398
        %v1404 = vmul.f32 %v1403, %v919
        %v1405 = vadd.f32 %v1402, %v1404
        %v1406 = vstv %s1399
        %v1407 = vmul.f32 %v1406, %v920
        %v1408 = vadd.f32 %v1405, %v1407
        %v1409 = vmul.f32 %v1400, %v919
        %v1410 = vadd.f32 %v1396, %v1409
        %v1411 = vmul.f32 %v1403, %v920
        %v1412 = vadd.f32 %v1410, %v1411
        %v1413 = vmul.f32 %v1406, %v968
        %v1414 = vadd.f32 %v1412, %v1413
        %v1415 = vmax.f32 %v1408, 0.0
        %v1416 = vmax.f32 %v1414, 0.0
        %v1417 = vmax.f32 %v1415, %v1416
        %1418 = vst [vmem:[%s276 + $0x10] sm:$0xff] %v1417
        %s1419 = sld [smem:[#allocation7 + $0x3]]
        %v1420 = vstv %s1419
        %s1421 = sld [smem:[#allocation6 + $0x48]]
        %s1422 = sld [smem:[#allocation6 + $0x49]]
        %s1423 = sld [smem:[#allocation6 + $0x4a]]
        %v1424 = vstv %s1421
        %v1425 = vmul.f32 %v1424, %v923
        %v1426 = vadd.f32 %v1420, %v1425
        %v1427 = vstv %s1422
        %v1428 = vmul.f32 %v1427, %v387
        %v1429 = vadd.f32 %v1426, %v1428
        %v1430 = vstv %s1423
        %v1431 = vmul.f32 %v1430, %v388
        %v1432 = vadd.f32 %v1429, %v1431
        %v1433 = vmul.f32 %v1424, %v387
        %v1434 = vadd.f32 %v1420, %v1433
        %v1435 = vmul.f32 %v1427, %v388
        %v1436 = vadd.f32 %v1434, %v1435
        %v1437 = vmul.f32 %v1430, %v926
        %v1438 = vadd.f32 %v1436, %v1437
        %s1439 = sld [smem:[#allocation6 + $0x4b]]
        %s1440 = sld [smem:[#allocation6 + $0x4c]]
        %s1441 = sld [smem:[#allocation6 + $0x4d]]
        %v1442 = vstv %s1439
        %v1443 = vmul.f32 %v1442, %v929
        %v1444 = vadd.f32 %v1432, %v1443
        %v1445 = vstv %s1440
        %v1446 = vmul.f32 %v1445, %v463
        %v1447 = vadd.f32 %v1444, %v1446
        %v1448 = vstv %s1441
        %v1449 = vmul.f32 %v1448, %v464
        %v1450 = vadd.f32 %v1447, %v1449
        %v1451 = vmul.f32 %v1442, %v463
        %v1452 = vadd.f32 %v1438, %v1451
        %v1453 = vmul.f32 %v1445, %v464
        %v1454 = vadd.f32 %v1452, %v1453
        %v1455 = vmul.f32 %v1448, %v932
        %v1456 = vadd.f32 %v1454, %v1455
        %s1457 = sld [smem:[#allocation6 + $0x4e]]
        %s1458 = sld [smem:[#allocation6 + $0x4f]]
        %s1459 = sld [smem:[#allocation6 + $0x50]]
        %v1460 = vstv %s1457
        %v1461 = vmul.f32 %v1460, %v935
        %v1462 = vadd.f32 %v1450, %v1461
        %v1463 = vstv %s1458
        %v1464 = vmul.f32 %v1463, %v539
        %v1465 = vadd.f32 %v1462, %v1464
        %v1466 = vstv %s1459
        %v1467 = vmul.f32 %v1466, %v540
        %v1468 = vadd.f32 %v1465, %v1467
        %v1469 = vmul.f32 %v1460, %v539
        %v1470 = vadd.f32 %v1456, %v1469
        %v1471 = vmul.f32 %v1463, %v540
        %v1472 = vadd.f32 %v1470, %v1471
        %v1473 = vmul.f32 %v1466, %v938
        %v1474 = vadd.f32 %v1472, %v1473
        %s1475 = sld [smem:[#allocation6 + $0x51]]
        %s1476 = sld [smem:[#allocation6 + $0x52]]
        %s1477 = sld [smem:[#allocation6 + $0x53]]
        %v1478 = vstv %s1475
        %v1479 = vmul.f32 %v1478, %v941
        %v1480 = vadd.f32 %v1468, %v1479
        %v1481 = vstv %s1476
        %v1482 = vmul.f32 %v1481, %v615
        %v1483 = vadd.f32 %v1480, %v1482
        %v1484 = vstv %s1477
        %v1485 = vmul.f32 %v1484, %v616
        %v1486 = vadd.f32 %v1483, %v1485
        %v1487 = vmul.f32 %v1478, %v615
        %v1488 = vadd.f32 %v1474, %v1487
        %v1489 = vmul.f32 %v1481, %v616
        %v1490 = vadd.f32 %v1488, %v1489
        %v1491 = vmul.f32 %v1484, %v944
        %v1492 = vadd.f32 %v1490, %v1491
        %s1493 = sld [smem:[#allocation6 + $0x54]]
        %s1494 = sld [smem:[#allocation6 + $0x55]]
        %s1495 = sld [smem:[#allocation6 + $0x56]]
        %v1496 = vstv %s1493
        %v1497 = vmul.f32 %v1496, %v947
        %v1498 = vadd.f32 %v1486, %v1497
        %v1499 = vstv %s1494
        %v1500 = vmul.f32 %v1499, %v691
        %v1501 = vadd.f32 %v1498, %v1500
        %v1502 = vstv %s1495
        %v1503 = vmul.f32 %v1502, %v692
        %v1504 = vadd.f32 %v1501, %v1503
        %v1505 = vmul.f32 %v1496, %v691
        %v1506 = vadd.f32 %v1492, %v1505
        %v1507 = vmul.f32 %v1499, %v692
        %v1508 = vadd.f32 %v1506, %v1507
        %v1509 = vmul.f32 %v1502, %v950
        %v1510 = vadd.f32 %v1508, %v1509
        %s1511 = sld [smem:[#allocation6 + $0x57]]
        %s1512 = sld [smem:[#allocation6 + $0x58]]
        %s1513 = sld [smem:[#allocation6 + $0x59]]
        %v1514 = vstv %s1511
        %v1515 = vmul.f32 %v1514, %v953
        %v1516 = vadd.f32 %v1504, %v1515
        %v1517 = vstv %s1512
        %v1518 = vmul.f32 %v1517, %v767
        %v1519 = vadd.f32 %v1516, %v1518
        %v1520 = vstv %s1513
        %v1521 = vmul.f32 %v1520, %v768
        %v1522 = vadd.f32 %v1519, %v1521
        %v1523 = vmul.f32 %v1514, %v767
        %v1524 = vadd.f32 %v1510, %v1523
        %v1525 = vmul.f32 %v1517, %v768
        %v1526 = vadd.f32 %v1524, %v1525
        %v1527 = vmul.f32 %v1520, %v956
        %v1528 = vadd.f32 %v1526, %v1527
        %s1529 = sld [smem:[#allocation6 + $0x5a]]
        %s1530 = sld [smem:[#allocation6 + $0x5b]]
        %s1531 = sld [smem:[#allocation6 + $0x5c]]
        %v1532 = vstv %s1529
        %v1533 = vmul.f32 %v1532, %v959
        %v1534 = vadd.f32 %v1522, %v1533
        %v1535 = vstv %s1530
        %v1536 = vmul.f32 %v1535, %v843
        %v1537 = vadd.f32 %v1534, %v1536
        %v1538 = vstv %s1531
        %v1539 = vmul.f32 %v1538, %v844
        %v1540 = vadd.f32 %v1537, %v1539
        %v1541 = vmul.f32 %v1532, %v843
        %v1542 = vadd.f32 %v1528, %v1541
        %v1543 = vmul.f32 %v1535, %v844
        %v1544 = vadd.f32 %v1542, %v1543
        %v1545 = vmul.f32 %v1538, %v962
        %v1546 = vadd.f32 %v1544, %v1545
        %s1547 = sld [smem:[#allocation6 + $0x5d]]
        %s1548 = sld [smem:[#allocation6 + $0x5e]]
        %s1549 = sld [smem:[#allocation6 + $0x5f]]
        %v1550 = vstv %s1547
        %v1551 = vmul.f32 %v1550, %v965
        %v1552 = vadd.f32 %v1540, %v1551
        %v1553 = vstv %s1548
        %v1554 = vmul.f32 %v1553, %v919
        %v1555 = vadd.f32 %v1552, %v1554
        %v1556 = vstv %s1549
        %v1557 = vmul.f32 %v1556, %v920
        %v1558 = vadd.f32 %v1555, %v1557
        %v1559 = vmul.f32 %v1550, %v919
        %v1560 = vadd.f32 %v1546, %v1559
        %v1561 = vmul.f32 %v1553, %v920
        %v1562 = vadd.f32 %v1560, %v1561
        %v1563 = vmul.f32 %v1556, %v968
        %v1564 = vadd.f32 %v1562, %v1563
        %v1565 = vmax.f32 %v1558, 0.0
        %v1566 = vmax.f32 %v1564, 0.0
        %v1567 = vmax.f32 %v1565, %v1566
        %1568 = vst [vmem:[%s276 + $0x18] sm:$0xff] %v1567
        %s1569 = sld [smem:[#allocation7 + $0x4]]
        %v1570 = vstv %s1569
        %s1571 = sld [smem:[#allocation6 + $0x60]]
        %s1572 = sld [smem:[#allocation6 + $0x61]]
        %s1573 = sld [smem:[#allocation6 + $0x62]]
        %v1574 = vstv %s1571
        %v1575 = vmul.f32 %v1574, %v923
        %v1576 = vadd.f32 %v1570, %v1575
        %v1577 = vstv %s1572
        %v1578 = vmul.f32 %v1577, %v387
        %v1579 = vadd.f32 %v1576, %v1578
        %v1580 = vstv %s1573
        %v1581 = vmul.f32 %v1580, %v388
        %v1582 = vadd.f32 %v1579, %v1581
        %v1583 = vmul.f32 %v1574, %v387
        %v1584 = vadd.f32 %v1570, %v1583
        %v1585 = vmul.f32 %v1577, %v388
        %v1586 = vadd.f32 %v1584, %v1585
        %v1587 = vmul.f32 %v1580, %v926
        %v1588 = vadd.f32 %v1586, %v1587
        %s1589 = sld [smem:[#allocation6 + $0x63]]
        %s1590 = sld [smem:[#allocation6 + $0x64]]
        %s1591 = sld [smem:[#allocation6 + $0x65]]
        %v1592 = vstv %s1589
        %v1593 = vmul.f32 %v1592, %v929
        %v1594 = vadd.f32 %v1582, %v1593
        %v1595 = vstv %s1590
        %v1596 = vmul.f32 %v1595, %v463
        %v1597 = vadd.f32 %v1594, %v1596
        %v1598 = vstv %s1591
        %v1599 = vmul.f32 %v1598, %v464
        %v1600 = vadd.f32 %v1597, %v1599
        %v1601 = vmul.f32 %v1592, %v463
        %v1602 = vadd.f32 %v1588, %v1601
        %v1603 = vmul.f32 %v1595, %v464
        %v1604 = vadd.f32 %v1602, %v1603
        %v1605 = vmul.f32 %v1598, %v932
        %v1606 = vadd.f32 %v1604, %v1605
        %s1607 = sld [smem:[#allocation6 + $0x66]]
        %s1608 = sld [smem:[#allocation6 + $0x67]]
        %s1609 = sld [smem:[#allocation6 + $0x68]]
        %v1610 = vstv %s1607
        %v1611 = vmul.f32 %v1610, %v935
        %v1612 = vadd.f32 %v1600, %v1611
        %v1613 = vstv %s1608
        %v1614 = vmul.f32 %v1613, %v539
        %v1615 = vadd.f32 %v1612, %v1614
        %v1616 = vstv %s1609
        %v1617 = vmul.f32 %v1616, %v540
        %v1618 = vadd.f32 %v1615, %v1617
        %v1619 = vmul.f32 %v1610, %v539
        %v1620 = vadd.f32 %v1606, %v1619
        %v1621 = vmul.f32 %v1613, %v540
        %v1622 = vadd.f32 %v1620, %v1621
        %v1623 = vmul.f32 %v1616, %v938
        %v1624 = vadd.f32 %v1622, %v1623
        %s1625 = sld [smem:[#allocation6 + $0x69]]
        %s1626 = sld [smem:[#allocation6 + $0x6a]]
        %s1627 = sld [smem:[#allocation6 + $0x6b]]
        %v1628 = vstv %s1625
        %v1629 = vmul.f32 %v1628, %v941
        %v1630 = vadd.f32 %v1618, %v1629
        %v1631 = vstv %s1626
        %v1632 = vmul.f32 %v1631, %v615
        %v1633 = vadd.f32 %v1630, %v1632
        %v1634 = vstv %s1627
        %v1635 = vmul.f32 %v1634, %v616
        %v1636 = vadd.f32 %v1633, %v1635
        %v1637 = vmul.f32 %v1628, %v615
        %v1638 = vadd.f32 %v1624, %v1637
        %v1639 = vmul.f32 %v1631, %v616
        %v1640 = vadd.f32 %v1638, %v1639
        %v1641 = vmul.f32 %v1634, %v944
        %v1642 = vadd.f32 %v1640, %v1641
        %s1643 = sld [smem:[#allocation6 + $0x6c]]
        %s1644 = sld [smem:[#allocation6 + $0x6d]]
        %s1645 = sld [smem:[#allocation6 + $0x6e]]
        %v1646 = vstv %s1643
        %v1647 = vmul.f32 %v1646, %v947
        %v1648 = vadd.f32 %v1636, %v1647
        %v1649 = vstv %s1644
        %v1650 = vmul.f32 %v1649, %v691
        %v1651 = vadd.f32 %v1648, %v1650
        %v1652 = vstv %s1645
        %v1653 = vmul.f32 %v1652, %v692
        %v1654 = vadd.f32 %v1651, %v1653
        %v1655 = vmul.f32 %v1646, %v691
        %v1656 = vadd.f32 %v1642, %v1655
        %v1657 = vmul.f32 %v1649, %v692
        %v1658 = vadd.f32 %v1656, %v1657
        %v1659 = vmul.f32 %v1652, %v950
        %v1660 = vadd.f32 %v1658, %v1659
        %s1661 = sld [smem:[#allocation6 + $0x6f]]
        %s1662 = sld [smem:[#allocation6 + $0x70]]
        %s1663 = sld [smem:[#allocation6 + $0x71]]
        %v1664 = vstv %s1661
        %v1665 = vmul.f32 %v1664, %v953
        %v1666 = vadd.f32 %v1654, %v1665
        %v1667 = vstv %s1662
        %v1668 = vmul.f32 %v1667, %v767
        %v1669 = vadd.f32 %v1666, %v1668
        %v1670 = vstv %s1663
        %v1671 = vmul.f32 %v1670, %v768
        %v1672 = vadd.f32 %v1669, %v1671
        %v1673 = vmul.f32 %v1664, %v767
        %v1674 = vadd.f32 %v1660, %v1673
        %v1675 = vmul.f32 %v1667, %v768
        %v1676 = vadd.f32 %v1674, %v1675
        %v1677 = vmul.f32 %v1670, %v956
        %v1678 = vadd.f32 %v1676, %v1677
        %s1679 = sld [smem:[#allocation6 + $0x72]]
        %s1680 = sld [smem:[#allocation6 + $0x73]]
        %s1681 = sld [smem:[#allocation6 + $0x74]]
        %v1682 = vstv %s1679
        %v1683 = vmul.f32 %v1682, %v959
        %v1684 = vadd.f32 %v1672, %v1683
        %v1685 = vstv %s1680
        %v1686 = vmul.f32 %v1685, %v843
        %v1687 = vadd.f32 %v1684, %v1686
        %v1688 = vstv %s1681
        %v1689 = vmul.f32 %v1688, %v844
        %v1690 = vadd.f32 %v1687, %v1689
        %v1691 = vmul.f32 %v1682, %v843
        %v1692 = vadd.f32 %v1678, %v1691
        %v1693 = vmul.f32 %v1685, %v844
        %v1694 = vadd.f32 %v1692, %v1693
        %v1695 = vmul.f32 %v1688, %v962
        %v1696 = vadd.f32 %v1694, %v1695
        %s1697 = sld [smem:[#allocation6 + $0x75]]
        %s1698 = sld [smem:[#allocation6 + $0x76]]
        %s1699 = sld [smem:[#allocation6 + $0x77]]
        %v1700 = vstv %s1697
        %v1701 = vmul.f32 %v1700, %v965
        %v1702 = vadd.f32 %v1690, %v1701
        %v1703 = vstv %s1698
        %v1704 = vmul.f32 %v1703, %v919
        %v1705 = vadd.f32 %v1702, %v1704
        %v1706 = vstv %s1699
        %v1707 = vmul.f32 %v1706, %v920
        %v1708 = vadd.f32 %v1705, %v1707
        %v1709 = vmul.f32 %v1700, %v919
        %v1710 = vadd.f32 %v1696, %v1709
        %v1711 = vmul.f32 %v1703, %v920
        %v1712 = vadd.f32 %v1710, %v1711
        %v1713 = vmul.f32 %v1706, %v968
        %v1714 = vadd.f32 %v1712, %v1713
        %v1715 = vmax.f32 %v1708, 0.0
        %v1716 = vmax.f32 %v1714, 0.0
        %v1717 = vmax.f32 %v1715, %v1716
        %1718 = vst [vmem:[%s276 + $0x20] sm:$0xff] %v1717
        %s1719 = sld [smem:[#allocation7 + $0x5]]
        %v1720 = vstv %s1719
        %s1721 = sld [smem:[#allocation6 + $0x78]]
        %s1722 = sld [smem:[#allocation6 + $0x79]]
        %s1723 = sld [smem:[#allocation6 + $0x7a]]
        %v1724 = vstv %s1721
        %v1725 = vmul.f32 %v1724, %v923
        %v1726 = vadd.f32 %v1720, %v1725
        %v1727 = vstv %s1722
        %v1728 = vmul.f32 %v1727, %v387
        %v1729 = vadd.f32 %v1726, %v1728
        %v1730 = vstv %s1723
        %v1731 = vmul.f32 %v1730, %v388
        %v1732 = vadd.f32 %v1729, %v1731
        %v1733 = vmul.f32 %v1724, %v387
        %v1734 = vadd.f32 %v1720, %v1733
        %v1735 = vmul.f32 %v1727, %v388
        %v1736 = vadd.f32 %v1734, %v1735
        %v1737 = vmul.f32 %v1730, %v926
        %v1738 = vadd.f32 %v1736, %v1737
        %s1739 = sld [smem:[#allocation6 + $0x7b]]
        %s1740 = sld [smem:[#allocation6 + $0x7c]]
        %s1741 = sld [smem:[#allocation6 + $0x7d]]
        %v1742 = vstv %s1739
        %v1743 = vmul.f32 %v1742, %v929
        %v1744 = vadd.f32 %v1732, %v1743
        %v1745 = vstv %s1740
        %v1746 = vmul.f32 %v1745, %v463
        %v1747 = vadd.f32 %v1744, %v1746
        %v1748 = vstv %s1741
        %v1749 = vmul.f32 %v1748, %v464
        %v1750 = vadd.f32 %v1747, %v1749
        %v1751 = vmul.f32 %v1742, %v463
        %v1752 = vadd.f32 %v1738, %v1751
        %v1753 = vmul.f32 %v1745, %v464
        %v1754 = vadd.f32 %v1752, %v1753
        %v1755 = vmul.f32 %v1748, %v932
        %v1756 = vadd.f32 %v1754, %v1755
        %s1757 = sld [smem:[#allocation6 + $0x7e]]
        %s1758 = sld [smem:[#allocation6 + $0x7f]]
        %s1759 = sld [smem:[#allocation6 + $0x80]]
        %v1760 = vstv %s1757
        %v1761 = vmul.f32 %v1760, %v935
        %v1762 = vadd.f32 %v1750, %v1761
        %v1763 = vstv %s1758
        %v1764 = vmul.f32 %v1763, %v539
        %v1765 = vadd.f32 %v1762, %v1764
        %v1766 = vstv %s1759
        %v1767 = vmul.f32 %v1766, %v540
        %v1768 = vadd.f32 %v1765, %v1767
        %v1769 = vmul.f32 %v1760, %v539
        %v1770 = vadd.f32 %v1756, %v1769
        %v1771 = vmul.f32 %v1763, %v540
        %v1772 = vadd.f32 %v1770, %v1771
        %v1773 = vmul.f32 %v1766, %v938
        %v1774 = vadd.f32 %v1772, %v1773
        %s1775 = sld [smem:[#allocation6 + $0x81]]
        %s1776 = sld [smem:[#allocation6 + $0x82]]
        %s1777 = sld [smem:[#allocation6 + $0x83]]
        %v1778 = vstv %s1775
        %v1779 = vmul.f32 %v1778, %v941
        %v1780 = vadd.f32 %v1768, %v1779
        %v1781 = vstv %s1776
        %v1782 = vmul.f32 %v1781, %v615
        %v1783 = vadd.f32 %v1780, %v1782
        %v1784 = vstv %s1777
        %v1785 = vmul.f32 %v1784, %v616
        %v1786 = vadd.f32 %v1783, %v1785
        %v1787 = vmul.f32 %v1778, %v615
        %v1788 = vadd.f32 %v1774, %v1787
        %v1789 = vmul.f32 %v1781, %v616
        %v1790 = vadd.f32 %v1788, %v1789
        %v1791 = vmul.f32 %v1784, %v944
        %v1792 = vadd.f32 %v1790, %v1791
        %s1793 = sld [smem:[#allocation6 + $0x84]]
        %s1794 = sld [smem:[#allocation6 + $0x85]]
        %s1795 = sld [smem:[#allocation6 + $0x86]]
        %v1796 = vstv %s1793
        %v1797 = vmul.f32 %v1796, %v947
        %v1798 = vadd.f32 %v1786, %v1797
        %v1799 = vstv %s1794
        %v1800 = vmul.f32 %v1799, %v691
        %v1801 = vadd.f32 %v1798, %v1800
        %v1802 = vstv %s1795
        %v1803 = vmul.f32 %v1802, %v692
        %v1804 = vadd.f32 %v1801, %v1803
        %v1805 = vmul.f32 %v1796, %v691
        %v1806 = vadd.f32 %v1792, %v1805
        %v1807 = vmul.f32 %v1799, %v692
        %v1808 = vadd.f32 %v1806, %v1807
        %v1809 = vmul.f32 %v1802, %v950
        %v1810 = vadd.f32 %v1808, %v1809
        %s1811 = sld [smem:[#allocation6 + $0x87]]
        %s1812 = sld [smem:[#allocation6 + $0x88]]
        %s1813 = sld [smem:[#allocation6 + $0x89]]
        %v1814 = vstv %s1811
        %v1815 = vmul.f32 %v1814, %v953
        %v1816 = vadd.f32 %v1804, %v1815
        %v1817 = vstv %s1812
        %v1818 = vmul.f32 %v1817, %v767
        %v1819 = vadd.f32 %v1816, %v1818
        %v1820 = vstv %s1813
        %v1821 = vmul.f32 %v1820, %v768
        %v1822 = vadd.f32 %v1819, %v1821
        %v1823 = vmul.f32 %v1814, %v767
        %v1824 = vadd.f32 %v1810, %v1823
        %v1825 = vmul.f32 %v1817, %v768
        %v1826 = vadd.f32 %v1824, %v1825
        %v1827 = vmul.f32 %v1820, %v956
        %v1828 = vadd.f32 %v1826, %v1827
        %s1829 = sld [smem:[#allocation6 + $0x8a]]
        %s1830 = sld [smem:[#allocation6 + $0x8b]]
        %s1831 = sld [smem:[#allocation6 + $0x8c]]
        %v1832 = vstv %s1829
        %v1833 = vmul.f32 %v1832, %v959
        %v1834 = vadd.f32 %v1822, %v1833
        %v1835 = vstv %s1830
        %v1836 = vmul.f32 %v1835, %v843
        %v1837 = vadd.f32 %v1834, %v1836
        %v1838 = vstv %s1831
        %v1839 = vmul.f32 %v1838, %v844
        %v1840 = vadd.f32 %v1837, %v1839
        %v1841 = vmul.f32 %v1832, %v843
        %v1842 = vadd.f32 %v1828, %v1841
        %v1843 = vmul.f32 %v1835, %v844
        %v1844 = vadd.f32 %v1842, %v1843
        %v1845 = vmul.f32 %v1838, %v962
        %v1846 = vadd.f32 %v1844, %v1845
        %s1847 = sld [smem:[#allocation6 + $0x8d]]
        %s1848 = sld [smem:[#allocation6 + $0x8e]]
        %s1849 = sld [smem:[#allocation6 + $0x8f]]
        %v1850 = vstv %s1847
        %v1851 = vmul.f32 %v1850, %v965
        %v1852 = vadd.f32 %v1840, %v1851
        %v1853 = vstv %s1848
        %v1854 = vmul.f32 %v1853, %v919
        %v1855 = vadd.f32 %v1852, %v1854
        %v1856 = vstv %s1849
        %v1857 = vmul.f32 %v1856, %v920
        %v1858 = vadd.f32 %v1855, %v1857
        %v1859 = vmul.f32 %v1850, %v919
        %v1860 = vadd.f32 %v1846, %v1859
        %v1861 = vmul.f32 %v1853, %v920
        %v1862 = vadd.f32 %v1860, %v1861
        %v1863 = vmul.f32 %v1856, %v968
        %v1864 = vadd.f32 %v1862, %v1863
        %v1865 = vmax.f32 %v1858, 0.0
        %v1866 = vmax.f32 %v1864, 0.0
        %v1867 = vmax.f32 %v1865, %v1866
        %1868 = vst [vmem:[%s276 + $0x28] sm:$0xff] %v1867
        %s1869 = sld [smem:[#allocation7 + $0x6]]
        %v1870 = vstv %s1869
        %s1871 = sld [smem:[#allocation6 + $0x90]]
        %s1872 = sld [smem:[#allocation6 + $0x91]]
        %s1873 = sld [smem:[#allocation6 + $0x92]]
        %v1874 = vstv %s1871
        %v1875 = vmul.f32 %v1874, %v923
        %v1876 = vadd.f32 %v1870, %v1875
        %v1877 = vstv %s1872
        %v1878 = vmul.f32 %v1877, %v387
        %v1879 = vadd.f32 %v1876, %v1878
        %v1880 = vstv %s1873
        %v1881 = vmul.f32 %v1880, %v388
        %v1882 = vadd.f32 %v1879, %v1881
        %v1883 = vmul.f32 %v1874, %v387
        %v1884 = vadd.f32 %v1870, %v1883
        %v1885 = vmul.f32 %v1877, %v388
        %v1886 = vadd.f32 %v1884, %v1885
        %v1887 = vmul.f32 %v1880, %v926
        %v1888 = vadd.f32 %v1886, %v1887
        %s1889 = sld [smem:[#allocation6 + $0x93]]
        %s1890 = sld [smem:[#allocation6 + $0x94]]
        %s1891 = sld [smem:[#allocation6 + $0x95]]
        %v1892 = vstv %s1889
        %v1893 = vmul.f32 %v1892, %v929
        %v1894 = vadd.f32 %v1882, %v1893
        %v1895 = vstv %s1890
        %v1896 = vmul.f32 %v1895, %v463
        %v1897 = vadd.f32 %v1894, %v1896
        %v1898 = vstv %s1891
        %v1899 = vmul.f32 %v1898, %v464
        %v1900 = vadd.f32 %v1897, %v1899
        %v1901 = vmul.f32 %v1892, %v463
        %v1902 = vadd.f32 %v1888, %v1901
        %v1903 = vmul.f32 %v1895, %v464
        %v1904 = vadd.f32 %v1902, %v1903
        %v1905 = vmul.f32 %v1898, %v932
        %v1906 = vadd.f32 %v1904, %v1905
        %s1907 = sld [smem:[#allocation6 + $0x96]]
        %s1908 = sld [smem:[#allocation6 + $0x97]]
        %s1909 = sld [smem:[#allocation6 + $0x98]]
        %v1910 = vstv %s1907
        %v1911 = vmul.f32 %v1910, %v935
        %v1912 = vadd.f32 %v1900, %v1911
        %v1913 = vstv %s1908
        %v1914 = vmul.f32 %v1913, %v539
        %v1915 = vadd.f32 %v1912, %v1914
        %v1916 = vstv %s1909
        %v1917 = vmul.f32 %v1916, %v540
        %v1918 = vadd.f32 %v1915, %v1917
        %v1919 = vmul.f32 %v1910, %v539
        %v1920 = vadd.f32 %v1906, %v1919
        %v1921 = vmul.f32 %v1913, %v540
        %v1922 = vadd.f32 %v1920, %v1921
        %v1923 = vmul.f32 %v1916, %v938
        %v1924 = vadd.f32 %v1922, %v1923
        %s1925 = sld [smem:[#allocation6 + $0x99]]
        %s1926 = sld [smem:[#allocation6 + $0x9a]]
        %s1927 = sld [smem:[#allocation6 + $0x9b]]
        %v1928 = vstv %s1925
        %v1929 = vmul.f32 %v1928, %v941
        %v1930 = vadd.f32 %v1918, %v1929
        %v1931 = vstv %s1926
        %v1932 = vmul.f32 %v1931, %v615
        %v1933 = vadd.f32 %v1930, %v1932
        %v1934 = vstv %s1927
        %v1935 = vmul.f32 %v1934, %v616
        %v1936 = vadd.f32 %v1933, %v1935
        %v1937 = vmul.f32 %v1928, %v615
        %v1938 = vadd.f32 %v1924, %v1937
        %v1939 = vmul.f32 %v1931, %v616
        %v1940 = vadd.f32 %v1938, %v1939
        %v1941 = vmul.f32 %v1934, %v944
        %v1942 = vadd.f32 %v1940, %v1941
        %s1943 = sld [smem:[#allocation6 + $0x9c]]
        %s1944 = sld [smem:[#allocation6 + $0x9d]]
        %s1945 = sld [smem:[#allocation6 + $0x9e]]
        %v1946 = vstv %s1943
        %v1947 = vmul.f32 %v1946, %v947
        %v1948 = vadd.f32 %v1936, %v1947
        %v1949 = vstv %s1944
        %v1950 = vmul.f32 %v1949, %v691
        %v1951 = vadd.f32 %v1948, %v1950
        %v1952 = vstv %s1945
        %v1953 = vmul.f32 %v1952, %v692
        %v1954 = vadd.f32 %v1951, %v1953
        %v1955 = vmul.f32 %v1946, %v691
        %v1956 = vadd.f32 %v1942, %v1955
        %v1957 = vmul.f32 %v1949, %v692
        %v1958 = vadd.f32 %v1956, %v1957
        %v1959 = vmul.f32 %v1952, %v950
        %v1960 = vadd.f32 %v1958, %v1959
        %s1961 = sld [smem:[#allocation6 + $0x9f]]
        %s1962 = sld [smem:[#allocation6 + $0xa0]]
        %s1963 = sld [smem:[#allocation6 + $0xa1]]
        %v1964 = vstv %s1961
        %v1965 = vmul.f32 %v1964, %v953
        %v1966 = vadd.f32 %v1954, %v1965
        %v1967 = vstv %s1962
        %v1968 = vmul.f32 %v1967, %v767
        %v1969 = vadd.f32 %v1966, %v1968
        %v1970 = vstv %s1963
        %v1971 = vmul.f32 %v1970, %v768
        %v1972 = vadd.f32 %v1969, %v1971
        %v1973 = vmul.f32 %v1964, %v767
        %v1974 = vadd.f32 %v1960, %v1973
        %v1975 = vmul.f32 %v1967, %v768
        %v1976 = vadd.f32 %v1974, %v1975
        %v1977 = vmul.f32 %v1970, %v956
        %v1978 = vadd.f32 %v1976, %v1977
        %s1979 = sld [smem:[#allocation6 + $0xa2]]
        %s1980 = sld [smem:[#allocation6 + $0xa3]]
        %s1981 = sld [smem:[#allocation6 + $0xa4]]
        %v1982 = vstv %s1979
        %v1983 = vmul.f32 %v1982, %v959
        %v1984 = vadd.f32 %v1972, %v1983
        %v1985 = vstv %s1980
        %v1986 = vmul.f32 %v1985, %v843
        %v1987 = vadd.f32 %v1984, %v1986
        %v1988 = vstv %s1981
        %v1989 = vmul.f32 %v1988, %v844
        %v1990 = vadd.f32 %v1987, %v1989
        %v1991 = vmul.f32 %v1982, %v843
        %v1992 = vadd.f32 %v1978, %v1991
        %v1993 = vmul.f32 %v1985, %v844
        %v1994 = vadd.f32 %v1992, %v1993
        %v1995 = vmul.f32 %v1988, %v962
        %v1996 = vadd.f32 %v1994, %v1995
        %s1997 = sld [smem:[#allocation6 + $0xa5]]
        %s1998 = sld [smem:[#allocation6 + $0xa6]]
        %s1999 = sld [smem:[#allocation6 + $0xa7]]
        %v2000 = vstv %s1997
        %v2001 = vmul.f32 %v2000, %v965
        %v2002 = vadd.f32 %v1990, %v2001
        %v2003 = vstv %s1998
        %v2004 = vmul.f32 %v2003, %v919
        %v2005 = vadd.f32 %v2002, %v2004
        %v2006 = vstv %s1999
        %v2007 = vmul.f32 %v2006, %v920
        %v2008 = vadd.f32 %v2005, %v2007
        %v2009 = vmul.f32 %v2000, %v919
        %v2010 = vadd.f32 %v1996, %v2009
        %v2011 = vmul.f32 %v2003, %v920
        %v2012 = vadd.f32 %v2010, %v2011
        %v2013 = vmul.f32 %v2006, %v968
        %v2014 = vadd.f32 %v2012, %v2013
        %v2015 = vmax.f32 %v2008, 0.0
        %v2016 = vmax.f32 %v2014, 0.0
        %v2017 = vmax.f32 %v2015, %v2016
        %2018 = vst [vmem:[%s276 + $0x30] sm:$0xff] %v2017
        %s2019 = sld [smem:[#allocation7 + $0x7]]
        %v2020 = vstv %s2019
        %s2021 = sld [smem:[#allocation6 + $0xa8]]
        %s2022 = sld [smem:[#allocation6 + $0xa9]]
        %s2023 = sld [smem:[#allocation6 + $0xaa]]
        %v2024 = vstv %s2021
        %v2025 = vmul.f32 %v2024, %v923
        %v2026 = vadd.f32 %v2020, %v2025
        %v2027 = vstv %s2022
        %v2028 = vmul.f32 %v2027, %v387
        %v2029 = vadd.f32 %v2026, %v2028
        %v2030 = vstv %s2023
        %v2031 = vmul.f32 %v2030, %v388
        %v2032 = vadd.f32 %v2029, %v2031
        %v2033 = vmul.f32 %v2024, %v387
        %v2034 = vadd.f32 %v2020, %v2033
        %v2035 = vmul.f32 %v2027, %v388
        %v2036 = vadd.f32 %v2034, %v2035
        %v2037 = vmul.f32 %v2030, %v926
        %v2038 = vadd.f32 %v2036, %v2037
        %s2039 = sld [smem:[#allocation6 + $0xab]]
        %s2040 = sld [smem:[#allocation6 + $0xac]]
        %s2041 = sld [smem:[#allocation6 + $0xad]]
        %v2042 = vstv %s2039
        %v2043 = vmul.f32 %v2042, %v929
        %v2044 = vadd.f32 %v2032, %v2043
        %v2045 = vstv %s2040
        %v2046 = vmul.f32 %v2045, %v463
        %v2047 = vadd.f32 %v2044, %v2046
        %v2048 = vstv %s2041
        %v2049 = vmul.f32 %v2048, %v464
        %v2050 = vadd.f32 %v2047, %v2049
        %v2051 = vmul.f32 %v2042, %v463
        %v2052 = vadd.f32 %v2038, %v2051
        %v2053 = vmul.f32 %v2045, %v464
        %v2054 = vadd.f32 %v2052, %v2053
        %v2055 = vmul.f32 %v2048, %v932
        %v2056 = vadd.f32 %v2054, %v2055
        %s2057 = sld [smem:[#allocation6 + $0xae]]
        %s2058 = sld [smem:[#allocation6 + $0xaf]]
        %s2059 = sld [smem:[#allocation6 + $0xb0]]
        %v2060 = vstv %s2057
        %v2061 = vmul.f32 %v2060, %v935
        %v2062 = vadd.f32 %v2050, %v2061
        %v2063 = vstv %s2058
        %v2064 = vmul.f32 %v2063, %v539
        %v2065 = vadd.f32 %v2062, %v2064
        %v2066 = vstv %s2059
        %v2067 = vmul.f32 %v2066, %v540
        %v2068 = vadd.f32 %v2065, %v2067
        %v2069 = vmul.f32 %v2060, %v539
        %v2070 = vadd.f32 %v2056, %v2069
        %v2071 = vmul.f32 %v2063, %v540
        %v2072 = vadd.f32 %v2070, %v2071
        %v2073 = vmul.f32 %v2066, %v938
        %v2074 = vadd.f32 %v2072, %v2073
        %s2075 = sld [smem:[#allocation6 + $0xb1]]
        %s2076 = sld [smem:[#allocation6 + $0xb2]]
        %s2077 = sld [smem:[#allocation6 + $0xb3]]
        %v2078 = vstv %s2075
        %v2079 = vmul.f32 %v2078, %v941
        %v2080 = vadd.f32 %v2068, %v2079
        %v2081 = vstv %s2076
        %v2082 = vmul.f32 %v2081, %v615
        %v2083 = vadd.f32 %v2080, %v2082
        %v2084 = vstv %s2077
        %v2085 = vmul.f32 %v2084, %v616
        %v2086 = vadd.f32 %v2083, %v2085
        %v2087 = vmul.f32 %v2078, %v615
        %v2088 = vadd.f32 %v2074, %v2087
        %v2089 = vmul.f32 %v2081, %v616
        %v2090 = vadd.f32 %v2088, %v2089
        %v2091 = vmul.f32 %v2084, %v944
        %v2092 = vadd.f32 %v2090, %v2091
        %s2093 = sld [smem:[#allocation6 + $0xb4]]
        %s2094 = sld [smem:[#allocation6 + $0xb5]]
        %s2095 = sld [smem:[#allocation6 + $0xb6]]
        %v2096 = vstv %s2093
        %v2097 = vmul.f32 %v2096, %v947
        %v2098 = vadd.f32 %v2086, %v2097
        %v2099 = vstv %s2094
        %v2100 = vmul.f32 %v2099, %v691
        %v2101 = vadd.f32 %v2098, %v2100
        %v2102 = vstv %s2095
        %v2103 = vmul.f32 %v2102, %v692
        %v2104 = vadd.f32 %v2101, %v2103
        %v2105 = vmul.f32 %v2096, %v691
        %v2106 = vadd.f32 %v2092, %v2105
        %v2107 = vmul.f32 %v2099, %v692
        %v2108 = vadd.f32 %v2106, %v2107
        %v2109 = vmul.f32 %v2102, %v950
        %v2110 = vadd.f32 %v2108, %v2109
        %s2111 = sld [smem:[#allocation6 + $0xb7]]
        %s2112 = sld [smem:[#allocation6 + $0xb8]]
        %s2113 = sld [smem:[#allocation6 + $0xb9]]
        %v2114 = vstv %s2111
        %v2115 = vmul.f32 %v2114, %v953
        %v2116 = vadd.f32 %v2104, %v2115
        %v2117 = vstv %s2112
        %v2118 = vmul.f32 %v2117, %v767
        %v2119 = vadd.f32 %v2116, %v2118
        %v2120 = vstv %s2113
        %v2121 = vmul.f32 %v2120, %v768
        %v2122 = vadd.f32 %v2119, %v2121
        %v2123 = vmul.f32 %v2114, %v767
        %v2124 = vadd.f32 %v2110, %v2123
        %v2125 = vmul.f32 %v2117, %v768
        %v2126 = vadd.f32 %v2124, %v2125
        %v2127 = vmul.f32 %v2120, %v956
        %v2128 = vadd.f32 %v2126, %v2127
        %s2129 = sld [smem:[#allocation6 + $0xba]]
        %s2130 = sld [smem:[#allocation6 + $0xbb]]
        %s2131 = sld [smem:[#allocation6 + $0xbc]]
        %v2132 = vstv %s2129
        %v2133 = vmul.f32 %v2132, %v959
        %v2134 = vadd.f32 %v2122, %v2133
        %v2135 = vstv %s2130
        %v2136 = vmul.f32 %v2135, %v843
        %v2137 = vadd.f32 %v2134, %v2136
        %v2138 = vstv %s2131
        %v2139 = vmul.f32 %v2138, %v844
        %v2140 = vadd.f32 %v2137, %v2139
        %v2141 = vmul.f32 %v2132, %v843
        %v2142 = vadd.f32 %v2128, %v2141
        %v2143 = vmul.f32 %v2135, %v844
        %v2144 = vadd.f32 %v2142, %v2143
        %v2145 = vmul.f32 %v2138, %v962
        %v2146 = vadd.f32 %v2144, %v2145
        %s2147 = sld [smem:[#allocation6 + $0xbd]]
        %s2148 = sld [smem:[#allocation6 + $0xbe]]
        %s2149 = sld [smem:[#allocation6 + $0xbf]]
        %v2150 = vstv %s2147
        %v2151 = vmul.f32 %v2150, %v965
        %v2152 = vadd.f32 %v2140, %v2151
        %v2153 = vstv %s2148
        %v2154 = vmul.f32 %v2153, %v919
        %v2155 = vadd.f32 %v2152, %v2154
        %v2156 = vstv %s2149
        %v2157 = vmul.f32 %v2156, %v920
        %v2158 = vadd.f32 %v2155, %v2157
        %v2159 = vmul.f32 %v2150, %v919
        %v2160 = vadd.f32 %v2146, %v2159
        %v2161 = vmul.f32 %v2153, %v920
        %v2162 = vadd.f32 %v2160, %v2161
        %v2163 = vmul.f32 %v2156, %v968
        %v2164 = vadd.f32 %v2162, %v2163
        %v2165 = vmax.f32 %v2158, 0.0
        %v2166 = vmax.f32 %v2164, 0.0
        %v2167 = vmax.f32 %v2165, %v2166
        %2168 = vst [vmem:[%s276 + $0x38] sm:$0xff] %v2167
        %p2169 = scmp.lt.s32.totalorder %s19, 1
        %s2170 = scalar_select %p2169, %s19, 1
        %s2171 = smul.addr %s2170, 8
        %s2172 = smul.addr %s2171, 8
        %s2173 = scalar_lea.vmem %s5, %s2172
        // Predicated region
        $region57: #{cnn1d_double_maxpool.1} parent=39 // pred_check
          %p2174 = pneg %p147
        $region58: #{cnn1d_double_maxpool.1} parent=39 // pred_check_branch
          %2176 = sbr.rel (%p2174) target = $region60
        $region59: #{cnn1d_double_maxpool.1} parent=39 // pred_region
          _
        $region60: #{cnn1d_double_maxpool.1} parent=39 // pred_fallthru
          _
      $region40: #{cnn1d_double_maxpool.1} parent=5 // pred_fallthru
        _
      %p2177 = scmp.le.s32.totalorder 2, %s14
      // Predicated region
      $region61: #{cnn1d_double_maxpool.1} parent=5 // pred_check
        %p2178 = pneg %p2177
      $region62: #{cnn1d_double_maxpool.1} parent=5 // pred_check_branch
        %2180 = sbr.rel (%p2178) target = $region64
      $region63: #{cnn1d_double_maxpool.1} parent=5 // pred_region
        %s2181 = ssub.s32 %s14, 2
        // Predicated region
        $region65: #{cnn1d_double_maxpool.1} parent=63 // pred_check
          %p2182 = pneg %p153
        $region66: #{cnn1d_double_maxpool.1} parent=63 // pred_check_branch
          %2184 = sbr.rel (%p2182) target = $region68
        $region67: #{cnn1d_double_maxpool.1} parent=63 // pred_region
          %p2185 = scmp.lt.s32.totalorder %s20, 1
          %s2186 = scalar_select %p2185, %s20, 1
          %s2187 = smul.addr %s2186, 8
          %s2188 = smul.addr %s2187, 8
          %s2189 = scalar_lea.vmem %s5, %s2188
        $region68: #{cnn1d_double_maxpool.1} parent=63 // pred_fallthru
          _
      $region64: #{cnn1d_double_maxpool.1} parent=5 // pred_fallthru
        _
    $region6: #{cnn1d_double_maxpool.1} parent=1 // loop_footer
      %s18 = sadd.s32 1, %s14
    $region7: #{cnn1d_double_maxpool.1} parent=1 // loop_footer_branch
      %13 = sbr.rel target = $region3
    $region8: #{cnn1d_double_maxpool.1} parent=1 // loop_exit
      _
    %2190 = vsyncpa [#allocation3], 1
    %s2191 = scalar_lea.sflag [#allocation3], 1
    %2192 = vsyncpa %s2191, 1
    %2193 = vsyncpa [#allocation5], 1
    %2194 = vsyncpa [#allocation8], 1

</llo_original>
